<compile_context>
chip_gen: v7x
topology: tpu7x:2x2x1
jax: 0.10.0
libtpu: 0.0.40
codegen_flags: <defaults>
</compile_context>

<pallas_src>
import jax
import jax.numpy as jnp
from jax import lax
from jax.experimental import pallas as pl
from jax.experimental.pallas import tpu as pltpu

HP = 128          # lane width of the packed hidden state (one 128-lane group)
HD = HP // 2      # lane offset of the backward direction inside that group


def _round_up(x, m):
    return (x + m - 1) // m * m


# ----------------------------------------------------------------------------
# Kernel: one grid step == one T-chunk of BOTH encoders (interleaved chains).
# ----------------------------------------------------------------------------
def _dual_bigru_kernel(xproj_ref, whh_ref, bhhn_ref, lo_ref, hi_ref,
                       out_ref, hfin_ref, h_sc):
    # xproj_ref: [2, Tc, B, 3*Hp] bf16  precomputed x@W_ih + b_ih (+ b_hh[r,z]),
    #            gate groups [r, z, n]; fwd lanes 0:H, bwd lanes 64:64+H of each
    #            group (bwd groups were built from the time-reversed sequence).
    # whh_ref  : [2, Hp, 3*Hp] bf16     per-encoder block-diag recurrent weights.
    # bhhn_ref : [2, 1, Hp]    f32      n-gate recurrent bias (not foldable).
    # lo/hi    : [2, B, Hp]    int32    packed-seq window: step i valid iff lo<=i<hi.
    # out_ref  : [2, Tc, B, Hp] f32     step i: fwd output at t=i, bwd at t=T-1-i.
    # hfin_ref : [2, B, Hp]    f32      final hidden states.
    # h_sc     : [2, B, Hp]    f32      VMEM carry of h across T-chunks.
    chunk = pl.program_id(0)
    Tc = xproj_ref.shape[1]
    B = xproj_ref.shape[2]
    Hp = out_ref.shape[-1]

    @pl.when(chunk == 0)
    def _():
        h_sc[...] = jnp.zeros_like(h_sc)

    # Loop-invariant loads / broadcasts, hoisted once (JAX does not CSE them).
    whh0, whh1 = whh_ref[0], whh_ref[1]
    lo0, hi0 = lo_ref[0], hi_ref[0]
    lo1, hi1 = lo_ref[1], hi_ref[1]
    bn0 = jnp.broadcast_to(bhhn_ref[0], (B, Hp))
    bn1 = jnp.broadcast_to(bhhn_ref[1], (B, Hp))
    t0 = chunk * Tc

    def gru_step(h, g_lo, whh, bn, valid):
        g = g_lo.astype(jnp.float32)                                  # [B, 3Hp]
        hp = jnp.dot(h.astype(jnp.bfloat16), whh,
                     preferred_element_type=jnp.float32)              # [B, 3Hp]
        r = jax.nn.sigmoid(g[:, 0:Hp] + hp[:, 0:Hp])
        z = jax.nn.sigmoid(g[:, Hp:2 * Hp] + hp[:, Hp:2 * Hp])
        n = jnp.tanh(g[:, 2 * Hp:3 * Hp] + r * (hp[:, 2 * Hp:3 * Hp] + bn))
        h_new = (1.0 - z) * n + z * h
        h = jnp.where(valid, h_new, h)       # packed-seq: freeze past the length
        return h, jnp.where(valid, h, 0.0)   # padded steps emit zeros

    def body(i, carry):
        h0, h1 = carry
        ig = t0 + i
        # Two independent recurrences per step: their MXU/EUP latencies overlap.
        h0, o0 = gru_step(h0, xproj_ref[0, i], whh0, bn0,
                          jnp.logical_and(ig >= lo0, ig < hi0))
        h1, o1 = gru_step(h1, xproj_ref[1, i], whh1, bn1,
                          jnp.logical_and(ig >= lo1, ig < hi1))
        out_ref[0, i] = o0
        out_ref[1, i] = o1
        return (h0, h1)

    h0, h1 = lax.fori_loop(0, Tc, body, (h_sc[0], h_sc[1]), unroll=min(Tc, 8))
    h_sc[0] = h0
    h_sc[1] = h1
    hfin_ref[...] = h_sc[...]


# ----------------------------------------------------------------------------
# One-time parameter packing (runs in __init__, off the per-call path).
# ----------------------------------------------------------------------------
def _pack_encoder_params(gru, E, H):
    """Pack one bidirectional GRU's weights into the kernel's lane layout."""
    whh = jnp.zeros((HP, 3, HP), jnp.float32)
    wih_f = jnp.zeros((E, 3, HP), jnp.float32)
    wih_b = jnp.zeros((E, 3, HP), jnp.float32)
    bih = jnp.zeros((3, HP), jnp.float32)
    for g in range(3):   # gate order r, z, n (PyTorch layout)
        whh = whh.at[0:H, g, 0:H].set(gru["w_hh_f"][g])
        whh = whh.at[HD:HD + H, g, HD:HD + H].set(gru["w_hh_b"][g])
        wih_f = wih_f.at[:, g, 0:H].set(gru["w_ih_f"][g])
        wih_b = wih_b.at[:, g, HD:HD + H].set(gru["w_ih_b"][g])
        bih = bih.at[g, 0:H].set(gru["b_ih_f"][g])
        bih = bih.at[g, HD:HD + H].set(gru["b_ih_b"][g])
    for g in range(2):   # fold r/z recurrent biases into the input projection
        bih = bih.at[g, 0:H].add(gru["b_hh_f"][g])
        bih = bih.at[g, HD:HD + H].add(gru["b_hh_b"][g])
    bhh_n = jnp.zeros((1, HP), jnp.float32)
    bhh_n = bhh_n.at[0, 0:H].set(gru["b_hh_f"][2])
    bhh_n = bhh_n.at[0, HD:HD + H].set(gru["b_hh_b"][2])
    return {"whh": whh.reshape(HP, 3 * HP).astype(jnp.bfloat16),
            "wih_f": wih_f.reshape(E, 3 * HP),
            "wih_b": wih_b.reshape(E, 3 * HP),
            "bih": bih.reshape(1, 3 * HP),
            "bhh_n": bhh_n}


# ----------------------------------------------------------------------------
# Per-call wrapper-side helpers (plain XLA, off the recurrent critical path).
# ----------------------------------------------------------------------------
def _build_xproj(x, T_pad, enc):
    """Hoisted input projection for all steps, both directions: [T_pad,B,3*Hp] bf16."""
    T, B, E = x.shape
    if T < T_pad:
        x = jnp.concatenate([x, jnp.zeros((T_pad - T, B, E), x.dtype)], axis=0)
    # fwd groups use x[t]; bwd groups use x[T_pad-1-t]; the two packed weights
    # write to disjoint lanes so a single sum lands in the final layout.
    xp = (jnp.einsum('tbe,ef->tbf', x, enc["wih_f"])
          + jnp.einsum('tbe,ef->tbf', x[::-1], enc["wih_b"])
          + enc["bih"][None])
    return xp.astype(jnp.bfloat16)


def _build_bounds(lengths, T_pad, B):
    """Per-(batch, direction-lane) valid-step window [lo, hi) over loop index i."""
    L = lengths.astype(jnp.int32)
    lo = jnp.zeros((B, HP), jnp.int32).at[:, HD:].set((T_pad - L)[:, None])  # bwd
    hi = jnp.full((B, HP), T_pad, jnp.int32).at[:, :HD].set(L[:, None])      # fwd
    return lo, hi


def dual_bidirectional_gru(params, x_his, len_his, x_kg, len_kg):
    """Runs both bidirectional GRU encoders in ONE pallas_call, T-chunked.

    x_*: [T, B, E] f32 (seq-major), len_*: [B] int32.
    Returns ((his_out [T_his,B,H], his_hidden [2,B,H]),
             (kg_out  [T_kg, B,H], kg_hidden  [2,B,H])).
    """
    H = params["H"]
    T_his, B, _ = x_his.shape
    T_kg = x_kg.shape[0]
    T_max = max(T_his, T_kg)
    t_chunk = min(128, _round_up(T_max, 8))     # time tile bounds VMEM residency
    T_pad = _round_up(T_max, t_chunk)
    n_chunks = T_pad // t_chunk

    xproj = jnp.stack([_build_xproj(x_his, T_pad, params["his"]),
                       _build_xproj(x_kg, T_pad, params["kg"])], axis=0)
    lo_h, hi_h = _build_bounds(len_his, T_pad, B)
    lo_k, hi_k = _build_bounds(len_kg, T_pad, B)
    lo = jnp.stack([lo_h, lo_k], axis=0)
    hi = jnp.stack([hi_h, hi_k], axis=0)
    whh = jnp.stack([params["his"]["whh"], params["kg"]["whh"]], axis=0)
    bhhn = jnp.stack([params["his"]["bhh_n"], params["kg"]["bhh_n"]], axis=0)

    out, hfin = pl.pallas_call(
        _dual_bigru_kernel,
        out_shape=(jax.ShapeDtypeStruct((2, T_pad, B, HP), jnp.float32),
                   jax.ShapeDtypeStruct((2, B, HP), jnp.float32)),
        grid=(n_chunks,),
        in_specs=[
            pl.BlockSpec((2, t_chunk, B, 3 * HP), lambda c: (0, c, 0, 0)),
            pl.BlockSpec((2, HP, 3 * HP), lambda c: (0, 0, 0)),
            pl.BlockSpec((2, 1, HP), lambda c: (0, 0, 0)),
            pl.BlockSpec((2, B, HP), lambda c: (0, 0, 0)),
            pl.BlockSpec((2, B, HP), lambda c: (0, 0, 0)),
        ],
        out_specs=(
            pl.BlockSpec((2, t_chunk, B, HP), lambda c: (0, c, 0, 0)),
            pl.BlockSpec((2, B, HP), lambda c: (0, 0, 0)),
        ),
        scratch_shapes=[pltpu.VMEM((2, B, HP), jnp.float32)],
        compiler_params=pltpu.CompilerParams(
            dimension_semantics=("arbitrary",)),
    )(xproj, whh, bhhn, lo, hi)

    def extract(e, T_e):
        o = out[e]                                      # [T_pad, B, Hp]
        fwd = o[:T_e, :, :H]                            # fwd output at time t
        bwd = jnp.flip(o, axis=0)[:T_e, :, HD:HD + H]   # bwd stored at T_pad-1-t
        h = hfin[e]
        hidden = jnp.stack([h[:, :H], h[:, HD:HD + H]], axis=0)   # [2, B, H]
        return fwd + bwd, hidden    # the module sums the two output halves

    return extract(0, T_his), extract(1, T_kg)


# ----------------------------------------------------------------------------
# Parameter init (matches shapes of a 1-layer bidirectional nn.GRU; orthogonal
# weights as in the module's __init__, uniform(-1/sqrt(H), 1/sqrt(H)) biases).
# ----------------------------------------------------------------------------
def init_gru_params(key, embedding_size, hidden_size):
    E, H = embedding_size, hidden_size
    ks = jax.random.split(key, 8)
    ortho = jax.nn.initializers.orthogonal()
    bound = 1.0 / jnp.sqrt(jnp.float32(H))

    def ih(k):   # weight_ih [3H, E] -> [3, E, H] (input dim first; gates r,z,n)
        return jnp.transpose(ortho(k, (3 * H, E), jnp.float32).reshape(3, H, E), (0, 2, 1))

    def hh(k):   # weight_hh [3H, H] -> [3, H, H]
        return jnp.transpose(ortho(k, (3 * H, H), jnp.float32).reshape(3, H, H), (0, 2, 1))

    def bias(k):
        return jax.random.uniform(k, (3, H), jnp.float32, -bound, bound)

    return {"w_ih_f": ih(ks[0]), "w_hh_f": hh(ks[1]), "b_ih_f": bias(ks[2]), "b_hh_f": bias(ks[3]),
            "w_ih_b": ih(ks[4]), "w_hh_b": hh(ks[5]), "b_ih_b": bias(ks[6]), "b_hh_b": bias(ks[7])}


# ----------------------------------------------------------------------------
# Pure-JAX f32 reference (packed bidirectional GRU semantics) for validation.
# ----------------------------------------------------------------------------
def _ref_gru_cell(x, h, w_ih, w_hh, b_ih, b_hh):
    gi = jnp.einsum('be,geh->bgh', x, w_ih) + b_ih[None]
    gh = jnp.einsum('bh,ghk->bgk', h, w_hh) + b_hh[None]
    r = jax.nn.sigmoid(gi[:, 0] + gh[:, 0])
    z = jax.nn.sigmoid(gi[:, 1] + gh[:, 1])
    n = jnp.tanh(gi[:, 2] + r * gh[:, 2])
    return (1.0 - z) * n + z * h


def _ref_bigru(x, lengths, p, H):
    T, B, _ = x.shape
    valid = lambda t: (t < lengths)[:, None]
    h_f = jnp.zeros((B, H), jnp.float32)
    outs_f = []
    for t in range(T):
        h_new = _ref_gru_cell(x[t], h_f, p["w_ih_f"], p["w_hh_f"], p["b_ih_f"], p["b_hh_f"])
        h_f = jnp.where(valid(t), h_new, h_f)
        outs_f.append(jnp.where(valid(t), h_f, 0.0))
    h_b = jnp.zeros((B, H), jnp.float32)
    outs_b = [None] * T
    for t in range(T - 1, -1, -1):
        h_new = _ref_gru_cell(x[t], h_b, p["w_ih_b"], p["w_hh_b"], p["b_ih_b"], p["b_hh_b"])
        h_b = jnp.where(valid(t), h_new, h_b)
        outs_b[t] = jnp.where(valid(t), h_b, 0.0)
    out = jnp.stack(outs_f, 0) + jnp.stack(outs_b, 0)   # module sums fwd+bwd halves
    return out, jnp.stack([h_f, h_b], 0)


# ----------------------------------------------------------------------------
# EncoderRNN-equivalent wrapper class.
# ----------------------------------------------------------------------------
class EncoderRNNPallas:
    def __init__(self, hidden_size, embedding_size, n_layers=1, dropout=0.0, *, key):
        assert n_layers == 1, "reference module is used with n_layers=1"
        assert hidden_size <= HD, "direction-packed layout assumes H <= 64"
        self.hidden_size = hidden_size
        self.dropout_p = dropout

        k_kg, k_his, k_w1, k_w2 = jax.random.split(key, 4)
        self.gru_kg = init_gru_params(k_kg, embedding_size, hidden_size)
        self.gru_his = init_gru_params(k_his, embedding_size, hidden_size)

        self.params = {
            "H": hidden_size,
            "his": _pack_encoder_params(self.gru_his, embedding_size, hidden_size),
            "kg": _pack_encoder_params(self.gru_kg, embedding_size, hidden_size),
        }
        # W1 / W2 are declared in the PyTorch __init__ but never used in forward;
        # initialized here only for shape parity.
        self.W1_w = jax.random.normal(k_w1, (hidden_size, 2 * hidden_size), jnp.float32) * 0.02
        self.W1_b = jnp.zeros((hidden_size,), jnp.float32)
        self.W2_w = jax.random.normal(k_w2, (hidden_size, hidden_size), jnp.float32) * 0.02
        self.W2_b = jnp.zeros((hidden_size,), jnp.float32)

        self._forward_jit = jax.jit(self._forward_impl)

    def _forward_impl(self, input_history_seq, input_history_lengths,
                      input_kg_seq, input_kg_lengths,
                      unsort_idx_history, unsort_idx_kg):
        # nn.Dropout(p=0) on input_kg_seq (the module default) is the identity.
        # TODO(synk): for dropout p > 0 (training mode) a PRNG mask would be needed.
        (his_out, hidden_his), (kg_out, hidden_kg) = dual_bidirectional_gru(
            self.params, input_history_seq, input_history_lengths,
            input_kg_seq, input_kg_lengths)

        kg_out = kg_out[:, unsort_idx_kg, :]             # index_select(dim=1)
        hidden_kg = hidden_kg[:, unsort_idx_kg, :]
        his_out = his_out[:, unsort_idx_history, :]
        hidden_his = hidden_his[:, unsort_idx_history, :]
        return his_out, hidden_his, kg_out, hidden_kg

    def forward(self, input_history_seq, input_history_lengths,
                input_kg_seq, input_kg_lengths, unsort_idxs):
        unsort_idx_history, unsort_idx_kg = unsort_idxs
        return self._forward_jit(input_history_seq, input_history_lengths,
                                 input_kg_seq, input_kg_lengths,
                                 unsort_idx_history, unsort_idx_kg)


if __name__ == "__main__":
    key = jax.random.PRNGKey(0)
    k_model, k_his, k_kg = jax.random.split(key, 3)

    B, E, H = 2, 25, 32          # E = WORD_EMBEDDING_DIM_NO_PRETRAIN
    T_his, T_kg = 8, 6

    enc = EncoderRNNPallas(hidden_size=H, embedding_size=E, n_layers=1,
                           dropout=0.0, key=k_model)

    input_history_seq = jax.random.normal(k_his, (T_his, B, E), jnp.float32)
    input_kg_seq = jax.random.normal(k_kg, (T_kg, B, E), jnp.float32)
    # lengths sorted descending (pack_padded_sequence default requirement)
    input_history_lengths = jnp.array([8, 5], jnp.int32)
    input_kg_lengths = jnp.array([6, 3], jnp.int32)
    unsort_idx_history = jnp.array([1, 0], jnp.int32)
    unsort_idx_kg = jnp.array([0, 1], jnp.int32)

    outs = enc.forward(input_history_seq, input_history_lengths,
                       input_kg_seq, input_kg_lengths,
                       (unsort_idx_history, unsort_idx_kg))
    jax.block_until_ready(outs)
    his_outputs, hidden_his, kg_outputs, hidden_kg = outs

    assert his_outputs.shape == (T_his, B, H)
    assert hidden_his.shape == (2, B, H)
    assert kg_outputs.shape == (T_kg, B, H)
    assert hidden_kg.shape == (2, B, H)
    assert jnp.all(jnp.isfinite(his_outputs)) and jnp.all(jnp.isfinite(kg_outputs))

    # Validate against a pure-JAX f32 packed-bidirectional-GRU reference.
    ref_his_out, ref_hid_his = _ref_bigru(input_history_seq, input_history_lengths,
                                          enc.gru_his, H)
    ref_kg_out, ref_hid_kg = _ref_bigru(input_kg_seq, input_kg_lengths,
                                        enc.gru_kg, H)
    ref_his_out = ref_his_out[:, unsort_idx_history, :]
    ref_hid_his = ref_hid_his[:, unsort_idx_history, :]
    ref_kg_out = ref_kg_out[:, unsort_idx_kg, :]
    ref_hid_kg = ref_hid_kg[:, unsort_idx_kg, :]
    for got, ref in [(his_outputs, ref_his_out), (hidden_his, ref_hid_his),
                     (kg_outputs, ref_kg_out), (hidden_kg, ref_hid_kg)]:
        err = float(jnp.max(jnp.abs(got - ref)))
        assert err < 5e-2, f"mismatch vs reference: max abs err = {err}"

    print("KERNEL_OK")
</pallas_src>

<mosaic_0001>
module attributes {stable_mosaic.version = 11 : i64} {
  func.func @_dual_bigru_kernel(%arg0: i32, %arg1: memref<2x8x2x384xbf16, #tpu.memory_space<vmem>>, %arg2: memref<2x128x384xbf16, #tpu.memory_space<vmem>>, %arg3: memref<2x1x128xf32, #tpu.memory_space<vmem>>, %arg4: memref<2x2x128xi32, #tpu.memory_space<vmem>>, %arg5: memref<2x2x128xi32, #tpu.memory_space<vmem>>, %arg6: memref<2x8x2x128xf32, #tpu.memory_space<vmem>>, %arg7: memref<2x2x128xf32, #tpu.memory_space<vmem>>, %arg8: memref<2x2x128xf32, #tpu.memory_space<vmem>>) attributes {dimension_semantics = [#tpu.dimension_semantics<arbitrary>], iteration_bounds = array<i64: 1>, scalar_prefetch = 0 : i64, scratch_operands = 1 : i64, tpu.core_type = #tpu.core_type<tc>, window_params = [{transform_indices = @transform_0, window_bounds = array<i64: 2, 8, 2, 384>}, {pipeline_mode = #tpu.pipeline_mode<synchronous>, transform_indices = @transform_1, window_bounds = array<i64: 2, 128, 384>}, {pipeline_mode = #tpu.pipeline_mode<synchronous>, transform_indices = @transform_2, window_bounds = array<i64: 2, 1, 128>}, {pipeline_mode = #tpu.pipeline_mode<synchronous>, transform_indices = @transform_3, window_bounds = array<i64: 2, 2, 128>}, {pipeline_mode = #tpu.pipeline_mode<synchronous>, transform_indices = @transform_4, window_bounds = array<i64: 2, 2, 128>}, {transform_indices = @transform_5, window_bounds = array<i64: 2, 8, 2, 128>}, {pipeline_mode = #tpu.pipeline_mode<synchronous>, transform_indices = @transform_6, window_bounds = array<i64: 2, 2, 128>}]} {
    %c0_i32 = arith.constant 0 : i32
    %0 = arith.cmpi eq, %arg0, %c0_i32 : i32
    %1 = arith.extui %0 : i1 to i32
    %c0_i32_0 = arith.constant 0 : i32
    %2 = arith.cmpi ne, %1, %c0_i32_0 : i32
    scf.if %2 {
      %cst_218 = arith.constant 0.000000e+00 : f32
      %764 = vector.broadcast %cst_218 : f32 to vector<2x2x128xf32>
      %c0_219 = arith.constant 0 : index
      %c0_220 = arith.constant 0 : index
      %c0_221 = arith.constant 0 : index
      %765 = vector.load %arg8[%c0_219, %c0_220, %c0_221] : memref<2x2x128xf32, #tpu.memory_space<vmem>>, vector<2x2x128xf32>
      tpu.vector_store %arg8[%c0_219, %c0_220, %c0_221], %764 {strides = array<i32>} : memref<2x2x128xf32, #tpu.memory_space<vmem>>, vector<2x2x128xf32>,
    } else {
    }
    %c0 = arith.constant 0 : index
    %c0_1 = arith.constant 0 : index
    %c0_2 = arith.constant 0 : index
    %3 = vector.load %arg2[%c0, %c0_1, %c0_2] : memref<2x128x384xbf16, #tpu.memory_space<vmem>>, vector<1x128x384xbf16>
    %4 = vector.shape_cast %3 : vector<1x128x384xbf16> to vector<128x384xbf16>
    %c1 = arith.constant 1 : index
    %c0_3 = arith.constant 0 : index
    %c0_4 = arith.constant 0 : index
    %5 = vector.load %arg2[%c1, %c0_3, %c0_4] : memref<2x128x384xbf16, #tpu.memory_space<vmem>>, vector<1x128x384xbf16>
    %6 = vector.shape_cast %5 : vector<1x128x384xbf16> to vector<128x384xbf16>
    %c0_5 = arith.constant 0 : index
    %c0_6 = arith.constant 0 : index
    %c0_7 = arith.constant 0 : index
    %7 = vector.load %arg4[%c0_5, %c0_6, %c0_7] : memref<2x2x128xi32, #tpu.memory_space<vmem>>, vector<1x2x128xi32>
    %8 = vector.shape_cast %7 : vector<1x2x128xi32> to vector<2x128xi32>
    %c0_8 = arith.constant 0 : index
    %c0_9 = arith.constant 0 : index
    %c0_10 = arith.constant 0 : index
    %9 = vector.load %arg5[%c0_8, %c0_9, %c0_10] : memref<2x2x128xi32, #tpu.memory_space<vmem>>, vector<1x2x128xi32>
    %10 = vector.shape_cast %9 : vector<1x2x128xi32> to vector<2x128xi32>
    %c1_11 = arith.constant 1 : index
    %c0_12 = arith.constant 0 : index
    %c0_13 = arith.constant 0 : index
    %11 = vector.load %arg4[%c1_11, %c0_12, %c0_13] : memref<2x2x128xi32, #tpu.memory_space<vmem>>, vector<1x2x128xi32>
    %12 = vector.shape_cast %11 : vector<1x2x128xi32> to vector<2x128xi32>
    %c1_14 = arith.constant 1 : index
    %c0_15 = arith.constant 0 : index
    %c0_16 = arith.constant 0 : index
    %13 = vector.load %arg5[%c1_14, %c0_15, %c0_16] : memref<2x2x128xi32, #tpu.memory_space<vmem>>, vector<1x2x128xi32>
    %14 = vector.shape_cast %13 : vector<1x2x128xi32> to vector<2x128xi32>
    %c0_17 = arith.constant 0 : index
    %c0_18 = arith.constant 0 : index
    %c0_19 = arith.constant 0 : index
    %15 = vector.load %arg3[%c0_17, %c0_18, %c0_19] : memref<2x1x128xf32, #tpu.memory_space<vmem>>, vector<1x1x128xf32>
    %16 = vector.shape_cast %15 : vector<1x1x128xf32> to vector<1x128xf32>
    %17 = vector.shape_cast %16 : vector<1x128xf32> to vector<1x128xf32>
    %18 = vector.broadcast %17 : vector<1x128xf32> to vector<2x128xf32>
    %c1_20 = arith.constant 1 : index
    %c0_21 = arith.constant 0 : index
    %c0_22 = arith.constant 0 : index
    %19 = vector.load %arg3[%c1_20, %c0_21, %c0_22] : memref<2x1x128xf32, #tpu.memory_space<vmem>>, vector<1x1x128xf32>
    %20 = vector.shape_cast %19 : vector<1x1x128xf32> to vector<1x128xf32>
    %21 = vector.shape_cast %20 : vector<1x128xf32> to vector<1x128xf32>
    %22 = vector.broadcast %21 : vector<1x128xf32> to vector<2x128xf32>
    %c8_i32 = arith.constant 8 : i32
    %23 = arith.muli %arg0, %c8_i32 : i32
    %c0_23 = arith.constant 0 : index
    %c0_24 = arith.constant 0 : index
    %c0_25 = arith.constant 0 : index
    %24 = vector.load %arg8[%c0_23, %c0_24, %c0_25] : memref<2x2x128xf32, #tpu.memory_space<vmem>>, vector<1x2x128xf32>
    %25 = vector.shape_cast %24 : vector<1x2x128xf32> to vector<2x128xf32>
    %c1_26 = arith.constant 1 : index
    %c0_27 = arith.constant 0 : index
    %c0_28 = arith.constant 0 : index
    %26 = vector.load %arg8[%c1_26, %c0_27, %c0_28] : memref<2x2x128xf32, #tpu.memory_space<vmem>>, vector<1x2x128xf32>
    %27 = vector.shape_cast %26 : vector<1x2x128xf32> to vector<2x128xf32>
    %c0_i32_29 = arith.constant 0 : i32
    %28 = arith.addi %23, %c0_i32_29 : i32
    %c0_30 = arith.constant 0 : index
    %29 = arith.index_cast %c0_i32_29 : i32 to index
    %c0_31 = arith.constant 0 : index
    %c0_32 = arith.constant 0 : index
    %30 = vector.load %arg1[%c0_30, %29, %c0_31, %c0_32] : memref<2x8x2x384xbf16, #tpu.memory_space<vmem>>, vector<1x1x2x384xbf16>
    %31 = vector.shape_cast %30 : vector<1x1x2x384xbf16> to vector<2x384xbf16>
    %32 = vector.broadcast %28 : i32 to vector<2x128xi32>
    %33 = arith.cmpi sge, %32, %8 : vector<2x128xi32>
    %34 = vector.broadcast %28 : i32 to vector<2x128xi32>
    %35 = arith.cmpi slt, %34, %10 : vector<2x128xi32>
    %36 = arith.andi %33, %35 : vector<2x128xi1>
    %37 = arith.extf %31 : vector<2x384xbf16> to vector<2x384xf32>
    %38 = arith.truncf %25 : vector<2x128xf32> to vector<2x128xbf16>
    %cst = arith.constant dense<0.000000e+00> : vector<2x384xf32>
    %39 = tpu.matmul %38, %4, %cst {dimension_numbers = #tpu.dot_dimension_numbers<[1], [0], [0], [1], [0, 0, 1, 1], [], []>} : vector<2x128xbf16>, vector<128x384xbf16>, vector<2x384xf32> -> vector<2x384xf32>
    %40 = vector.extract_strided_slice %37 {offsets = [0, 0], sizes = [2, 128], strides = [1, 1]} : vector<2x384xf32> to vector<2x128xf32>
    %41 = vector.extract_strided_slice %39 {offsets = [0, 0], sizes = [2, 128], strides = [1, 1]} : vector<2x384xf32> to vector<2x128xf32>
    %42 = arith.addf %40, %41 : vector<2x128xf32>
    %43 = arith.negf %42 : vector<2x128xf32>
    %44 = math.exp %43 : vector<2x128xf32>
    %cst_33 = arith.constant 1.000000e+00 : f32
    %45 = vector.broadcast %cst_33 : f32 to vector<2x128xf32>
    %46 = arith.addf %45, %44 : vector<2x128xf32>
    %47 = arith.divf %45, %46 : vector<2x128xf32>
    %48 = vector.extract_strided_slice %37 {offsets = [0, 128], sizes = [2, 128], strides = [1, 1]} : vector<2x384xf32> to vector<2x128xf32>
    %49 = vector.extract_strided_slice %39 {offsets = [0, 128], sizes = [2, 128], strides = [1, 1]} : vector<2x384xf32> to vector<2x128xf32>
    %50 = arith.addf %48, %49 : vector<2x128xf32>
    %51 = arith.negf %50 : vector<2x128xf32>
    %52 = math.exp %51 : vector<2x128xf32>
    %cst_34 = arith.constant 1.000000e+00 : f32
    %53 = vector.broadcast %cst_34 : f32 to vector<2x128xf32>
    %54 = arith.addf %53, %52 : vector<2x128xf32>
    %55 = arith.divf %53, %54 : vector<2x128xf32>
    %56 = vector.extract_strided_slice %37 {offsets = [0, 256], sizes = [2, 128], strides = [1, 1]} : vector<2x384xf32> to vector<2x128xf32>
    %57 = vector.extract_strided_slice %39 {offsets = [0, 256], sizes = [2, 128], strides = [1, 1]} : vector<2x384xf32> to vector<2x128xf32>
    %58 = arith.addf %57, %18 : vector<2x128xf32>
    %59 = arith.mulf %47, %58 : vector<2x128xf32>
    %60 = arith.addf %56, %59 : vector<2x128xf32>
    %61 = math.tanh %60 : vector<2x128xf32>
    %cst_35 = arith.constant 1.000000e+00 : f32
    %62 = vector.broadcast %cst_35 : f32 to vector<2x128xf32>
    %63 = arith.subf %62, %55 : vector<2x128xf32>
    %64 = arith.mulf %63, %61 : vector<2x128xf32>
    %65 = arith.mulf %55, %25 : vector<2x128xf32>
    %66 = arith.addf %64, %65 : vector<2x128xf32>
    %67 = arith.select %36, %66, %25 : vector<2x128xi1>, vector<2x128xf32>
    %cst_36 = arith.constant 0.000000e+00 : f32
    %68 = vector.broadcast %cst_36 : f32 to vector<2x128xf32>
    %69 = arith.select %36, %67, %68 : vector<2x128xi1>, vector<2x128xf32>
    %c1_37 = arith.constant 1 : index
    %70 = arith.index_cast %c0_i32_29 : i32 to index
    %c0_38 = arith.constant 0 : index
    %c0_39 = arith.constant 0 : index
    %71 = vector.load %arg1[%c1_37, %70, %c0_38, %c0_39] : memref<2x8x2x384xbf16, #tpu.memory_space<vmem>>, vector<1x1x2x384xbf16>
    %72 = vector.shape_cast %71 : vector<1x1x2x384xbf16> to vector<2x384xbf16>
    %73 = vector.broadcast %28 : i32 to vector<2x128xi32>
    %74 = arith.cmpi sge, %73, %12 : vector<2x128xi32>
    %75 = vector.broadcast %28 : i32 to vector<2x128xi32>
    %76 = arith.cmpi slt, %75, %14 : vector<2x128xi32>
    %77 = arith.andi %74, %76 : vector<2x128xi1>
    %78 = arith.extf %72 : vector<2x384xbf16> to vector<2x384xf32>
    %79 = arith.truncf %27 : vector<2x128xf32> to vector<2x128xbf16>
    %cst_40 = arith.constant dense<0.000000e+00> : vector<2x384xf32>
    %80 = tpu.matmul %79, %6, %cst_40 {dimension_numbers = #tpu.dot_dimension_numbers<[1], [0], [0], [1], [0, 0, 1, 1], [], []>} : vector<2x128xbf16>, vector<128x384xbf16>, vector<2x384xf32> -> vector<2x384xf32>
    %81 = vector.extract_strided_slice %78 {offsets = [0, 0], sizes = [2, 128], strides = [1, 1]} : vector<2x384xf32> to vector<2x128xf32>
    %82 = vector.extract_strided_slice %80 {offsets = [0, 0], sizes = [2, 128], strides = [1, 1]} : vector<2x384xf32> to vector<2x128xf32>
    %83 = arith.addf %81, %82 : vector<2x128xf32>
    %84 = arith.negf %83 : vector<2x128xf32>
    %85 = math.exp %84 : vector<2x128xf32>
    %cst_41 = arith.constant 1.000000e+00 : f32
    %86 = vector.broadcast %cst_41 : f32 to vector<2x128xf32>
    %87 = arith.addf %86, %85 : vector<2x128xf32>
    %88 = arith.divf %86, %87 : vector<2x128xf32>
    %89 = vector.extract_strided_slice %78 {offsets = [0, 128], sizes = [2, 128], strides = [1, 1]} : vector<2x384xf32> to vector<2x128xf32>
    %90 = vector.extract_strided_slice %80 {offsets = [0, 128], sizes = [2, 128], strides = [1, 1]} : vector<2x384xf32> to vector<2x128xf32>
    %91 = arith.addf %89, %90 : vector<2x128xf32>
    %92 = arith.negf %91 : vector<2x128xf32>
    %93 = math.exp %92 : vector<2x128xf32>
    %cst_42 = arith.constant 1.000000e+00 : f32
    %94 = vector.broadcast %cst_42 : f32 to vector<2x128xf32>
    %95 = arith.addf %94, %93 : vector<2x128xf32>
    %96 = arith.divf %94, %95 : vector<2x128xf32>
    %97 = vector.extract_strided_slice %78 {offsets = [0, 256], sizes = [2, 128], strides = [1, 1]} : vector<2x384xf32> to vector<2x128xf32>
    %98 = vector.extract_strided_slice %80 {offsets = [0, 256], sizes = [2, 128], strides = [1, 1]} : vector<2x384xf32> to vector<2x128xf32>
    %99 = arith.addf %98, %22 : vector<2x128xf32>
    %100 = arith.mulf %88, %99 : vector<2x128xf32>
    %101 = arith.addf %97, %100 : vector<2x128xf32>
    %102 = math.tanh %101 : vector<2x128xf32>
    %cst_43 = arith.constant 1.000000e+00 : f32
    %103 = vector.broadcast %cst_43 : f32 to vector<2x128xf32>
    %104 = arith.subf %103, %96 : vector<2x128xf32>
    %105 = arith.mulf %104, %102 : vector<2x128xf32>
    %106 = arith.mulf %96, %27 : vector<2x128xf32>
    %107 = arith.addf %105, %106 : vector<2x128xf32>
    %108 = arith.select %77, %107, %27 : vector<2x128xi1>, vector<2x128xf32>
    %cst_44 = arith.constant 0.000000e+00 : f32
    %109 = vector.broadcast %cst_44 : f32 to vector<2x128xf32>
    %110 = arith.select %77, %108, %109 : vector<2x128xi1>, vector<2x128xf32>
    %c0_45 = arith.constant 0 : index
    %111 = arith.index_cast %c0_i32_29 : i32 to index
    %c0_46 = arith.constant 0 : index
    %c0_47 = arith.constant 0 : index
    %112 = vector.load %arg6[%c0_45, %111, %c0_46, %c0_47] : memref<2x8x2x128xf32, #tpu.memory_space<vmem>>, vector<1x1x2x128xf32>
    %113 = vector.shape_cast %112 : vector<1x1x2x128xf32> to vector<2x128xf32>
    %114 = vector.shape_cast %69 : vector<2x128xf32> to vector<1x1x2x128xf32>
    tpu.vector_store %arg6[%c0_45, %111, %c0_46, %c0_47], %114 {strides = array<i32>} : memref<2x8x2x128xf32, #tpu.memory_space<vmem>>, vector<1x1x2x128xf32>,
    %c1_48 = arith.constant 1 : index
    %115 = arith.index_cast %c0_i32_29 : i32 to index
    %c0_49 = arith.constant 0 : index
    %c0_50 = arith.constant 0 : index
    %116 = vector.load %arg6[%c1_48, %115, %c0_49, %c0_50] : memref<2x8x2x128xf32, #tpu.memory_space<vmem>>, vector<1x1x2x128xf32>
    %117 = vector.shape_cast %116 : vector<1x1x2x128xf32> to vector<2x128xf32>
    %118 = vector.shape_cast %110 : vector<2x128xf32> to vector<1x1x2x128xf32>
    tpu.vector_store %arg6[%c1_48, %115, %c0_49, %c0_50], %118 {strides = array<i32>} : memref<2x8x2x128xf32, #tpu.memory_space<vmem>>, vector<1x1x2x128xf32>,
    %c1_i32 = arith.constant 1 : i32
    %119 = arith.addi %23, %c1_i32 : i32
    %c0_51 = arith.constant 0 : index
    %120 = arith.index_cast %c1_i32 : i32 to index
    %c0_52 = arith.constant 0 : index
    %c0_53 = arith.constant 0 : index
    %121 = vector.load %arg1[%c0_51, %120, %c0_52, %c0_53] : memref<2x8x2x384xbf16, #tpu.memory_space<vmem>>, vector<1x1x2x384xbf16>
    %122 = vector.shape_cast %121 : vector<1x1x2x384xbf16> to vector<2x384xbf16>
    %123 = vector.broadcast %119 : i32 to vector<2x128xi32>
    %124 = arith.cmpi sge, %123, %8 : vector<2x128xi32>
    %125 = vector.broadcast %119 : i32 to vector<2x128xi32>
    %126 = arith.cmpi slt, %125, %10 : vector<2x128xi32>
    %127 = arith.andi %124, %126 : vector<2x128xi1>
    %128 = arith.extf %122 : vector<2x384xbf16> to vector<2x384xf32>
    %129 = arith.truncf %67 : vector<2x128xf32> to vector<2x128xbf16>
    %cst_54 = arith.constant dense<0.000000e+00> : vector<2x384xf32>
    %130 = tpu.matmul %129, %4, %cst_54 {dimension_numbers = #tpu.dot_dimension_numbers<[1], [0], [0], [1], [0, 0, 1, 1], [], []>} : vector<2x128xbf16>, vector<128x384xbf16>, vector<2x384xf32> -> vector<2x384xf32>
    %131 = vector.extract_strided_slice %128 {offsets = [0, 0], sizes = [2, 128], strides = [1, 1]} : vector<2x384xf32> to vector<2x128xf32>
    %132 = vector.extract_strided_slice %130 {offsets = [0, 0], sizes = [2, 128], strides = [1, 1]} : vector<2x384xf32> to vector<2x128xf32>
    %133 = arith.addf %131, %132 : vector<2x128xf32>
    %134 = arith.negf %133 : vector<2x128xf32>
    %135 = math.exp %134 : vector<2x128xf32>
    %cst_55 = arith.constant 1.000000e+00 : f32
    %136 = vector.broadcast %cst_55 : f32 to vector<2x128xf32>
    %137 = arith.addf %136, %135 : vector<2x128xf32>
    %138 = arith.divf %136, %137 : vector<2x128xf32>
    %139 = vector.extract_strided_slice %128 {offsets = [0, 128], sizes = [2, 128], strides = [1, 1]} : vector<2x384xf32> to vector<2x128xf32>
    %140 = vector.extract_strided_slice %130 {offsets = [0, 128], sizes = [2, 128], strides = [1, 1]} : vector<2x384xf32> to vector<2x128xf32>
    %141 = arith.addf %139, %140 : vector<2x128xf32>
    %142 = arith.negf %141 : vector<2x128xf32>
    %143 = math.exp %142 : vector<2x128xf32>
    %cst_56 = arith.constant 1.000000e+00 : f32
    %144 = vector.broadcast %cst_56 : f32 to vector<2x128xf32>
    %145 = arith.addf %144, %143 : vector<2x128xf32>
    %146 = arith.divf %144, %145 : vector<2x128xf32>
    %147 = vector.extract_strided_slice %128 {offsets = [0, 256], sizes = [2, 128], strides = [1, 1]} : vector<2x384xf32> to vector<2x128xf32>
    %148 = vector.extract_strided_slice %130 {offsets = [0, 256], sizes = [2, 128], strides = [1, 1]} : vector<2x384xf32> to vector<2x128xf32>
    %149 = arith.addf %148, %18 : vector<2x128xf32>
    %150 = arith.mulf %138, %149 : vector<2x128xf32>
    %151 = arith.addf %147, %150 : vector<2x128xf32>
    %152 = math.tanh %151 : vector<2x128xf32>
    %cst_57 = arith.constant 1.000000e+00 : f32
    %153 = vector.broadcast %cst_57 : f32 to vector<2x128xf32>
    %154 = arith.subf %153, %146 : vector<2x128xf32>
    %155 = arith.mulf %154, %152 : vector<2x128xf32>
    %156 = arith.mulf %146, %67 : vector<2x128xf32>
    %157 = arith.addf %155, %156 : vector<2x128xf32>
    %158 = arith.select %127, %157, %67 : vector<2x128xi1>, vector<2x128xf32>
    %cst_58 = arith.constant 0.000000e+00 : f32
    %159 = vector.broadcast %cst_58 : f32 to vector<2x128xf32>
    %160 = arith.select %127, %158, %159 : vector<2x128xi1>, vector<2x128xf32>
    %c1_59 = arith.constant 1 : index
    %161 = arith.index_cast %c1_i32 : i32 to index
    %c0_60 = arith.constant 0 : index
    %c0_61 = arith.constant 0 : index
    %162 = vector.load %arg1[%c1_59, %161, %c0_60, %c0_61] : memref<2x8x2x384xbf16, #tpu.memory_space<vmem>>, vector<1x1x2x384xbf16>
    %163 = vector.shape_cast %162 : vector<1x1x2x384xbf16> to vector<2x384xbf16>
    %164 = vector.broadcast %119 : i32 to vector<2x128xi32>
    %165 = arith.cmpi sge, %164, %12 : vector<2x128xi32>
    %166 = vector.broadcast %119 : i32 to vector<2x128xi32>
    %167 = arith.cmpi slt, %166, %14 : vector<2x128xi32>
    %168 = arith.andi %165, %167 : vector<2x128xi1>
    %169 = arith.extf %163 : vector<2x384xbf16> to vector<2x384xf32>
    %170 = arith.truncf %108 : vector<2x128xf32> to vector<2x128xbf16>
    %cst_62 = arith.constant dense<0.000000e+00> : vector<2x384xf32>
    %171 = tpu.matmul %170, %6, %cst_62 {dimension_numbers = #tpu.dot_dimension_numbers<[1], [0], [0], [1], [0, 0, 1, 1], [], []>} : vector<2x128xbf16>, vector<128x384xbf16>, vector<2x384xf32> -> vector<2x384xf32>
    %172 = vector.extract_strided_slice %169 {offsets = [0, 0], sizes = [2, 128], strides = [1, 1]} : vector<2x384xf32> to vector<2x128xf32>
    %173 = vector.extract_strided_slice %171 {offsets = [0, 0], sizes = [2, 128], strides = [1, 1]} : vector<2x384xf32> to vector<2x128xf32>
    %174 = arith.addf %172, %173 : vector<2x128xf32>
    %175 = arith.negf %174 : vector<2x128xf32>
    %176 = math.exp %175 : vector<2x128xf32>
    %cst_63 = arith.constant 1.000000e+00 : f32
    %177 = vector.broadcast %cst_63 : f32 to vector<2x128xf32>
    %178 = arith.addf %177, %176 : vector<2x128xf32>
    %179 = arith.divf %177, %178 : vector<2x128xf32>
    %180 = vector.extract_strided_slice %169 {offsets = [0, 128], sizes = [2, 128], strides = [1, 1]} : vector<2x384xf32> to vector<2x128xf32>
    %181 = vector.extract_strided_slice %171 {offsets = [0, 128], sizes = [2, 128], strides = [1, 1]} : vector<2x384xf32> to vector<2x128xf32>
    %182 = arith.addf %180, %181 : vector<2x128xf32>
    %183 = arith.negf %182 : vector<2x128xf32>
    %184 = math.exp %183 : vector<2x128xf32>
    %cst_64 = arith.constant 1.000000e+00 : f32
    %185 = vector.broadcast %cst_64 : f32 to vector<2x128xf32>
    %186 = arith.addf %185, %184 : vector<2x128xf32>
    %187 = arith.divf %185, %186 : vector<2x128xf32>
    %188 = vector.extract_strided_slice %169 {offsets = [0, 256], sizes = [2, 128], strides = [1, 1]} : vector<2x384xf32> to vector<2x128xf32>
    %189 = vector.extract_strided_slice %171 {offsets = [0, 256], sizes = [2, 128], strides = [1, 1]} : vector<2x384xf32> to vector<2x128xf32>
    %190 = arith.addf %189, %22 : vector<2x128xf32>
    %191 = arith.mulf %179, %190 : vector<2x128xf32>
    %192 = arith.addf %188, %191 : vector<2x128xf32>
    %193 = math.tanh %192 : vector<2x128xf32>
    %cst_65 = arith.constant 1.000000e+00 : f32
    %194 = vector.broadcast %cst_65 : f32 to vector<2x128xf32>
    %195 = arith.subf %194, %187 : vector<2x128xf32>
    %196 = arith.mulf %195, %193 : vector<2x128xf32>
    %197 = arith.mulf %187, %108 : vector<2x128xf32>
    %198 = arith.addf %196, %197 : vector<2x128xf32>
    %199 = arith.select %168, %198, %108 : vector<2x128xi1>, vector<2x128xf32>
    %cst_66 = arith.constant 0.000000e+00 : f32
    %200 = vector.broadcast %cst_66 : f32 to vector<2x128xf32>
    %201 = arith.select %168, %199, %200 : vector<2x128xi1>, vector<2x128xf32>
    %c0_67 = arith.constant 0 : index
    %202 = arith.index_cast %c1_i32 : i32 to index
    %c0_68 = arith.constant 0 : index
    %c0_69 = arith.constant 0 : index
    %203 = vector.load %arg6[%c0_67, %202, %c0_68, %c0_69] : memref<2x8x2x128xf32, #tpu.memory_space<vmem>>, vector<1x1x2x128xf32>
    %204 = vector.shape_cast %203 : vector<1x1x2x128xf32> to vector<2x128xf32>
    %205 = vector.shape_cast %160 : vector<2x128xf32> to vector<1x1x2x128xf32>
    tpu.vector_store %arg6[%c0_67, %202, %c0_68, %c0_69], %205 {strides = array<i32>} : memref<2x8x2x128xf32, #tpu.memory_space<vmem>>, vector<1x1x2x128xf32>,
    %c1_70 = arith.constant 1 : index
    %206 = arith.index_cast %c1_i32 : i32 to index
    %c0_71 = arith.constant 0 : index
    %c0_72 = arith.constant 0 : index
    %207 = vector.load %arg6[%c1_70, %206, %c0_71, %c0_72] : memref<2x8x2x128xf32, #tpu.memory_space<vmem>>, vector<1x1x2x128xf32>
    %208 = vector.shape_cast %207 : vector<1x1x2x128xf32> to vector<2x128xf32>
    %209 = vector.shape_cast %201 : vector<2x128xf32> to vector<1x1x2x128xf32>
    tpu.vector_store %arg6[%c1_70, %206, %c0_71, %c0_72], %209 {strides = array<i32>} : memref<2x8x2x128xf32, #tpu.memory_space<vmem>>, vector<1x1x2x128xf32>,
    %c2_i32 = arith.constant 2 : i32
    %210 = arith.addi %23, %c2_i32 : i32
    %c0_73 = arith.constant 0 : index
    %211 = arith.index_cast %c2_i32 : i32 to index
    %c0_74 = arith.constant 0 : index
    %c0_75 = arith.constant 0 : index
    %212 = vector.load %arg1[%c0_73, %211, %c0_74, %c0_75] : memref<2x8x2x384xbf16, #tpu.memory_space<vmem>>, vector<1x1x2x384xbf16>
    %213 = vector.shape_cast %212 : vector<1x1x2x384xbf16> to vector<2x384xbf16>
    %214 = vector.broadcast %210 : i32 to vector<2x128xi32>
    %215 = arith.cmpi sge, %214, %8 : vector<2x128xi32>
    %216 = vector.broadcast %210 : i32 to vector<2x128xi32>
    %217 = arith.cmpi slt, %216, %10 : vector<2x128xi32>
    %218 = arith.andi %215, %217 : vector<2x128xi1>
    %219 = arith.extf %213 : vector<2x384xbf16> to vector<2x384xf32>
    %220 = arith.truncf %158 : vector<2x128xf32> to vector<2x128xbf16>
    %cst_76 = arith.constant dense<0.000000e+00> : vector<2x384xf32>
    %221 = tpu.matmul %220, %4, %cst_76 {dimension_numbers = #tpu.dot_dimension_numbers<[1], [0], [0], [1], [0, 0, 1, 1], [], []>} : vector<2x128xbf16>, vector<128x384xbf16>, vector<2x384xf32> -> vector<2x384xf32>
    %222 = vector.extract_strided_slice %219 {offsets = [0, 0], sizes = [2, 128], strides = [1, 1]} : vector<2x384xf32> to vector<2x128xf32>
    %223 = vector.extract_strided_slice %221 {offsets = [0, 0], sizes = [2, 128], strides = [1, 1]} : vector<2x384xf32> to vector<2x128xf32>
    %224 = arith.addf %222, %223 : vector<2x128xf32>
    %225 = arith.negf %224 : vector<2x128xf32>
    %226 = math.exp %225 : vector<2x128xf32>
    %cst_77 = arith.constant 1.000000e+00 : f32
    %227 = vector.broadcast %cst_77 : f32 to vector<2x128xf32>
    %228 = arith.addf %227, %226 : vector<2x128xf32>
    %229 = arith.divf %227, %228 : vector<2x128xf32>
    %230 = vector.extract_strided_slice %219 {offsets = [0, 128], sizes = [2, 128], strides = [1, 1]} : vector<2x384xf32> to vector<2x128xf32>
    %231 = vector.extract_strided_slice %221 {offsets = [0, 128], sizes = [2, 128], strides = [1, 1]} : vector<2x384xf32> to vector<2x128xf32>
    %232 = arith.addf %230, %231 : vector<2x128xf32>
    %233 = arith.negf %232 : vector<2x128xf32>
    %234 = math.exp %233 : vector<2x128xf32>
    %cst_78 = arith.constant 1.000000e+00 : f32
    %235 = vector.broadcast %cst_78 : f32 to vector<2x128xf32>
    %236 = arith.addf %235, %234 : vector<2x128xf32>
    %237 = arith.divf %235, %236 : vector<2x128xf32>
    %238 = vector.extract_strided_slice %219 {offsets = [0, 256], sizes = [2, 128], strides = [1, 1]} : vector<2x384xf32> to vector<2x128xf32>
    %239 = vector.extract_strided_slice %221 {offsets = [0, 256], sizes = [2, 128], strides = [1, 1]} : vector<2x384xf32> to vector<2x128xf32>
    %240 = arith.addf %239, %18 : vector<2x128xf32>
    %241 = arith.mulf %229, %240 : vector<2x128xf32>
    %242 = arith.addf %238, %241 : vector<2x128xf32>
    %243 = math.tanh %242 : vector<2x128xf32>
    %cst_79 = arith.constant 1.000000e+00 : f32
    %244 = vector.broadcast %cst_79 : f32 to vector<2x128xf32>
    %245 = arith.subf %244, %237 : vector<2x128xf32>
    %246 = arith.mulf %245, %243 : vector<2x128xf32>
    %247 = arith.mulf %237, %158 : vector<2x128xf32>
    %248 = arith.addf %246, %247 : vector<2x128xf32>
    %249 = arith.select %218, %248, %158 : vector<2x128xi1>, vector<2x128xf32>
    %cst_80 = arith.constant 0.000000e+00 : f32
    %250 = vector.broadcast %cst_80 : f32 to vector<2x128xf32>
    %251 = arith.select %218, %249, %250 : vector<2x128xi1>, vector<2x128xf32>
    %c1_81 = arith.constant 1 : index
    %252 = arith.index_cast %c2_i32 : i32 to index
    %c0_82 = arith.constant 0 : index
    %c0_83 = arith.constant 0 : index
    %253 = vector.load %arg1[%c1_81, %252, %c0_82, %c0_83] : memref<2x8x2x384xbf16, #tpu.memory_space<vmem>>, vector<1x1x2x384xbf16>
    %254 = vector.shape_cast %253 : vector<1x1x2x384xbf16> to vector<2x384xbf16>
    %255 = vector.broadcast %210 : i32 to vector<2x128xi32>
    %256 = arith.cmpi sge, %255, %12 : vector<2x128xi32>
    %257 = vector.broadcast %210 : i32 to vector<2x128xi32>
    %258 = arith.cmpi slt, %257, %14 : vector<2x128xi32>
    %259 = arith.andi %256, %258 : vector<2x128xi1>
    %260 = arith.extf %254 : vector<2x384xbf16> to vector<2x384xf32>
    %261 = arith.truncf %199 : vector<2x128xf32> to vector<2x128xbf16>
    %cst_84 = arith.constant dense<0.000000e+00> : vector<2x384xf32>
    %262 = tpu.matmul %261, %6, %cst_84 {dimension_numbers = #tpu.dot_dimension_numbers<[1], [0], [0], [1], [0, 0, 1, 1], [], []>} : vector<2x128xbf16>, vector<128x384xbf16>, vector<2x384xf32> -> vector<2x384xf32>
    %263 = vector.extract_strided_slice %260 {offsets = [0, 0], sizes = [2, 128], strides = [1, 1]} : vector<2x384xf32> to vector<2x128xf32>
    %264 = vector.extract_strided_slice %262 {offsets = [0, 0], sizes = [2, 128], strides = [1, 1]} : vector<2x384xf32> to vector<2x128xf32>
    %265 = arith.addf %263, %264 : vector<2x128xf32>
    %266 = arith.negf %265 : vector<2x128xf32>
    %267 = math.exp %266 : vector<2x128xf32>
    %cst_85 = arith.constant 1.000000e+00 : f32
    %268 = vector.broadcast %cst_85 : f32 to vector<2x128xf32>
    %269 = arith.addf %268, %267 : vector<2x128xf32>
    %270 = arith.divf %268, %269 : vector<2x128xf32>
    %271 = vector.extract_strided_slice %260 {offsets = [0, 128], sizes = [2, 128], strides = [1, 1]} : vector<2x384xf32> to vector<2x128xf32>
    %272 = vector.extract_strided_slice %262 {offsets = [0, 128], sizes = [2, 128], strides = [1, 1]} : vector<2x384xf32> to vector<2x128xf32>
    %273 = arith.addf %271, %272 : vector<2x128xf32>
    %274 = arith.negf %273 : vector<2x128xf32>
    %275 = math.exp %274 : vector<2x128xf32>
    %cst_86 = arith.constant 1.000000e+00 : f32
    %276 = vector.broadcast %cst_86 : f32 to vector<2x128xf32>
    %277 = arith.addf %276, %275 : vector<2x128xf32>
    %278 = arith.divf %276, %277 : vector<2x128xf32>
    %279 = vector.extract_strided_slice %260 {offsets = [0, 256], sizes = [2, 128], strides = [1, 1]} : vector<2x384xf32> to vector<2x128xf32>
    %280 = vector.extract_strided_slice %262 {offsets = [0, 256], sizes = [2, 128], strides = [1, 1]} : vector<2x384xf32> to vector<2x128xf32>
    %281 = arith.addf %280, %22 : vector<2x128xf32>
    %282 = arith.mulf %270, %281 : vector<2x128xf32>
    %283 = arith.addf %279, %282 : vector<2x128xf32>
    %284 = math.tanh %283 : vector<2x128xf32>
    %cst_87 = arith.constant 1.000000e+00 : f32
    %285 = vector.broadcast %cst_87 : f32 to vector<2x128xf32>
    %286 = arith.subf %285, %278 : vector<2x128xf32>
    %287 = arith.mulf %286, %284 : vector<2x128xf32>
    %288 = arith.mulf %278, %199 : vector<2x128xf32>
    %289 = arith.addf %287, %288 : vector<2x128xf32>
    %290 = arith.select %259, %289, %199 : vector<2x128xi1>, vector<2x128xf32>
    %cst_88 = arith.constant 0.000000e+00 : f32
    %291 = vector.broadcast %cst_88 : f32 to vector<2x128xf32>
    %292 = arith.select %259, %290, %291 : vector<2x128xi1>, vector<2x128xf32>
    %c0_89 = arith.constant 0 : index
    %293 = arith.index_cast %c2_i32 : i32 to index
    %c0_90 = arith.constant 0 : index
    %c0_91 = arith.constant 0 : index
    %294 = vector.load %arg6[%c0_89, %293, %c0_90, %c0_91] : memref<2x8x2x128xf32, #tpu.memory_space<vmem>>, vector<1x1x2x128xf32>
    %295 = vector.shape_cast %294 : vector<1x1x2x128xf32> to vector<2x128xf32>
    %296 = vector.shape_cast %251 : vector<2x128xf32> to vector<1x1x2x128xf32>
    tpu.vector_store %arg6[%c0_89, %293, %c0_90, %c0_91], %296 {strides = array<i32>} : memref<2x8x2x128xf32, #tpu.memory_space<vmem>>, vector<1x1x2x128xf32>,
    %c1_92 = arith.constant 1 : index
    %297 = arith.index_cast %c2_i32 : i32 to index
    %c0_93 = arith.constant 0 : index
    %c0_94 = arith.constant 0 : index
    %298 = vector.load %arg6[%c1_92, %297, %c0_93, %c0_94] : memref<2x8x2x128xf32, #tpu.memory_space<vmem>>, vector<1x1x2x128xf32>
    %299 = vector.shape_cast %298 : vector<1x1x2x128xf32> to vector<2x128xf32>
    %300 = vector.shape_cast %292 : vector<2x128xf32> to vector<1x1x2x128xf32>
    tpu.vector_store %arg6[%c1_92, %297, %c0_93, %c0_94], %300 {strides = array<i32>} : memref<2x8x2x128xf32, #tpu.memory_space<vmem>>, vector<1x1x2x128xf32>,
    %c3_i32 = arith.constant 3 : i32
    %301 = arith.addi %23, %c3_i32 : i32
    %c0_95 = arith.constant 0 : index
    %302 = arith.index_cast %c3_i32 : i32 to index
    %c0_96 = arith.constant 0 : index
    %c0_97 = arith.constant 0 : index
    %303 = vector.load %arg1[%c0_95, %302, %c0_96, %c0_97] : memref<2x8x2x384xbf16, #tpu.memory_space<vmem>>, vector<1x1x2x384xbf16>
    %304 = vector.shape_cast %303 : vector<1x1x2x384xbf16> to vector<2x384xbf16>
    %305 = vector.broadcast %301 : i32 to vector<2x128xi32>
    %306 = arith.cmpi sge, %305, %8 : vector<2x128xi32>
    %307 = vector.broadcast %301 : i32 to vector<2x128xi32>
    %308 = arith.cmpi slt, %307, %10 : vector<2x128xi32>
    %309 = arith.andi %306, %308 : vector<2x128xi1>
    %310 = arith.extf %304 : vector<2x384xbf16> to vector<2x384xf32>
    %311 = arith.truncf %249 : vector<2x128xf32> to vector<2x128xbf16>
    %cst_98 = arith.constant dense<0.000000e+00> : vector<2x384xf32>
    %312 = tpu.matmul %311, %4, %cst_98 {dimension_numbers = #tpu.dot_dimension_numbers<[1], [0], [0], [1], [0, 0, 1, 1], [], []>} : vector<2x128xbf16>, vector<128x384xbf16>, vector<2x384xf32> -> vector<2x384xf32>
    %313 = vector.extract_strided_slice %310 {offsets = [0, 0], sizes = [2, 128], strides = [1, 1]} : vector<2x384xf32> to vector<2x128xf32>
    %314 = vector.extract_strided_slice %312 {offsets = [0, 0], sizes = [2, 128], strides = [1, 1]} : vector<2x384xf32> to vector<2x128xf32>
    %315 = arith.addf %313, %314 : vector<2x128xf32>
    %316 = arith.negf %315 : vector<2x128xf32>
    %317 = math.exp %316 : vector<2x128xf32>
    %cst_99 = arith.constant 1.000000e+00 : f32
    %318 = vector.broadcast %cst_99 : f32 to vector<2x128xf32>
    %319 = arith.addf %318, %317 : vector<2x128xf32>
    %320 = arith.divf %318, %319 : vector<2x128xf32>
    %321 = vector.extract_strided_slice %310 {offsets = [0, 128], sizes = [2, 128], strides = [1, 1]} : vector<2x384xf32> to vector<2x128xf32>
    %322 = vector.extract_strided_slice %312 {offsets = [0, 128], sizes = [2, 128], strides = [1, 1]} : vector<2x384xf32> to vector<2x128xf32>
    %323 = arith.addf %321, %322 : vector<2x128xf32>
    %324 = arith.negf %323 : vector<2x128xf32>
    %325 = math.exp %324 : vector<2x128xf32>
    %cst_100 = arith.constant 1.000000e+00 : f32
    %326 = vector.broadcast %cst_100 : f32 to vector<2x128xf32>
    %327 = arith.addf %326, %325 : vector<2x128xf32>
    %328 = arith.divf %326, %327 : vector<2x128xf32>
    %329 = vector.extract_strided_slice %310 {offsets = [0, 256], sizes = [2, 128], strides = [1, 1]} : vector<2x384xf32> to vector<2x128xf32>
    %330 = vector.extract_strided_slice %312 {offsets = [0, 256], sizes = [2, 128], strides = [1, 1]} : vector<2x384xf32> to vector<2x128xf32>
    %331 = arith.addf %330, %18 : vector<2x128xf32>
    %332 = arith.mulf %320, %331 : vector<2x128xf32>
    %333 = arith.addf %329, %332 : vector<2x128xf32>
    %334 = math.tanh %333 : vector<2x128xf32>
    %cst_101 = arith.constant 1.000000e+00 : f32
    %335 = vector.broadcast %cst_101 : f32 to vector<2x128xf32>
    %336 = arith.subf %335, %328 : vector<2x128xf32>
    %337 = arith.mulf %336, %334 : vector<2x128xf32>
    %338 = arith.mulf %328, %249 : vector<2x128xf32>
    %339 = arith.addf %337, %338 : vector<2x128xf32>
    %340 = arith.select %309, %339, %249 : vector<2x128xi1>, vector<2x128xf32>
    %cst_102 = arith.constant 0.000000e+00 : f32
    %341 = vector.broadcast %cst_102 : f32 to vector<2x128xf32>
    %342 = arith.select %309, %340, %341 : vector<2x128xi1>, vector<2x128xf32>
    %c1_103 = arith.constant 1 : index
    %343 = arith.index_cast %c3_i32 : i32 to index
    %c0_104 = arith.constant 0 : index
    %c0_105 = arith.constant 0 : index
    %344 = vector.load %arg1[%c1_103, %343, %c0_104, %c0_105] : memref<2x8x2x384xbf16, #tpu.memory_space<vmem>>, vector<1x1x2x384xbf16>
    %345 = vector.shape_cast %344 : vector<1x1x2x384xbf16> to vector<2x384xbf16>
    %346 = vector.broadcast %301 : i32 to vector<2x128xi32>
    %347 = arith.cmpi sge, %346, %12 : vector<2x128xi32>
    %348 = vector.broadcast %301 : i32 to vector<2x128xi32>
    %349 = arith.cmpi slt, %348, %14 : vector<2x128xi32>
    %350 = arith.andi %347, %349 : vector<2x128xi1>
    %351 = arith.extf %345 : vector<2x384xbf16> to vector<2x384xf32>
    %352 = arith.truncf %290 : vector<2x128xf32> to vector<2x128xbf16>
    %cst_106 = arith.constant dense<0.000000e+00> : vector<2x384xf32>
    %353 = tpu.matmul %352, %6, %cst_106 {dimension_numbers = #tpu.dot_dimension_numbers<[1], [0], [0], [1], [0, 0, 1, 1], [], []>} : vector<2x128xbf16>, vector<128x384xbf16>, vector<2x384xf32> -> vector<2x384xf32>
    %354 = vector.extract_strided_slice %351 {offsets = [0, 0], sizes = [2, 128], strides = [1, 1]} : vector<2x384xf32> to vector<2x128xf32>
    %355 = vector.extract_strided_slice %353 {offsets = [0, 0], sizes = [2, 128], strides = [1, 1]} : vector<2x384xf32> to vector<2x128xf32>
    %356 = arith.addf %354, %355 : vector<2x128xf32>
    %357 = arith.negf %356 : vector<2x128xf32>
    %358 = math.exp %357 : vector<2x128xf32>
    %cst_107 = arith.constant 1.000000e+00 : f32
    %359 = vector.broadcast %cst_107 : f32 to vector<2x128xf32>
    %360 = arith.addf %359, %358 : vector<2x128xf32>
    %361 = arith.divf %359, %360 : vector<2x128xf32>
    %362 = vector.extract_strided_slice %351 {offsets = [0, 128], sizes = [2, 128], strides = [1, 1]} : vector<2x384xf32> to vector<2x128xf32>
    %363 = vector.extract_strided_slice %353 {offsets = [0, 128], sizes = [2, 128], strides = [1, 1]} : vector<2x384xf32> to vector<2x128xf32>
    %364 = arith.addf %362, %363 : vector<2x128xf32>
    %365 = arith.negf %364 : vector<2x128xf32>
    %366 = math.exp %365 : vector<2x128xf32>
    %cst_108 = arith.constant 1.000000e+00 : f32
    %367 = vector.broadcast %cst_108 : f32 to vector<2x128xf32>
    %368 = arith.addf %367, %366 : vector<2x128xf32>
    %369 = arith.divf %367, %368 : vector<2x128xf32>
    %370 = vector.extract_strided_slice %351 {offsets = [0, 256], sizes = [2, 128], strides = [1, 1]} : vector<2x384xf32> to vector<2x128xf32>
    %371 = vector.extract_strided_slice %353 {offsets = [0, 256], sizes = [2, 128], strides = [1, 1]} : vector<2x384xf32> to vector<2x128xf32>
    %372 = arith.addf %371, %22 : vector<2x128xf32>
    %373 = arith.mulf %361, %372 : vector<2x128xf32>
    %374 = arith.addf %370, %373 : vector<2x128xf32>
    %375 = math.tanh %374 : vector<2x128xf32>
    %cst_109 = arith.constant 1.000000e+00 : f32
    %376 = vector.broadcast %cst_109 : f32 to vector<2x128xf32>
    %377 = arith.subf %376, %369 : vector<2x128xf32>
    %378 = arith.mulf %377, %375 : vector<2x128xf32>
    %379 = arith.mulf %369, %290 : vector<2x128xf32>
    %380 = arith.addf %378, %379 : vector<2x128xf32>
    %381 = arith.select %350, %380, %290 : vector<2x128xi1>, vector<2x128xf32>
    %cst_110 = arith.constant 0.000000e+00 : f32
    %382 = vector.broadcast %cst_110 : f32 to vector<2x128xf32>
    %383 = arith.select %350, %381, %382 : vector<2x128xi1>, vector<2x128xf32>
    %c0_111 = arith.constant 0 : index
    %384 = arith.index_cast %c3_i32 : i32 to index
    %c0_112 = arith.constant 0 : index
    %c0_113 = arith.constant 0 : index
    %385 = vector.load %arg6[%c0_111, %384, %c0_112, %c0_113] : memref<2x8x2x128xf32, #tpu.memory_space<vmem>>, vector<1x1x2x128xf32>
    %386 = vector.shape_cast %385 : vector<1x1x2x128xf32> to vector<2x128xf32>
    %387 = vector.shape_cast %342 : vector<2x128xf32> to vector<1x1x2x128xf32>
    tpu.vector_store %arg6[%c0_111, %384, %c0_112, %c0_113], %387 {strides = array<i32>} : memref<2x8x2x128xf32, #tpu.memory_space<vmem>>, vector<1x1x2x128xf32>,
    %c1_114 = arith.constant 1 : index
    %388 = arith.index_cast %c3_i32 : i32 to index
    %c0_115 = arith.constant 0 : index
    %c0_116 = arith.constant 0 : index
    %389 = vector.load %arg6[%c1_114, %388, %c0_115, %c0_116] : memref<2x8x2x128xf32, #tpu.memory_space<vmem>>, vector<1x1x2x128xf32>
    %390 = vector.shape_cast %389 : vector<1x1x2x128xf32> to vector<2x128xf32>
    %391 = vector.shape_cast %383 : vector<2x128xf32> to vector<1x1x2x128xf32>
    tpu.vector_store %arg6[%c1_114, %388, %c0_115, %c0_116], %391 {strides = array<i32>} : memref<2x8x2x128xf32, #tpu.memory_space<vmem>>, vector<1x1x2x128xf32>,
    %c4_i32 = arith.constant 4 : i32
    %392 = arith.addi %23, %c4_i32 : i32
    %c0_117 = arith.constant 0 : index
    %393 = arith.index_cast %c4_i32 : i32 to index
    %c0_118 = arith.constant 0 : index
    %c0_119 = arith.constant 0 : index
    %394 = vector.load %arg1[%c0_117, %393, %c0_118, %c0_119] : memref<2x8x2x384xbf16, #tpu.memory_space<vmem>>, vector<1x1x2x384xbf16>
    %395 = vector.shape_cast %394 : vector<1x1x2x384xbf16> to vector<2x384xbf16>
    %396 = vector.broadcast %392 : i32 to vector<2x128xi32>
    %397 = arith.cmpi sge, %396, %8 : vector<2x128xi32>
    %398 = vector.broadcast %392 : i32 to vector<2x128xi32>
    %399 = arith.cmpi slt, %398, %10 : vector<2x128xi32>
    %400 = arith.andi %397, %399 : vector<2x128xi1>
    %401 = arith.extf %395 : vector<2x384xbf16> to vector<2x384xf32>
    %402 = arith.truncf %340 : vector<2x128xf32> to vector<2x128xbf16>
    %cst_120 = arith.constant dense<0.000000e+00> : vector<2x384xf32>
    %403 = tpu.matmul %402, %4, %cst_120 {dimension_numbers = #tpu.dot_dimension_numbers<[1], [0], [0], [1], [0, 0, 1, 1], [], []>} : vector<2x128xbf16>, vector<128x384xbf16>, vector<2x384xf32> -> vector<2x384xf32>
    %404 = vector.extract_strided_slice %401 {offsets = [0, 0], sizes = [2, 128], strides = [1, 1]} : vector<2x384xf32> to vector<2x128xf32>
    %405 = vector.extract_strided_slice %403 {offsets = [0, 0], sizes = [2, 128], strides = [1, 1]} : vector<2x384xf32> to vector<2x128xf32>
    %406 = arith.addf %404, %405 : vector<2x128xf32>
    %407 = arith.negf %406 : vector<2x128xf32>
    %408 = math.exp %407 : vector<2x128xf32>
    %cst_121 = arith.constant 1.000000e+00 : f32
    %409 = vector.broadcast %cst_121 : f32 to vector<2x128xf32>
    %410 = arith.addf %409, %408 : vector<2x128xf32>
    %411 = arith.divf %409, %410 : vector<2x128xf32>
    %412 = vector.extract_strided_slice %401 {offsets = [0, 128], sizes = [2, 128], strides = [1, 1]} : vector<2x384xf32> to vector<2x128xf32>
    %413 = vector.extract_strided_slice %403 {offsets = [0, 128], sizes = [2, 128], strides = [1, 1]} : vector<2x384xf32> to vector<2x128xf32>
    %414 = arith.addf %412, %413 : vector<2x128xf32>
    %415 = arith.negf %414 : vector<2x128xf32>
    %416 = math.exp %415 : vector<2x128xf32>
    %cst_122 = arith.constant 1.000000e+00 : f32
    %417 = vector.broadcast %cst_122 : f32 to vector<2x128xf32>
    %418 = arith.addf %417, %416 : vector<2x128xf32>
    %419 = arith.divf %417, %418 : vector<2x128xf32>
    %420 = vector.extract_strided_slice %401 {offsets = [0, 256], sizes = [2, 128], strides = [1, 1]} : vector<2x384xf32> to vector<2x128xf32>
    %421 = vector.extract_strided_slice %403 {offsets = [0, 256], sizes = [2, 128], strides = [1, 1]} : vector<2x384xf32> to vector<2x128xf32>
    %422 = arith.addf %421, %18 : vector<2x128xf32>
    %423 = arith.mulf %411, %422 : vector<2x128xf32>
    %424 = arith.addf %420, %423 : vector<2x128xf32>
    %425 = math.tanh %424 : vector<2x128xf32>
    %cst_123 = arith.constant 1.000000e+00 : f32
    %426 = vector.broadcast %cst_123 : f32 to vector<2x128xf32>
    %427 = arith.subf %426, %419 : vector<2x128xf32>
    %428 = arith.mulf %427, %425 : vector<2x128xf32>
    %429 = arith.mulf %419, %340 : vector<2x128xf32>
    %430 = arith.addf %428, %429 : vector<2x128xf32>
    %431 = arith.select %400, %430, %340 : vector<2x128xi1>, vector<2x128xf32>
    %cst_124 = arith.constant 0.000000e+00 : f32
    %432 = vector.broadcast %cst_124 : f32 to vector<2x128xf32>
    %433 = arith.select %400, %431, %432 : vector<2x128xi1>, vector<2x128xf32>
    %c1_125 = arith.constant 1 : index
    %434 = arith.index_cast %c4_i32 : i32 to index
    %c0_126 = arith.constant 0 : index
    %c0_127 = arith.constant 0 : index
    %435 = vector.load %arg1[%c1_125, %434, %c0_126, %c0_127] : memref<2x8x2x384xbf16, #tpu.memory_space<vmem>>, vector<1x1x2x384xbf16>
    %436 = vector.shape_cast %435 : vector<1x1x2x384xbf16> to vector<2x384xbf16>
    %437 = vector.broadcast %392 : i32 to vector<2x128xi32>
    %438 = arith.cmpi sge, %437, %12 : vector<2x128xi32>
    %439 = vector.broadcast %392 : i32 to vector<2x128xi32>
    %440 = arith.cmpi slt, %439, %14 : vector<2x128xi32>
    %441 = arith.andi %438, %440 : vector<2x128xi1>
    %442 = arith.extf %436 : vector<2x384xbf16> to vector<2x384xf32>
    %443 = arith.truncf %381 : vector<2x128xf32> to vector<2x128xbf16>
    %cst_128 = arith.constant dense<0.000000e+00> : vector<2x384xf32>
    %444 = tpu.matmul %443, %6, %cst_128 {dimension_numbers = #tpu.dot_dimension_numbers<[1], [0], [0], [1], [0, 0, 1, 1], [], []>} : vector<2x128xbf16>, vector<128x384xbf16>, vector<2x384xf32> -> vector<2x384xf32>
    %445 = vector.extract_strided_slice %442 {offsets = [0, 0], sizes = [2, 128], strides = [1, 1]} : vector<2x384xf32> to vector<2x128xf32>
    %446 = vector.extract_strided_slice %444 {offsets = [0, 0], sizes = [2, 128], strides = [1, 1]} : vector<2x384xf32> to vector<2x128xf32>
    %447 = arith.addf %445, %446 : vector<2x128xf32>
    %448 = arith.negf %447 : vector<2x128xf32>
    %449 = math.exp %448 : vector<2x128xf32>
    %cst_129 = arith.constant 1.000000e+00 : f32
    %450 = vector.broadcast %cst_129 : f32 to vector<2x128xf32>
    %451 = arith.addf %450, %449 : vector<2x128xf32>
    %452 = arith.divf %450, %451 : vector<2x128xf32>
    %453 = vector.extract_strided_slice %442 {offsets = [0, 128], sizes = [2, 128], strides = [1, 1]} : vector<2x384xf32> to vector<2x128xf32>
    %454 = vector.extract_strided_slice %444 {offsets = [0, 128], sizes = [2, 128], strides = [1, 1]} : vector<2x384xf32> to vector<2x128xf32>
    %455 = arith.addf %453, %454 : vector<2x128xf32>
    %456 = arith.negf %455 : vector<2x128xf32>
    %457 = math.exp %456 : vector<2x128xf32>
    %cst_130 = arith.constant 1.000000e+00 : f32
    %458 = vector.broadcast %cst_130 : f32 to vector<2x128xf32>
    %459 = arith.addf %458, %457 : vector<2x128xf32>
    %460 = arith.divf %458, %459 : vector<2x128xf32>
    %461 = vector.extract_strided_slice %442 {offsets = [0, 256], sizes = [2, 128], strides = [1, 1]} : vector<2x384xf32> to vector<2x128xf32>
    %462 = vector.extract_strided_slice %444 {offsets = [0, 256], sizes = [2, 128], strides = [1, 1]} : vector<2x384xf32> to vector<2x128xf32>
    %463 = arith.addf %462, %22 : vector<2x128xf32>
    %464 = arith.mulf %452, %463 : vector<2x128xf32>
    %465 = arith.addf %461, %464 : vector<2x128xf32>
    %466 = math.tanh %465 : vector<2x128xf32>
    %cst_131 = arith.constant 1.000000e+00 : f32
    %467 = vector.broadcast %cst_131 : f32 to vector<2x128xf32>
    %468 = arith.subf %467, %460 : vector<2x128xf32>
    %469 = arith.mulf %468, %466 : vector<2x128xf32>
    %470 = arith.mulf %460, %381 : vector<2x128xf32>
    %471 = arith.addf %469, %470 : vector<2x128xf32>
    %472 = arith.select %441, %471, %381 : vector<2x128xi1>, vector<2x128xf32>
    %cst_132 = arith.constant 0.000000e+00 : f32
    %473 = vector.broadcast %cst_132 : f32 to vector<2x128xf32>
    %474 = arith.select %441, %472, %473 : vector<2x128xi1>, vector<2x128xf32>
    %c0_133 = arith.constant 0 : index
    %475 = arith.index_cast %c4_i32 : i32 to index
    %c0_134 = arith.constant 0 : index
    %c0_135 = arith.constant 0 : index
    %476 = vector.load %arg6[%c0_133, %475, %c0_134, %c0_135] : memref<2x8x2x128xf32, #tpu.memory_space<vmem>>, vector<1x1x2x128xf32>
    %477 = vector.shape_cast %476 : vector<1x1x2x128xf32> to vector<2x128xf32>
    %478 = vector.shape_cast %433 : vector<2x128xf32> to vector<1x1x2x128xf32>
    tpu.vector_store %arg6[%c0_133, %475, %c0_134, %c0_135], %478 {strides = array<i32>} : memref<2x8x2x128xf32, #tpu.memory_space<vmem>>, vector<1x1x2x128xf32>,
    %c1_136 = arith.constant 1 : index
    %479 = arith.index_cast %c4_i32 : i32 to index
    %c0_137 = arith.constant 0 : index
    %c0_138 = arith.constant 0 : index
    %480 = vector.load %arg6[%c1_136, %479, %c0_137, %c0_138] : memref<2x8x2x128xf32, #tpu.memory_space<vmem>>, vector<1x1x2x128xf32>
    %481 = vector.shape_cast %480 : vector<1x1x2x128xf32> to vector<2x128xf32>
    %482 = vector.shape_cast %474 : vector<2x128xf32> to vector<1x1x2x128xf32>
    tpu.vector_store %arg6[%c1_136, %479, %c0_137, %c0_138], %482 {strides = array<i32>} : memref<2x8x2x128xf32, #tpu.memory_space<vmem>>, vector<1x1x2x128xf32>,
    %c5_i32 = arith.constant 5 : i32
    %483 = arith.addi %23, %c5_i32 : i32
    %c0_139 = arith.constant 0 : index
    %484 = arith.index_cast %c5_i32 : i32 to index
    %c0_140 = arith.constant 0 : index
    %c0_141 = arith.constant 0 : index
    %485 = vector.load %arg1[%c0_139, %484, %c0_140, %c0_141] : memref<2x8x2x384xbf16, #tpu.memory_space<vmem>>, vector<1x1x2x384xbf16>
    %486 = vector.shape_cast %485 : vector<1x1x2x384xbf16> to vector<2x384xbf16>
    %487 = vector.broadcast %483 : i32 to vector<2x128xi32>
    %488 = arith.cmpi sge, %487, %8 : vector<2x128xi32>
    %489 = vector.broadcast %483 : i32 to vector<2x128xi32>
    %490 = arith.cmpi slt, %489, %10 : vector<2x128xi32>
    %491 = arith.andi %488, %490 : vector<2x128xi1>
    %492 = arith.extf %486 : vector<2x384xbf16> to vector<2x384xf32>
    %493 = arith.truncf %431 : vector<2x128xf32> to vector<2x128xbf16>
    %cst_142 = arith.constant dense<0.000000e+00> : vector<2x384xf32>
    %494 = tpu.matmul %493, %4, %cst_142 {dimension_numbers = #tpu.dot_dimension_numbers<[1], [0], [0], [1], [0, 0, 1, 1], [], []>} : vector<2x128xbf16>, vector<128x384xbf16>, vector<2x384xf32> -> vector<2x384xf32>
    %495 = vector.extract_strided_slice %492 {offsets = [0, 0], sizes = [2, 128], strides = [1, 1]} : vector<2x384xf32> to vector<2x128xf32>
    %496 = vector.extract_strided_slice %494 {offsets = [0, 0], sizes = [2, 128], strides = [1, 1]} : vector<2x384xf32> to vector<2x128xf32>
    %497 = arith.addf %495, %496 : vector<2x128xf32>
    %498 = arith.negf %497 : vector<2x128xf32>
    %499 = math.exp %498 : vector<2x128xf32>
    %cst_143 = arith.constant 1.000000e+00 : f32
    %500 = vector.broadcast %cst_143 : f32 to vector<2x128xf32>
    %501 = arith.addf %500, %499 : vector<2x128xf32>
    %502 = arith.divf %500, %501 : vector<2x128xf32>
    %503 = vector.extract_strided_slice %492 {offsets = [0, 128], sizes = [2, 128], strides = [1, 1]} : vector<2x384xf32> to vector<2x128xf32>
    %504 = vector.extract_strided_slice %494 {offsets = [0, 128], sizes = [2, 128], strides = [1, 1]} : vector<2x384xf32> to vector<2x128xf32>
    %505 = arith.addf %503, %504 : vector<2x128xf32>
    %506 = arith.negf %505 : vector<2x128xf32>
    %507 = math.exp %506 : vector<2x128xf32>
    %cst_144 = arith.constant 1.000000e+00 : f32
    %508 = vector.broadcast %cst_144 : f32 to vector<2x128xf32>
    %509 = arith.addf %508, %507 : vector<2x128xf32>
    %510 = arith.divf %508, %509 : vector<2x128xf32>
    %511 = vector.extract_strided_slice %492 {offsets = [0, 256], sizes = [2, 128], strides = [1, 1]} : vector<2x384xf32> to vector<2x128xf32>
    %512 = vector.extract_strided_slice %494 {offsets = [0, 256], sizes = [2, 128], strides = [1, 1]} : vector<2x384xf32> to vector<2x128xf32>
    %513 = arith.addf %512, %18 : vector<2x128xf32>
    %514 = arith.mulf %502, %513 : vector<2x128xf32>
    %515 = arith.addf %511, %514 : vector<2x128xf32>
    %516 = math.tanh %515 : vector<2x128xf32>
    %cst_145 = arith.constant 1.000000e+00 : f32
    %517 = vector.broadcast %cst_145 : f32 to vector<2x128xf32>
    %518 = arith.subf %517, %510 : vector<2x128xf32>
    %519 = arith.mulf %518, %516 : vector<2x128xf32>
    %520 = arith.mulf %510, %431 : vector<2x128xf32>
    %521 = arith.addf %519, %520 : vector<2x128xf32>
    %522 = arith.select %491, %521, %431 : vector<2x128xi1>, vector<2x128xf32>
    %cst_146 = arith.constant 0.000000e+00 : f32
    %523 = vector.broadcast %cst_146 : f32 to vector<2x128xf32>
    %524 = arith.select %491, %522, %523 : vector<2x128xi1>, vector<2x128xf32>
    %c1_147 = arith.constant 1 : index
    %525 = arith.index_cast %c5_i32 : i32 to index
    %c0_148 = arith.constant 0 : index
    %c0_149 = arith.constant 0 : index
    %526 = vector.load %arg1[%c1_147, %525, %c0_148, %c0_149] : memref<2x8x2x384xbf16, #tpu.memory_space<vmem>>, vector<1x1x2x384xbf16>
    %527 = vector.shape_cast %526 : vector<1x1x2x384xbf16> to vector<2x384xbf16>
    %528 = vector.broadcast %483 : i32 to vector<2x128xi32>
    %529 = arith.cmpi sge, %528, %12 : vector<2x128xi32>
    %530 = vector.broadcast %483 : i32 to vector<2x128xi32>
    %531 = arith.cmpi slt, %530, %14 : vector<2x128xi32>
    %532 = arith.andi %529, %531 : vector<2x128xi1>
    %533 = arith.extf %527 : vector<2x384xbf16> to vector<2x384xf32>
    %534 = arith.truncf %472 : vector<2x128xf32> to vector<2x128xbf16>
    %cst_150 = arith.constant dense<0.000000e+00> : vector<2x384xf32>
    %535 = tpu.matmul %534, %6, %cst_150 {dimension_numbers = #tpu.dot_dimension_numbers<[1], [0], [0], [1], [0, 0, 1, 1], [], []>} : vector<2x128xbf16>, vector<128x384xbf16>, vector<2x384xf32> -> vector<2x384xf32>
    %536 = vector.extract_strided_slice %533 {offsets = [0, 0], sizes = [2, 128], strides = [1, 1]} : vector<2x384xf32> to vector<2x128xf32>
    %537 = vector.extract_strided_slice %535 {offsets = [0, 0], sizes = [2, 128], strides = [1, 1]} : vector<2x384xf32> to vector<2x128xf32>
    %538 = arith.addf %536, %537 : vector<2x128xf32>
    %539 = arith.negf %538 : vector<2x128xf32>
    %540 = math.exp %539 : vector<2x128xf32>
    %cst_151 = arith.constant 1.000000e+00 : f32
    %541 = vector.broadcast %cst_151 : f32 to vector<2x128xf32>
    %542 = arith.addf %541, %540 : vector<2x128xf32>
    %543 = arith.divf %541, %542 : vector<2x128xf32>
    %544 = vector.extract_strided_slice %533 {offsets = [0, 128], sizes = [2, 128], strides = [1, 1]} : vector<2x384xf32> to vector<2x128xf32>
    %545 = vector.extract_strided_slice %535 {offsets = [0, 128], sizes = [2, 128], strides = [1, 1]} : vector<2x384xf32> to vector<2x128xf32>
    %546 = arith.addf %544, %545 : vector<2x128xf32>
    %547 = arith.negf %546 : vector<2x128xf32>
    %548 = math.exp %547 : vector<2x128xf32>
    %cst_152 = arith.constant 1.000000e+00 : f32
    %549 = vector.broadcast %cst_152 : f32 to vector<2x128xf32>
    %550 = arith.addf %549, %548 : vector<2x128xf32>
    %551 = arith.divf %549, %550 : vector<2x128xf32>
    %552 = vector.extract_strided_slice %533 {offsets = [0, 256], sizes = [2, 128], strides = [1, 1]} : vector<2x384xf32> to vector<2x128xf32>
    %553 = vector.extract_strided_slice %535 {offsets = [0, 256], sizes = [2, 128], strides = [1, 1]} : vector<2x384xf32> to vector<2x128xf32>
    %554 = arith.addf %553, %22 : vector<2x128xf32>
    %555 = arith.mulf %543, %554 : vector<2x128xf32>
    %556 = arith.addf %552, %555 : vector<2x128xf32>
    %557 = math.tanh %556 : vector<2x128xf32>
    %cst_153 = arith.constant 1.000000e+00 : f32
    %558 = vector.broadcast %cst_153 : f32 to vector<2x128xf32>
    %559 = arith.subf %558, %551 : vector<2x128xf32>
    %560 = arith.mulf %559, %557 : vector<2x128xf32>
    %561 = arith.mulf %551, %472 : vector<2x128xf32>
    %562 = arith.addf %560, %561 : vector<2x128xf32>
    %563 = arith.select %532, %562, %472 : vector<2x128xi1>, vector<2x128xf32>
    %cst_154 = arith.constant 0.000000e+00 : f32
    %564 = vector.broadcast %cst_154 : f32 to vector<2x128xf32>
    %565 = arith.select %532, %563, %564 : vector<2x128xi1>, vector<2x128xf32>
    %c0_155 = arith.constant 0 : index
    %566 = arith.index_cast %c5_i32 : i32 to index
    %c0_156 = arith.constant 0 : index
    %c0_157 = arith.constant 0 : index
    %567 = vector.load %arg6[%c0_155, %566, %c0_156, %c0_157] : memref<2x8x2x128xf32, #tpu.memory_space<vmem>>, vector<1x1x2x128xf32>
    %568 = vector.shape_cast %567 : vector<1x1x2x128xf32> to vector<2x128xf32>
    %569 = vector.shape_cast %524 : vector<2x128xf32> to vector<1x1x2x128xf32>
    tpu.vector_store %arg6[%c0_155, %566, %c0_156, %c0_157], %569 {strides = array<i32>} : memref<2x8x2x128xf32, #tpu.memory_space<vmem>>, vector<1x1x2x128xf32>,
    %c1_158 = arith.constant 1 : index
    %570 = arith.index_cast %c5_i32 : i32 to index
    %c0_159 = arith.constant 0 : index
    %c0_160 = arith.constant 0 : index
    %571 = vector.load %arg6[%c1_158, %570, %c0_159, %c0_160] : memref<2x8x2x128xf32, #tpu.memory_space<vmem>>, vector<1x1x2x128xf32>
    %572 = vector.shape_cast %571 : vector<1x1x2x128xf32> to vector<2x128xf32>
    %573 = vector.shape_cast %565 : vector<2x128xf32> to vector<1x1x2x128xf32>
    tpu.vector_store %arg6[%c1_158, %570, %c0_159, %c0_160], %573 {strides = array<i32>} : memref<2x8x2x128xf32, #tpu.memory_space<vmem>>, vector<1x1x2x128xf32>,
    %c6_i32 = arith.constant 6 : i32
    %574 = arith.addi %23, %c6_i32 : i32
    %c0_161 = arith.constant 0 : index
    %575 = arith.index_cast %c6_i32 : i32 to index
    %c0_162 = arith.constant 0 : index
    %c0_163 = arith.constant 0 : index
    %576 = vector.load %arg1[%c0_161, %575, %c0_162, %c0_163] : memref<2x8x2x384xbf16, #tpu.memory_space<vmem>>, vector<1x1x2x384xbf16>
    %577 = vector.shape_cast %576 : vector<1x1x2x384xbf16> to vector<2x384xbf16>
    %578 = vector.broadcast %574 : i32 to vector<2x128xi32>
    %579 = arith.cmpi sge, %578, %8 : vector<2x128xi32>
    %580 = vector.broadcast %574 : i32 to vector<2x128xi32>
    %581 = arith.cmpi slt, %580, %10 : vector<2x128xi32>
    %582 = arith.andi %579, %581 : vector<2x128xi1>
    %583 = arith.extf %577 : vector<2x384xbf16> to vector<2x384xf32>
    %584 = arith.truncf %522 : vector<2x128xf32> to vector<2x128xbf16>
    %cst_164 = arith.constant dense<0.000000e+00> : vector<2x384xf32>
    %585 = tpu.matmul %584, %4, %cst_164 {dimension_numbers = #tpu.dot_dimension_numbers<[1], [0], [0], [1], [0, 0, 1, 1], [], []>} : vector<2x128xbf16>, vector<128x384xbf16>, vector<2x384xf32> -> vector<2x384xf32>
    %586 = vector.extract_strided_slice %583 {offsets = [0, 0], sizes = [2, 128], strides = [1, 1]} : vector<2x384xf32> to vector<2x128xf32>
    %587 = vector.extract_strided_slice %585 {offsets = [0, 0], sizes = [2, 128], strides = [1, 1]} : vector<2x384xf32> to vector<2x128xf32>
    %588 = arith.addf %586, %587 : vector<2x128xf32>
    %589 = arith.negf %588 : vector<2x128xf32>
    %590 = math.exp %589 : vector<2x128xf32>
    %cst_165 = arith.constant 1.000000e+00 : f32
    %591 = vector.broadcast %cst_165 : f32 to vector<2x128xf32>
    %592 = arith.addf %591, %590 : vector<2x128xf32>
    %593 = arith.divf %591, %592 : vector<2x128xf32>
    %594 = vector.extract_strided_slice %583 {offsets = [0, 128], sizes = [2, 128], strides = [1, 1]} : vector<2x384xf32> to vector<2x128xf32>
    %595 = vector.extract_strided_slice %585 {offsets = [0, 128], sizes = [2, 128], strides = [1, 1]} : vector<2x384xf32> to vector<2x128xf32>
    %596 = arith.addf %594, %595 : vector<2x128xf32>
    %597 = arith.negf %596 : vector<2x128xf32>
    %598 = math.exp %597 : vector<2x128xf32>
    %cst_166 = arith.constant 1.000000e+00 : f32
    %599 = vector.broadcast %cst_166 : f32 to vector<2x128xf32>
    %600 = arith.addf %599, %598 : vector<2x128xf32>
    %601 = arith.divf %599, %600 : vector<2x128xf32>
    %602 = vector.extract_strided_slice %583 {offsets = [0, 256], sizes = [2, 128], strides = [1, 1]} : vector<2x384xf32> to vector<2x128xf32>
    %603 = vector.extract_strided_slice %585 {offsets = [0, 256], sizes = [2, 128], strides = [1, 1]} : vector<2x384xf32> to vector<2x128xf32>
    %604 = arith.addf %603, %18 : vector<2x128xf32>
    %605 = arith.mulf %593, %604 : vector<2x128xf32>
    %606 = arith.addf %602, %605 : vector<2x128xf32>
    %607 = math.tanh %606 : vector<2x128xf32>
    %cst_167 = arith.constant 1.000000e+00 : f32
    %608 = vector.broadcast %cst_167 : f32 to vector<2x128xf32>
    %609 = arith.subf %608, %601 : vector<2x128xf32>
    %610 = arith.mulf %609, %607 : vector<2x128xf32>
    %611 = arith.mulf %601, %522 : vector<2x128xf32>
    %612 = arith.addf %610, %611 : vector<2x128xf32>
    %613 = arith.select %582, %612, %522 : vector<2x128xi1>, vector<2x128xf32>
    %cst_168 = arith.constant 0.000000e+00 : f32
    %614 = vector.broadcast %cst_168 : f32 to vector<2x128xf32>
    %615 = arith.select %582, %613, %614 : vector<2x128xi1>, vector<2x128xf32>
    %c1_169 = arith.constant 1 : index
    %616 = arith.index_cast %c6_i32 : i32 to index
    %c0_170 = arith.constant 0 : index
    %c0_171 = arith.constant 0 : index
    %617 = vector.load %arg1[%c1_169, %616, %c0_170, %c0_171] : memref<2x8x2x384xbf16, #tpu.memory_space<vmem>>, vector<1x1x2x384xbf16>
    %618 = vector.shape_cast %617 : vector<1x1x2x384xbf16> to vector<2x384xbf16>
    %619 = vector.broadcast %574 : i32 to vector<2x128xi32>
    %620 = arith.cmpi sge, %619, %12 : vector<2x128xi32>
    %621 = vector.broadcast %574 : i32 to vector<2x128xi32>
    %622 = arith.cmpi slt, %621, %14 : vector<2x128xi32>
    %623 = arith.andi %620, %622 : vector<2x128xi1>
    %624 = arith.extf %618 : vector<2x384xbf16> to vector<2x384xf32>
    %625 = arith.truncf %563 : vector<2x128xf32> to vector<2x128xbf16>
    %cst_172 = arith.constant dense<0.000000e+00> : vector<2x384xf32>
    %626 = tpu.matmul %625, %6, %cst_172 {dimension_numbers = #tpu.dot_dimension_numbers<[1], [0], [0], [1], [0, 0, 1, 1], [], []>} : vector<2x128xbf16>, vector<128x384xbf16>, vector<2x384xf32> -> vector<2x384xf32>
    %627 = vector.extract_strided_slice %624 {offsets = [0, 0], sizes = [2, 128], strides = [1, 1]} : vector<2x384xf32> to vector<2x128xf32>
    %628 = vector.extract_strided_slice %626 {offsets = [0, 0], sizes = [2, 128], strides = [1, 1]} : vector<2x384xf32> to vector<2x128xf32>
    %629 = arith.addf %627, %628 : vector<2x128xf32>
    %630 = arith.negf %629 : vector<2x128xf32>
    %631 = math.exp %630 : vector<2x128xf32>
    %cst_173 = arith.constant 1.000000e+00 : f32
    %632 = vector.broadcast %cst_173 : f32 to vector<2x128xf32>
    %633 = arith.addf %632, %631 : vector<2x128xf32>
    %634 = arith.divf %632, %633 : vector<2x128xf32>
    %635 = vector.extract_strided_slice %624 {offsets = [0, 128], sizes = [2, 128], strides = [1, 1]} : vector<2x384xf32> to vector<2x128xf32>
    %636 = vector.extract_strided_slice %626 {offsets = [0, 128], sizes = [2, 128], strides = [1, 1]} : vector<2x384xf32> to vector<2x128xf32>
    %637 = arith.addf %635, %636 : vector<2x128xf32>
    %638 = arith.negf %637 : vector<2x128xf32>
    %639 = math.exp %638 : vector<2x128xf32>
    %cst_174 = arith.constant 1.000000e+00 : f32
    %640 = vector.broadcast %cst_174 : f32 to vector<2x128xf32>
    %641 = arith.addf %640, %639 : vector<2x128xf32>
    %642 = arith.divf %640, %641 : vector<2x128xf32>
    %643 = vector.extract_strided_slice %624 {offsets = [0, 256], sizes = [2, 128], strides = [1, 1]} : vector<2x384xf32> to vector<2x128xf32>
    %644 = vector.extract_strided_slice %626 {offsets = [0, 256], sizes = [2, 128], strides = [1, 1]} : vector<2x384xf32> to vector<2x128xf32>
    %645 = arith.addf %644, %22 : vector<2x128xf32>
    %646 = arith.mulf %634, %645 : vector<2x128xf32>
    %647 = arith.addf %643, %646 : vector<2x128xf32>
    %648 = math.tanh %647 : vector<2x128xf32>
    %cst_175 = arith.constant 1.000000e+00 : f32
    %649 = vector.broadcast %cst_175 : f32 to vector<2x128xf32>
    %650 = arith.subf %649, %642 : vector<2x128xf32>
    %651 = arith.mulf %650, %648 : vector<2x128xf32>
    %652 = arith.mulf %642, %563 : vector<2x128xf32>
    %653 = arith.addf %651, %652 : vector<2x128xf32>
    %654 = arith.select %623, %653, %563 : vector<2x128xi1>, vector<2x128xf32>
    %cst_176 = arith.constant 0.000000e+00 : f32
    %655 = vector.broadcast %cst_176 : f32 to vector<2x128xf32>
    %656 = arith.select %623, %654, %655 : vector<2x128xi1>, vector<2x128xf32>
    %c0_177 = arith.constant 0 : index
    %657 = arith.index_cast %c6_i32 : i32 to index
    %c0_178 = arith.constant 0 : index
    %c0_179 = arith.constant 0 : index
    %658 = vector.load %arg6[%c0_177, %657, %c0_178, %c0_179] : memref<2x8x2x128xf32, #tpu.memory_space<vmem>>, vector<1x1x2x128xf32>
    %659 = vector.shape_cast %658 : vector<1x1x2x128xf32> to vector<2x128xf32>
    %660 = vector.shape_cast %615 : vector<2x128xf32> to vector<1x1x2x128xf32>
    tpu.vector_store %arg6[%c0_177, %657, %c0_178, %c0_179], %660 {strides = array<i32>} : memref<2x8x2x128xf32, #tpu.memory_space<vmem>>, vector<1x1x2x128xf32>,
    %c1_180 = arith.constant 1 : index
    %661 = arith.index_cast %c6_i32 : i32 to index
    %c0_181 = arith.constant 0 : index
    %c0_182 = arith.constant 0 : index
    %662 = vector.load %arg6[%c1_180, %661, %c0_181, %c0_182] : memref<2x8x2x128xf32, #tpu.memory_space<vmem>>, vector<1x1x2x128xf32>
    %663 = vector.shape_cast %662 : vector<1x1x2x128xf32> to vector<2x128xf32>
    %664 = vector.shape_cast %656 : vector<2x128xf32> to vector<1x1x2x128xf32>
    tpu.vector_store %arg6[%c1_180, %661, %c0_181, %c0_182], %664 {strides = array<i32>} : memref<2x8x2x128xf32, #tpu.memory_space<vmem>>, vector<1x1x2x128xf32>,
    %c7_i32 = arith.constant 7 : i32
    %665 = arith.addi %23, %c7_i32 : i32
    %c0_183 = arith.constant 0 : index
    %666 = arith.index_cast %c7_i32 : i32 to index
    %c0_184 = arith.constant 0 : index
    %c0_185 = arith.constant 0 : index
    %667 = vector.load %arg1[%c0_183, %666, %c0_184, %c0_185] : memref<2x8x2x384xbf16, #tpu.memory_space<vmem>>, vector<1x1x2x384xbf16>
    %668 = vector.shape_cast %667 : vector<1x1x2x384xbf16> to vector<2x384xbf16>
    %669 = vector.broadcast %665 : i32 to vector<2x128xi32>
    %670 = arith.cmpi sge, %669, %8 : vector<2x128xi32>
    %671 = vector.broadcast %665 : i32 to vector<2x128xi32>
    %672 = arith.cmpi slt, %671, %10 : vector<2x128xi32>
    %673 = arith.andi %670, %672 : vector<2x128xi1>
    %674 = arith.extf %668 : vector<2x384xbf16> to vector<2x384xf32>
    %675 = arith.truncf %613 : vector<2x128xf32> to vector<2x128xbf16>
    %cst_186 = arith.constant dense<0.000000e+00> : vector<2x384xf32>
    %676 = tpu.matmul %675, %4, %cst_186 {dimension_numbers = #tpu.dot_dimension_numbers<[1], [0], [0], [1], [0, 0, 1, 1], [], []>} : vector<2x128xbf16>, vector<128x384xbf16>, vector<2x384xf32> -> vector<2x384xf32>
    %677 = vector.extract_strided_slice %674 {offsets = [0, 0], sizes = [2, 128], strides = [1, 1]} : vector<2x384xf32> to vector<2x128xf32>
    %678 = vector.extract_strided_slice %676 {offsets = [0, 0], sizes = [2, 128], strides = [1, 1]} : vector<2x384xf32> to vector<2x128xf32>
    %679 = arith.addf %677, %678 : vector<2x128xf32>
    %680 = arith.negf %679 : vector<2x128xf32>
    %681 = math.exp %680 : vector<2x128xf32>
    %cst_187 = arith.constant 1.000000e+00 : f32
    %682 = vector.broadcast %cst_187 : f32 to vector<2x128xf32>
    %683 = arith.addf %682, %681 : vector<2x128xf32>
    %684 = arith.divf %682, %683 : vector<2x128xf32>
    %685 = vector.extract_strided_slice %674 {offsets = [0, 128], sizes = [2, 128], strides = [1, 1]} : vector<2x384xf32> to vector<2x128xf32>
    %686 = vector.extract_strided_slice %676 {offsets = [0, 128], sizes = [2, 128], strides = [1, 1]} : vector<2x384xf32> to vector<2x128xf32>
    %687 = arith.addf %685, %686 : vector<2x128xf32>
    %688 = arith.negf %687 : vector<2x128xf32>
    %689 = math.exp %688 : vector<2x128xf32>
    %cst_188 = arith.constant 1.000000e+00 : f32
    %690 = vector.broadcast %cst_188 : f32 to vector<2x128xf32>
    %691 = arith.addf %690, %689 : vector<2x128xf32>
    %692 = arith.divf %690, %691 : vector<2x128xf32>
    %693 = vector.extract_strided_slice %674 {offsets = [0, 256], sizes = [2, 128], strides = [1, 1]} : vector<2x384xf32> to vector<2x128xf32>
    %694 = vector.extract_strided_slice %676 {offsets = [0, 256], sizes = [2, 128], strides = [1, 1]} : vector<2x384xf32> to vector<2x128xf32>
    %695 = arith.addf %694, %18 : vector<2x128xf32>
    %696 = arith.mulf %684, %695 : vector<2x128xf32>
    %697 = arith.addf %693, %696 : vector<2x128xf32>
    %698 = math.tanh %697 : vector<2x128xf32>
    %cst_189 = arith.constant 1.000000e+00 : f32
    %699 = vector.broadcast %cst_189 : f32 to vector<2x128xf32>
    %700 = arith.subf %699, %692 : vector<2x128xf32>
    %701 = arith.mulf %700, %698 : vector<2x128xf32>
    %702 = arith.mulf %692, %613 : vector<2x128xf32>
    %703 = arith.addf %701, %702 : vector<2x128xf32>
    %704 = arith.select %673, %703, %613 : vector<2x128xi1>, vector<2x128xf32>
    %cst_190 = arith.constant 0.000000e+00 : f32
    %705 = vector.broadcast %cst_190 : f32 to vector<2x128xf32>
    %706 = arith.select %673, %704, %705 : vector<2x128xi1>, vector<2x128xf32>
    %c1_191 = arith.constant 1 : index
    %707 = arith.index_cast %c7_i32 : i32 to index
    %c0_192 = arith.constant 0 : index
    %c0_193 = arith.constant 0 : index
    %708 = vector.load %arg1[%c1_191, %707, %c0_192, %c0_193] : memref<2x8x2x384xbf16, #tpu.memory_space<vmem>>, vector<1x1x2x384xbf16>
    %709 = vector.shape_cast %708 : vector<1x1x2x384xbf16> to vector<2x384xbf16>
    %710 = vector.broadcast %665 : i32 to vector<2x128xi32>
    %711 = arith.cmpi sge, %710, %12 : vector<2x128xi32>
    %712 = vector.broadcast %665 : i32 to vector<2x128xi32>
    %713 = arith.cmpi slt, %712, %14 : vector<2x128xi32>
    %714 = arith.andi %711, %713 : vector<2x128xi1>
    %715 = arith.extf %709 : vector<2x384xbf16> to vector<2x384xf32>
    %716 = arith.truncf %654 : vector<2x128xf32> to vector<2x128xbf16>
    %cst_194 = arith.constant dense<0.000000e+00> : vector<2x384xf32>
    %717 = tpu.matmul %716, %6, %cst_194 {dimension_numbers = #tpu.dot_dimension_numbers<[1], [0], [0], [1], [0, 0, 1, 1], [], []>} : vector<2x128xbf16>, vector<128x384xbf16>, vector<2x384xf32> -> vector<2x384xf32>
    %718 = vector.extract_strided_slice %715 {offsets = [0, 0], sizes = [2, 128], strides = [1, 1]} : vector<2x384xf32> to vector<2x128xf32>
    %719 = vector.extract_strided_slice %717 {offsets = [0, 0], sizes = [2, 128], strides = [1, 1]} : vector<2x384xf32> to vector<2x128xf32>
    %720 = arith.addf %718, %719 : vector<2x128xf32>
    %721 = arith.negf %720 : vector<2x128xf32>
    %722 = math.exp %721 : vector<2x128xf32>
    %cst_195 = arith.constant 1.000000e+00 : f32
    %723 = vector.broadcast %cst_195 : f32 to vector<2x128xf32>
    %724 = arith.addf %723, %722 : vector<2x128xf32>
    %725 = arith.divf %723, %724 : vector<2x128xf32>
    %726 = vector.extract_strided_slice %715 {offsets = [0, 128], sizes = [2, 128], strides = [1, 1]} : vector<2x384xf32> to vector<2x128xf32>
    %727 = vector.extract_strided_slice %717 {offsets = [0, 128], sizes = [2, 128], strides = [1, 1]} : vector<2x384xf32> to vector<2x128xf32>
    %728 = arith.addf %726, %727 : vector<2x128xf32>
    %729 = arith.negf %728 : vector<2x128xf32>
    %730 = math.exp %729 : vector<2x128xf32>
    %cst_196 = arith.constant 1.000000e+00 : f32
    %731 = vector.broadcast %cst_196 : f32 to vector<2x128xf32>
    %732 = arith.addf %731, %730 : vector<2x128xf32>
    %733 = arith.divf %731, %732 : vector<2x128xf32>
    %734 = vector.extract_strided_slice %715 {offsets = [0, 256], sizes = [2, 128], strides = [1, 1]} : vector<2x384xf32> to vector<2x128xf32>
    %735 = vector.extract_strided_slice %717 {offsets = [0, 256], sizes = [2, 128], strides = [1, 1]} : vector<2x384xf32> to vector<2x128xf32>
    %736 = arith.addf %735, %22 : vector<2x128xf32>
    %737 = arith.mulf %725, %736 : vector<2x128xf32>
    %738 = arith.addf %734, %737 : vector<2x128xf32>
    %739 = math.tanh %738 : vector<2x128xf32>
    %cst_197 = arith.constant 1.000000e+00 : f32
    %740 = vector.broadcast %cst_197 : f32 to vector<2x128xf32>
    %741 = arith.subf %740, %733 : vector<2x128xf32>
    %742 = arith.mulf %741, %739 : vector<2x128xf32>
    %743 = arith.mulf %733, %654 : vector<2x128xf32>
    %744 = arith.addf %742, %743 : vector<2x128xf32>
    %745 = arith.select %714, %744, %654 : vector<2x128xi1>, vector<2x128xf32>
    %cst_198 = arith.constant 0.000000e+00 : f32
    %746 = vector.broadcast %cst_198 : f32 to vector<2x128xf32>
    %747 = arith.select %714, %745, %746 : vector<2x128xi1>, vector<2x128xf32>
    %c0_199 = arith.constant 0 : index
    %748 = arith.index_cast %c7_i32 : i32 to index
    %c0_200 = arith.constant 0 : index
    %c0_201 = arith.constant 0 : index
    %749 = vector.load %arg6[%c0_199, %748, %c0_200, %c0_201] : memref<2x8x2x128xf32, #tpu.memory_space<vmem>>, vector<1x1x2x128xf32>
    %750 = vector.shape_cast %749 : vector<1x1x2x128xf32> to vector<2x128xf32>
    %751 = vector.shape_cast %706 : vector<2x128xf32> to vector<1x1x2x128xf32>
    tpu.vector_store %arg6[%c0_199, %748, %c0_200, %c0_201], %751 {strides = array<i32>} : memref<2x8x2x128xf32, #tpu.memory_space<vmem>>, vector<1x1x2x128xf32>,
    %c1_202 = arith.constant 1 : index
    %752 = arith.index_cast %c7_i32 : i32 to index
    %c0_203 = arith.constant 0 : index
    %c0_204 = arith.constant 0 : index
    %753 = vector.load %arg6[%c1_202, %752, %c0_203, %c0_204] : memref<2x8x2x128xf32, #tpu.memory_space<vmem>>, vector<1x1x2x128xf32>
    %754 = vector.shape_cast %753 : vector<1x1x2x128xf32> to vector<2x128xf32>
    %755 = vector.shape_cast %747 : vector<2x128xf32> to vector<1x1x2x128xf32>
    tpu.vector_store %arg6[%c1_202, %752, %c0_203, %c0_204], %755 {strides = array<i32>} : memref<2x8x2x128xf32, #tpu.memory_space<vmem>>, vector<1x1x2x128xf32>,
    %c8_i32_205 = arith.constant 8 : i32
    %c0_206 = arith.constant 0 : index
    %c0_207 = arith.constant 0 : index
    %c0_208 = arith.constant 0 : index
    %756 = vector.load %arg8[%c0_206, %c0_207, %c0_208] : memref<2x2x128xf32, #tpu.memory_space<vmem>>, vector<1x2x128xf32>
    %757 = vector.shape_cast %756 : vector<1x2x128xf32> to vector<2x128xf32>
    %758 = vector.shape_cast %704 : vector<2x128xf32> to vector<1x2x128xf32>
    tpu.vector_store %arg8[%c0_206, %c0_207, %c0_208], %758 {strides = array<i32>} : memref<2x2x128xf32, #tpu.memory_space<vmem>>, vector<1x2x128xf32>,
    %c1_209 = arith.constant 1 : index
    %c0_210 = arith.constant 0 : index
    %c0_211 = arith.constant 0 : index
    %759 = vector.load %arg8[%c1_209, %c0_210, %c0_211] : memref<2x2x128xf32, #tpu.memory_space<vmem>>, vector<1x2x128xf32>
    %760 = vector.shape_cast %759 : vector<1x2x128xf32> to vector<2x128xf32>
    %761 = vector.shape_cast %745 : vector<2x128xf32> to vector<1x2x128xf32>
    tpu.vector_store %arg8[%c1_209, %c0_210, %c0_211], %761 {strides = array<i32>} : memref<2x2x128xf32, #tpu.memory_space<vmem>>, vector<1x2x128xf32>,
    %c0_212 = arith.constant 0 : index
    %c0_213 = arith.constant 0 : index
    %c0_214 = arith.constant 0 : index
    %762 = vector.load %arg8[%c0_212, %c0_213, %c0_214] : memref<2x2x128xf32, #tpu.memory_space<vmem>>, vector<2x2x128xf32>
    %c0_215 = arith.constant 0 : index
    %c0_216 = arith.constant 0 : index
    %c0_217 = arith.constant 0 : index
    %763 = vector.load %arg7[%c0_215, %c0_216, %c0_217] : memref<2x2x128xf32, #tpu.memory_space<vmem>>, vector<2x2x128xf32>
    tpu.vector_store %arg7[%c0_215, %c0_216, %c0_217], %762 {strides = array<i32>} : memref<2x2x128xf32, #tpu.memory_space<vmem>>, vector<2x2x128xf32>,
    return
  }
  func.func @transform_0(%arg0: i32) -> (i32, i32, i32, i32) {
    %c0_i32 = arith.constant 0 : i32
    %c0_i32_0 = arith.constant 0 : i32
    %c0_i32_1 = arith.constant 0 : i32
    %c0_i32_2 = arith.constant 0 : i32
    return %c0_i32, %arg0, %c0_i32_0, %c0_i32_1 : i32, i32, i32, i32
  }
  func.func @transform_1(%arg0: i32) -> (i32, i32, i32) {
    %c0_i32 = arith.constant 0 : i32
    %c0_i32_0 = arith.constant 0 : i32
    %c0_i32_1 = arith.constant 0 : i32
    %c0_i32_2 = arith.constant 0 : i32
    return %c0_i32, %c0_i32_0, %c0_i32_1 : i32, i32, i32
  }
  func.func @transform_2(%arg0: i32) -> (i32, i32, i32) {
    %c0_i32 = arith.constant 0 : i32
    %c0_i32_0 = arith.constant 0 : i32
    %c0_i32_1 = arith.constant 0 : i32
    %c0_i32_2 = arith.constant 0 : i32
    return %c0_i32, %c0_i32_0, %c0_i32_1 : i32, i32, i32
  }
  func.func @transform_3(%arg0: i32) -> (i32, i32, i32) {
    %c0_i32 = arith.constant 0 : i32
    %c0_i32_0 = arith.constant 0 : i32
    %c0_i32_1 = arith.constant 0 : i32
    %c0_i32_2 = arith.constant 0 : i32
    return %c0_i32, %c0_i32_0, %c0_i32_1 : i32, i32, i32
  }
  func.func @transform_4(%arg0: i32) -> (i32, i32, i32) {
    %c0_i32 = arith.constant 0 : i32
    %c0_i32_0 = arith.constant 0 : i32
    %c0_i32_1 = arith.constant 0 : i32
    %c0_i32_2 = arith.constant 0 : i32
    return %c0_i32, %c0_i32_0, %c0_i32_1 : i32, i32, i32
  }
  func.func @transform_5(%arg0: i32) -> (i32, i32, i32, i32) {
    %c0_i32 = arith.constant 0 : i32
    %c0_i32_0 = arith.constant 0 : i32
    %c0_i32_1 = arith.constant 0 : i32
    %c0_i32_2 = arith.constant 0 : i32
    return %c0_i32, %arg0, %c0_i32_0, %c0_i32_1 : i32, i32, i32, i32
  }
  func.func @transform_6(%arg0: i32) -> (i32, i32, i32) {
    %c0_i32 = arith.constant 0 : i32
    %c0_i32_0 = arith.constant 0 : i32
    %c0_i32_1 = arith.constant 0 : i32
    %c0_i32_2 = arith.constant 0 : i32
    return %c0_i32, %c0_i32_0, %c0_i32_1 : i32, i32, i32
  }
}

</mosaic_0001>

<llo_original>
// kernel: _forward_impl.1
$region0: #{_forward_impl.1}
  #allocation0 [shape = 'u32[]', space=smem, size = 0x4, offset = 0x4, fixed_abs, tag = 'smem constant byte address 0x4 - core index']
  #allocation1 [shape = 'u32[144,128]{1,0:T(1,128)}', space=vmem, size = 0x12000, scoped, tag = 'internal scratch']
  #allocation2 [shape = 'f32[2,2,128]{2,1,0:T(2,128)}', space=vmem, size = 0x800, scoped, tag = 'scratch operand']
  %s0 = inlined_call_operand.vmem [shape: bf16[2,8,2,384], index: 0, kind: input, shape index: {}]
  %s1 = inlined_call_operand.vmem [shape: bf16[2,128,384], index: 1, kind: input, shape index: {}]
  %s2 = inlined_call_operand.vmem [shape: f32[2,1,128], index: 2, kind: input, shape index: {}]
  %s3 = inlined_call_operand.vmem [shape: s32[2,2,128], index: 3, kind: input, shape index: {}]
  %s4 = inlined_call_operand.vmem [shape: s32[2,2,128], index: 4, kind: input, shape index: {}]
  %s5 = inlined_call_operand.vmem [shape: f32[2,8,2,128], index: 5, kind: output, shape index: {0}]
  %s6 = inlined_call_operand.vmem [shape: f32[2,2,128], index: 6, kind: output, shape index: {1}]
  %7 = xla_tuple %s5, %s6
  %s8 = sld [smem:[#allocation0]]
  $region42: #{_forward_impl.1} parent=0
    _
  %s10 = ssub.s32 1, %s8
  %s11 = scalar_select 0, %s10, %s8
  // Predicated region
  $region2: #{_forward_impl.1} parent=0 // pred_check
    _
  $region3: #{_forward_impl.1} parent=0 // pred_check_branch
    %13 = sbr.rel (0) target = $region5
  $region4: #{_forward_impl.1} parent=0 // pred_region
    _
  $region5: #{_forward_impl.1} parent=0 // pred_fallthru
    _
  // Predicated region
  $region6: #{_forward_impl.1} parent=0 // pred_check
    _
  $region7: #{_forward_impl.1} parent=0 // pred_check_branch
    %15 = sbr.rel (0) target = $region9
  $region8: #{_forward_impl.1} parent=0 // pred_region
    _
  $region9: #{_forward_impl.1} parent=0 // pred_fallthru
    _
  // Predicated region
  $region10: #{_forward_impl.1} parent=0 // pred_check
    _
  $region11: #{_forward_impl.1} parent=0 // pred_check_branch
    %17 = sbr.rel (0) target = $region13
  $region12: #{_forward_impl.1} parent=0 // pred_region
    _
  $region13: #{_forward_impl.1} parent=0 // pred_fallthru
    _
  // Predicated region
  $region14: #{_forward_impl.1} parent=0 // pred_check
    _
  $region15: #{_forward_impl.1} parent=0 // pred_check_branch
    %19 = sbr.rel (0) target = $region17
  $region16: #{_forward_impl.1} parent=0 // pred_region
    _
  $region17: #{_forward_impl.1} parent=0 // pred_fallthru
    _
  // Predicated region
  $region18: #{_forward_impl.1} parent=0 // pred_check
    _
  $region19: #{_forward_impl.1} parent=0 // pred_check_branch
    %21 = sbr.rel (0) target = $region21
  $region20: #{_forward_impl.1} parent=0 // pred_region
    _
  $region21: #{_forward_impl.1} parent=0 // pred_fallthru
    _
  %p23 = scmp.eq.s32.totalorder 0, 0
  // Predicated region
  $region22: #{_forward_impl.1} parent=0 // pred_check
    %p24 = pneg %p23
  $region23: #{_forward_impl.1} parent=0 // pred_check_branch
    %26 = sbr.rel (%p24) target = $region25
  $region24: #{_forward_impl.1} parent=0 // pred_region
    %27 = vst [vmem:[#allocation2] sm:$0x3] 0.0
    %28 = vst [vmem:[#allocation2 + $0x2] sm:$0x3] 0.0
  $region25: #{_forward_impl.1} parent=0 // pred_fallthru
    _
  %v29 = vld [vmem:[%s1] sm:$0xff]
  %v30 = vld [vmem:[%s1 + $0x8] sm:$0xf]
  %v31 = vld [vmem:[%s1 + $0xc] sm:$0xff]
  %v32 = vld [vmem:[%s1 + $0x14] sm:$0xf]
  %v33 = vld [vmem:[%s1 + $0x18] sm:$0xff]
  %v34 = vld [vmem:[%s1 + $0x20] sm:$0xf]
  %v35 = vld [vmem:[%s1 + $0x24] sm:$0xff]
  %v36 = vld [vmem:[%s1 + $0x2c] sm:$0xf]
  %v37 = vld [vmem:[%s1 + $0x30] sm:$0xff]
  %v38 = vld [vmem:[%s1 + $0x38] sm:$0xf]
  %v39 = vld [vmem:[%s1 + $0x3c] sm:$0xff]
  %v40 = vld [vmem:[%s1 + $0x44] sm:$0xf]
  %v41 = vld [vmem:[%s1 + $0x48] sm:$0xff]
  %v42 = vld [vmem:[%s1 + $0x50] sm:$0xf]
  %v43 = vld [vmem:[%s1 + $0x54] sm:$0xff]
  %v44 = vld [vmem:[%s1 + $0x5c] sm:$0xf]
  %v45 = vld [vmem:[%s1 + $0x60] sm:$0xff]
  %v46 = vld [vmem:[%s1 + $0x68] sm:$0xf]
  %v47 = vld [vmem:[%s1 + $0x6c] sm:$0xff]
  %v48 = vld [vmem:[%s1 + $0x74] sm:$0xf]
  %v49 = vld [vmem:[%s1 + $0x78] sm:$0xff]
  %v50 = vld [vmem:[%s1 + $0x80] sm:$0xf]
  %v51 = vld [vmem:[%s1 + $0x84] sm:$0xff]
  %v52 = vld [vmem:[%s1 + $0x8c] sm:$0xf]
  %v53 = vld [vmem:[%s1 + $0x90] sm:$0xff]
  %v54 = vld [vmem:[%s1 + $0x98] sm:$0xf]
  %v55 = vld [vmem:[%s1 + $0x9c] sm:$0xff]
  %v56 = vld [vmem:[%s1 + $0xa4] sm:$0xf]
  %v57 = vld [vmem:[%s1 + $0xa8] sm:$0xff]
  %v58 = vld [vmem:[%s1 + $0xb0] sm:$0xf]
  %v59 = vld [vmem:[%s1 + $0xb4] sm:$0xff]
  %v60 = vld [vmem:[%s1 + $0xbc] sm:$0xf]
  %s61 = scalar_lea.vmem %s1, 192
  %v62 = vld [vmem:[%s61] sm:$0xff]
  %v63 = vld [vmem:[%s61 + $0x8] sm:$0xf]
  %v64 = vld [vmem:[%s61 + $0xc] sm:$0xff]
  %v65 = vld [vmem:[%s61 + $0x14] sm:$0xf]
  %v66 = vld [vmem:[%s61 + $0x18] sm:$0xff]
  %v67 = vld [vmem:[%s61 + $0x20] sm:$0xf]
  %v68 = vld [vmem:[%s61 + $0x24] sm:$0xff]
  %v69 = vld [vmem:[%s61 + $0x2c] sm:$0xf]
  %v70 = vld [vmem:[%s61 + $0x30] sm:$0xff]
  %v71 = vld [vmem:[%s61 + $0x38] sm:$0xf]
  %v72 = vld [vmem:[%s61 + $0x3c] sm:$0xff]
  %v73 = vld [vmem:[%s61 + $0x44] sm:$0xf]
  %v74 = vld [vmem:[%s61 + $0x48] sm:$0xff]
  %v75 = vld [vmem:[%s61 + $0x50] sm:$0xf]
  %v76 = vld [vmem:[%s61 + $0x54] sm:$0xff]
  %v77 = vld [vmem:[%s61 + $0x5c] sm:$0xf]
  %v78 = vld [vmem:[%s61 + $0x60] sm:$0xff]
  %v79 = vld [vmem:[%s61 + $0x68] sm:$0xf]
  %v80 = vld [vmem:[%s61 + $0x6c] sm:$0xff]
  %v81 = vld [vmem:[%s61 + $0x74] sm:$0xf]
  %v82 = vld [vmem:[%s61 + $0x78] sm:$0xff]
  %v83 = vld [vmem:[%s61 + $0x80] sm:$0xf]
  %v84 = vld [vmem:[%s61 + $0x84] sm:$0xff]
  %v85 = vld [vmem:[%s61 + $0x8c] sm:$0xf]
  %v86 = vld [vmem:[%s61 + $0x90] sm:$0xff]
  %v87 = vld [vmem:[%s61 + $0x98] sm:$0xf]
  %v88 = vld [vmem:[%s61 + $0x9c] sm:$0xff]
  %v89 = vld [vmem:[%s61 + $0xa4] sm:$0xf]
  %v90 = vld [vmem:[%s61 + $0xa8] sm:$0xff]
  %v91 = vld [vmem:[%s61 + $0xb0] sm:$0xf]
  %v92 = vld [vmem:[%s61 + $0xb4] sm:$0xff]
  %v93 = vld [vmem:[%s61 + $0xbc] sm:$0xf]
  %v94 = vld [vmem:[%s3] sm:$0x3]
  %v95 = vld [vmem:[%s4] sm:$0x3]
  %s96 = scalar_lea.vmem %s3, 2
  %v97 = vld [vmem:[%s96] sm:$0x3]
  %s98 = scalar_lea.vmem %s4, 2
  %v99 = vld [vmem:[%s98] sm:$0x3]
  %v100 = vld [vmem:[%s2] sm:$0x1]
  %v102 = vlaneseq
  %v103 = vshrl.u32 %v102, 7
  %v104 = vsub.s32 0, %v103
  %v105 = vrot.slane %v100, %v104
  %s107 = scalar_lea.vmem %s2, 1
  %v108 = vld [vmem:[%s107] sm:$0x1]
  %v110 = vlaneseq
  %v111 = vshrl.u32 %v110, 7
  %v112 = vsub.s32 0, %v111
  %v113 = vrot.slane %v108, %v112
  %s115 = smul.u32 0, 8
  %v116 = vld [vmem:[#allocation2] sm:$0x3]
  %s117 = scalar_lea.vmem [#allocation2], 2
  %v118 = vld [vmem:[%s117] sm:$0x3]
  %v119 = vld [vmem:[%s0] sm:$0x7]
  %v120 = vstv %s115
  %vm121 = vcmp.ge.s32.totalorder %v120, %v94
  %vm122 = vcmp.lt.s32.totalorder %v120, %v95
  %vm123 = vmand %vm121, %vm122
  %v124 = vunpack.c.l.bf16 %v119
  %v125 = vpack.c.bf16 %v116, %v116
  %v158 = vunpack.c.l.b16 %v29
  %v159 = vunpack.c.h.b16 %v29
  %v160 = vunpack.c.l.b16 %v30
  %v161 = vunpack.c.l.b16 %v31
  %v162 = vunpack.c.h.b16 %v31
  %v163 = vunpack.c.l.b16 %v32
  %v164 = vunpack.c.l.b16 %v33
  %v165 = vunpack.c.h.b16 %v33
  %v166 = vunpack.c.l.b16 %v34
  %v167 = vunpack.c.l.b16 %v35
  %v168 = vunpack.c.h.b16 %v35
  %v169 = vunpack.c.l.b16 %v36
  %v170 = vunpack.c.l.b16 %v37
  %v171 = vunpack.c.h.b16 %v37
  %v172 = vunpack.c.l.b16 %v38
  %v173 = vunpack.c.l.b16 %v39
  %v174 = vunpack.c.h.b16 %v39
  %v175 = vunpack.c.l.b16 %v40
  %v176 = vunpack.c.l.b16 %v41
  %v177 = vunpack.c.h.b16 %v41
  %v178 = vunpack.c.l.b16 %v42
  %v179 = vunpack.c.l.b16 %v43
  %v180 = vunpack.c.h.b16 %v43
  %v181 = vunpack.c.l.b16 %v44
  %v182 = vunpack.c.l.b16 %v45
  %v183 = vunpack.c.h.b16 %v45
  %v184 = vunpack.c.l.b16 %v46
  %v185 = vunpack.c.l.b16 %v47
  %v186 = vunpack.c.h.b16 %v47
  %v187 = vunpack.c.l.b16 %v48
  %v188 = vunpack.c.l.b16 %v49
  %v189 = vunpack.c.h.b16 %v49
  %v190 = vunpack.c.l.b16 %v50
  %v191 = vunpack.c.l.b16 %v51
  %v192 = vunpack.c.h.b16 %v51
  %v193 = vunpack.c.l.b16 %v52
  %v194 = vunpack.c.l.b16 %v53
  %v195 = vunpack.c.h.b16 %v53
  %v196 = vunpack.c.l.b16 %v54
  %v197 = vunpack.c.l.b16 %v55
  %v198 = vunpack.c.h.b16 %v55
  %v199 = vunpack.c.l.b16 %v56
  %v200 = vunpack.c.l.b16 %v57
  %v201 = vunpack.c.h.b16 %v57
  %v202 = vunpack.c.l.b16 %v58
  %v203 = vunpack.c.l.b16 %v59
  %v204 = vunpack.c.h.b16 %v59
  %v205 = vunpack.c.l.b16 %v60
  %v206 = vpack.c.b16 %v161, %v158
  %v207 = vpack.c.b16 %v162, %v159
  %v208 = vpack.c.b16 %v163, %v160
  %v209 = vpack.c.b16 %v167, %v164
  %v210 = vpack.c.b16 %v168, %v165
  %v211 = vpack.c.b16 %v169, %v166
  %v212 = vpack.c.b16 %v173, %v170
  %v213 = vpack.c.b16 %v174, %v171
  %v214 = vpack.c.b16 %v175, %v172
  %v215 = vpack.c.b16 %v179, %v176
  %v216 = vpack.c.b16 %v180, %v177
  %v217 = vpack.c.b16 %v181, %v178
  %v218 = vpack.c.b16 %v185, %v182
  %v219 = vpack.c.b16 %v186, %v183
  %v220 = vpack.c.b16 %v187, %v184
  %v221 = vpack.c.b16 %v191, %v188
  %v222 = vpack.c.b16 %v192, %v189
  %v223 = vpack.c.b16 %v193, %v190
  %v224 = vpack.c.b16 %v197, %v194
  %v225 = vpack.c.b16 %v198, %v195
  %v226 = vpack.c.b16 %v199, %v196
  %v227 = vpack.c.b16 %v203, %v200
  %v228 = vpack.c.b16 %v204, %v201
  %v229 = vpack.c.b16 %v205, %v202
  %254 = vmatprep.subr.bf16.mxu0 %v207
  %255 = vmatpush1.bf16.msra.mxu0 %v206
  %256 = vmatprep.subr.bf16.mxu0 %v210
  %257 = vmatpush1.bf16.msra.mxu0 %v209
  %258 = vmatprep.subr.bf16.mxu0 %v213
  %259 = vmatpush1.bf16.msra.mxu0 %v212
  %260 = vmatprep.subr.bf16.mxu0 %v216
  %261 = vmatpush1.bf16.msra.mxu0 %v215
  %262 = vmatprep.subr.bf16.mxu0 %v219
  %263 = vmatpush1.bf16.msra.mxu0 %v218
  %264 = vmatprep.subr.bf16.mxu0 %v222
  %265 = vmatpush1.bf16.msra.mxu0 %v221
  %266 = vmatprep.subr.bf16.mxu0 %v225
  %267 = vmatpush1.bf16.msra.mxu0 %v224
  %268 = vmatprep.subr.bf16.mxu0 %v228
  %269 = vmatpush1.bf16.msra.mxu0 %v227
  %270 = vmatprep.subr.bf16.mxu0 0
  %271 = vmatpush1.bf16.msra.mxu0 0
  %272 = vmatprep.subr.bf16.mxu0 0
  %273 = vmatpush1.bf16.msra.mxu0 0
  %274 = vmatprep.subr.bf16.mxu0 0
  %275 = vmatpush1.bf16.msra.mxu0 0
  %276 = vmatprep.subr.bf16.mxu0 0
  %277 = vmatpush1.bf16.msra.mxu0 0
  %278 = vmatprep.subr.bf16.mxu0 0
  %279 = vmatpush1.bf16.msra.mxu0 0
  %280 = vmatprep.subr.bf16.mxu0 0
  %281 = vmatpush1.bf16.msra.mxu0 0
  %282 = vmatprep.subr.bf16.mxu0 0
  %283 = vmatpush1.bf16.msra.mxu0 0
  %284 = vmatprep.subr.bf16.mxu0 0
  %285 = vmatpush1.bf16.msra.mxu0 0
  %286 = vmatprep.mubr.bf16.mxu0 0
  %287 = vmatmul.mubr.bf16.gmra.mrb[0].mxu0 %v125
  %v288 = vpop.f32.mrb[0].mxu0
  %v289 = vadd.f32 0.0, %v288
  %v290 = vpop.f32.mrb[0].mxu0
  %v291 = vadd.f32 0.0, %v290
  %v292 = vpop.f32.mrb[0].mxu0
  %v293 = vpop.f32.mrb[0].mxu0
  %294 = vdwg.mxu0
  %295 = vmatprep.subr.bf16.mxu0 0
  %296 = vmatpush1.bf16.msra.mxu0 %v208
  %297 = vmatprep.subr.bf16.mxu0 0
  %298 = vmatpush1.bf16.msra.mxu0 %v211
  %299 = vmatprep.subr.bf16.mxu0 0
  %300 = vmatpush1.bf16.msra.mxu0 %v214
  %301 = vmatprep.subr.bf16.mxu0 0
  %302 = vmatpush1.bf16.msra.mxu0 %v217
  %303 = vmatprep.subr.bf16.mxu0 0
  %304 = vmatpush1.bf16.msra.mxu0 %v220
  %305 = vmatprep.subr.bf16.mxu0 0
  %306 = vmatpush1.bf16.msra.mxu0 %v223
  %307 = vmatprep.subr.bf16.mxu0 0
  %308 = vmatpush1.bf16.msra.mxu0 %v226
  %309 = vmatprep.subr.bf16.mxu0 0
  %310 = vmatpush1.bf16.msra.mxu0 %v229
  %311 = vmatprep.subr.bf16.mxu0 0
  %312 = vmatpush1.bf16.msra.mxu0 0
  %313 = vmatprep.subr.bf16.mxu0 0
  %314 = vmatpush1.bf16.msra.mxu0 0
  %315 = vmatprep.subr.bf16.mxu0 0
  %316 = vmatpush1.bf16.msra.mxu0 0
  %317 = vmatprep.subr.bf16.mxu0 0
  %318 = vmatpush1.bf16.msra.mxu0 0
  %319 = vmatprep.subr.bf16.mxu0 0
  %320 = vmatpush1.bf16.msra.mxu0 0
  %321 = vmatprep.subr.bf16.mxu0 0
  %322 = vmatpush1.bf16.msra.mxu0 0
  %323 = vmatprep.subr.bf16.mxu0 0
  %324 = vmatpush1.bf16.msra.mxu0 0
  %325 = vmatprep.subr.bf16.mxu0 0
  %326 = vmatpush1.bf16.msra.mxu0 0
  %327 = vmatprep.mubr.bf16.mxu0 0
  %328 = vmatmul.mubr.bf16.gmra.mrb[0].mxu0 %v125
  %v329 = vpop.f32.mrb[0].mxu0
  %v330 = vadd.f32 0.0, %v329
  %v331 = vpop.f32.mrb[0].mxu0
  %v332 = vpop.f32.mrb[0].mxu0
  %v333 = vpop.f32.mrb[0].mxu0
  %334 = vdwg.mxu0
  %v335 = vadd.f32 %v124, %v289
  %v336 = vxor.u32 %v335, 2147483648
  %v337 = vmul.f32 %v336, 1.442695
  %v338 = vpow.pop %v337
  %v339 = vadd.f32 %v338, 1.0
  %v340 = vrcp.pop %v339
  %v341 = vmul.f32 1.0, %v340
  %v343 = vrot.slane %v124, 2
  %v345 = vadd.f32 %v343, %v291
  %v346 = vxor.u32 %v345, 2147483648
  %v347 = vmul.f32 %v346, 1.442695
  %v348 = vpow.pop %v347
  %v349 = vadd.f32 %v348, 1.0
  %v350 = vrcp.pop %v349
  %v351 = vmul.f32 1.0, %v350
  %v352 = vadd.f32 %v330, %v105
  %v353 = vmul.f32 %v341, %v352
  %v354 = vrot.slane %v124, 4
  %v356 = vadd.f32 %v354, %v353
  %v357 = vtanh.pop %v356
  %v358 = vsub.f32 1.0, %v351
  %v359 = vmul.f32 %v358, %v357
  %v360 = vmul.f32 %v351, %v116
  %v361 = vadd.f32 %v359, %v360
  %v362 = vsel %vm123, %v361, %v116
  %v363 = vsel %vm123, %v361, 0.0
  %s364 = scalar_lea.vmem %s0, 24
  %v365 = vld [vmem:[%s364] sm:$0x7]
  %vm366 = vcmp.ge.s32.totalorder %v120, %v97
  %vm367 = vcmp.lt.s32.totalorder %v120, %v99
  %vm368 = vmand %vm366, %vm367
  %v369 = vunpack.c.l.bf16 %v365
  %v370 = vpack.c.bf16 %v118, %v118
  %v403 = vunpack.c.l.b16 %v62
  %v404 = vunpack.c.h.b16 %v62
  %v405 = vunpack.c.l.b16 %v63
  %v406 = vunpack.c.l.b16 %v64
  %v407 = vunpack.c.h.b16 %v64
  %v408 = vunpack.c.l.b16 %v65
  %v409 = vunpack.c.l.b16 %v66
  %v410 = vunpack.c.h.b16 %v66
  %v411 = vunpack.c.l.b16 %v67
  %v412 = vunpack.c.l.b16 %v68
  %v413 = vunpack.c.h.b16 %v68
  %v414 = vunpack.c.l.b16 %v69
  %v415 = vunpack.c.l.b16 %v70
  %v416 = vunpack.c.h.b16 %v70
  %v417 = vunpack.c.l.b16 %v71
  %v418 = vunpack.c.l.b16 %v72
  %v419 = vunpack.c.h.b16 %v72
  %v420 = vunpack.c.l.b16 %v73
  %v421 = vunpack.c.l.b16 %v74
  %v422 = vunpack.c.h.b16 %v74
  %v423 = vunpack.c.l.b16 %v75
  %v424 = vunpack.c.l.b16 %v76
  %v425 = vunpack.c.h.b16 %v76
  %v426 = vunpack.c.l.b16 %v77
  %v427 = vunpack.c.l.b16 %v78
  %v428 = vunpack.c.h.b16 %v78
  %v429 = vunpack.c.l.b16 %v79
  %v430 = vunpack.c.l.b16 %v80
  %v431 = vunpack.c.h.b16 %v80
  %v432 = vunpack.c.l.b16 %v81
  %v433 = vunpack.c.l.b16 %v82
  %v434 = vunpack.c.h.b16 %v82
  %v435 = vunpack.c.l.b16 %v83
  %v436 = vunpack.c.l.b16 %v84
  %v437 = vunpack.c.h.b16 %v84
  %v438 = vunpack.c.l.b16 %v85
  %v439 = vunpack.c.l.b16 %v86
  %v440 = vunpack.c.h.b16 %v86
  %v441 = vunpack.c.l.b16 %v87
  %v442 = vunpack.c.l.b16 %v88
  %v443 = vunpack.c.h.b16 %v88
  %v444 = vunpack.c.l.b16 %v89
  %v445 = vunpack.c.l.b16 %v90
  %v446 = vunpack.c.h.b16 %v90
  %v447 = vunpack.c.l.b16 %v91
  %v448 = vunpack.c.l.b16 %v92
  %v449 = vunpack.c.h.b16 %v92
  %v450 = vunpack.c.l.b16 %v93
  %v451 = vpack.c.b16 %v406, %v403
  %v452 = vpack.c.b16 %v407, %v404
  %v453 = vpack.c.b16 %v408, %v405
  %v454 = vpack.c.b16 %v412, %v409
  %v455 = vpack.c.b16 %v413, %v410
  %v456 = vpack.c.b16 %v414, %v411
  %v457 = vpack.c.b16 %v418, %v415
  %v458 = vpack.c.b16 %v419, %v416
  %v459 = vpack.c.b16 %v420, %v417
  %v460 = vpack.c.b16 %v424, %v421
  %v461 = vpack.c.b16 %v425, %v422
  %v462 = vpack.c.b16 %v426, %v423
  %v463 = vpack.c.b16 %v430, %v427
  %v464 = vpack.c.b16 %v431, %v428
  %v465 = vpack.c.b16 %v432, %v429
  %v466 = vpack.c.b16 %v436, %v433
  %v467 = vpack.c.b16 %v437, %v434
  %v468 = vpack.c.b16 %v438, %v435
  %v469 = vpack.c.b16 %v442, %v439
  %v470 = vpack.c.b16 %v443, %v440
  %v471 = vpack.c.b16 %v444, %v441
  %v472 = vpack.c.b16 %v448, %v445
  %v473 = vpack.c.b16 %v449, %v446
  %v474 = vpack.c.b16 %v450, %v447
  %499 = vmatprep.subr.bf16.mxu0 %v452
  %500 = vmatpush1.bf16.msra.mxu0 %v451
  %501 = vmatprep.subr.bf16.mxu0 %v455
  %502 = vmatpush1.bf16.msra.mxu0 %v454
  %503 = vmatprep.subr.bf16.mxu0 %v458
  %504 = vmatpush1.bf16.msra.mxu0 %v457
  %505 = vmatprep.subr.bf16.mxu0 %v461
  %506 = vmatpush1.bf16.msra.mxu0 %v460
  %507 = vmatprep.subr.bf16.mxu0 %v464
  %508 = vmatpush1.bf16.msra.mxu0 %v463
  %509 = vmatprep.subr.bf16.mxu0 %v467
  %510 = vmatpush1.bf16.msra.mxu0 %v466
  %511 = vmatprep.subr.bf16.mxu0 %v470
  %512 = vmatpush1.bf16.msra.mxu0 %v469
  %513 = vmatprep.subr.bf16.mxu0 %v473
  %514 = vmatpush1.bf16.msra.mxu0 %v472
  %515 = vmatprep.subr.bf16.mxu0 0
  %516 = vmatpush1.bf16.msra.mxu0 0
  %517 = vmatprep.subr.bf16.mxu0 0
  %518 = vmatpush1.bf16.msra.mxu0 0
  %519 = vmatprep.subr.bf16.mxu0 0
  %520 = vmatpush1.bf16.msra.mxu0 0
  %521 = vmatprep.subr.bf16.mxu0 0
  %522 = vmatpush1.bf16.msra.mxu0 0
  %523 = vmatprep.subr.bf16.mxu0 0
  %524 = vmatpush1.bf16.msra.mxu0 0
  %525 = vmatprep.subr.bf16.mxu0 0
  %526 = vmatpush1.bf16.msra.mxu0 0
  %527 = vmatprep.subr.bf16.mxu0 0
  %528 = vmatpush1.bf16.msra.mxu0 0
  %529 = vmatprep.subr.bf16.mxu0 0
  %530 = vmatpush1.bf16.msra.mxu0 0
  %531 = vmatprep.mubr.bf16.mxu0 0
  %532 = vmatmul.mubr.bf16.gmra.mrb[0].mxu0 %v370
  %v533 = vpop.f32.mrb[0].mxu0
  %v534 = vadd.f32 0.0, %v533
  %v535 = vpop.f32.mrb[0].mxu0
  %v536 = vadd.f32 0.0, %v535
  %v537 = vpop.f32.mrb[0].mxu0
  %v538 = vpop.f32.mrb[0].mxu0
  %539 = vdwg.mxu0
  %540 = vmatprep.subr.bf16.mxu0 0
  %541 = vmatpush1.bf16.msra.mxu0 %v453
  %542 = vmatprep.subr.bf16.mxu0 0
  %543 = vmatpush1.bf16.msra.mxu0 %v456
  %544 = vmatprep.subr.bf16.mxu0 0
  %545 = vmatpush1.bf16.msra.mxu0 %v459
  %546 = vmatprep.subr.bf16.mxu0 0
  %547 = vmatpush1.bf16.msra.mxu0 %v462
  %548 = vmatprep.subr.bf16.mxu0 0
  %549 = vmatpush1.bf16.msra.mxu0 %v465
  %550 = vmatprep.subr.bf16.mxu0 0
  %551 = vmatpush1.bf16.msra.mxu0 %v468
  %552 = vmatprep.subr.bf16.mxu0 0
  %553 = vmatpush1.bf16.msra.mxu0 %v471
  %554 = vmatprep.subr.bf16.mxu0 0
  %555 = vmatpush1.bf16.msra.mxu0 %v474
  %556 = vmatprep.subr.bf16.mxu0 0
  %557 = vmatpush1.bf16.msra.mxu0 0
  %558 = vmatprep.subr.bf16.mxu0 0
  %559 = vmatpush1.bf16.msra.mxu0 0
  %560 = vmatprep.subr.bf16.mxu0 0
  %561 = vmatpush1.bf16.msra.mxu0 0
  %562 = vmatprep.subr.bf16.mxu0 0
  %563 = vmatpush1.bf16.msra.mxu0 0
  %564 = vmatprep.subr.bf16.mxu0 0
  %565 = vmatpush1.bf16.msra.mxu0 0
  %566 = vmatprep.subr.bf16.mxu0 0
  %567 = vmatpush1.bf16.msra.mxu0 0
  %568 = vmatprep.subr.bf16.mxu0 0
  %569 = vmatpush1.bf16.msra.mxu0 0
  %570 = vmatprep.subr.bf16.mxu0 0
  %571 = vmatpush1.bf16.msra.mxu0 0
  %572 = vmatprep.mubr.bf16.mxu0 0
  %573 = vmatmul.mubr.bf16.gmra.mrb[0].mxu0 %v370
  %v574 = vpop.f32.mrb[0].mxu0
  %v575 = vadd.f32 0.0, %v574
  %v576 = vpop.f32.mrb[0].mxu0
  %v577 = vpop.f32.mrb[0].mxu0
  %v578 = vpop.f32.mrb[0].mxu0
  %579 = vdwg.mxu0
  %v580 = vadd.f32 %v369, %v534
  %v581 = vxor.u32 %v580, 2147483648
  %v582 = vmul.f32 %v581, 1.442695
  %v583 = vpow.pop %v582
  %v584 = vadd.f32 %v583, 1.0
  %v585 = vrcp.pop %v584
  %v586 = vmul.f32 1.0, %v585
  %v588 = vrot.slane %v369, 2
  %v590 = vadd.f32 %v588, %v536
  %v591 = vxor.u32 %v590, 2147483648
  %v592 = vmul.f32 %v591, 1.442695
  %v593 = vpow.pop %v592
  %v594 = vadd.f32 %v593, 1.0
  %v595 = vrcp.pop %v594
  %v596 = vmul.f32 1.0, %v595
  %v597 = vadd.f32 %v575, %v113
  %v598 = vmul.f32 %v586, %v597
  %v599 = vrot.slane %v369, 4
  %v601 = vadd.f32 %v599, %v598
  %v602 = vtanh.pop %v601
  %v603 = vsub.f32 1.0, %v596
  %v604 = vmul.f32 %v603, %v602
  %v605 = vmul.f32 %v596, %v118
  %v606 = vadd.f32 %v604, %v605
  %v607 = vsel %vm368, %v606, %v118
  %v608 = vsel %vm368, %v606, 0.0
  %609 = vst [vmem:[%s5] sm:$0x3] %v363
  %s610 = scalar_lea.vmem %s5, 16
  %611 = vst [vmem:[%s610] sm:$0x3] %v608
  %s612 = sadd.s32 %s115, 1
  %s613 = scalar_lea.vmem %s0, 3
  %v614 = vld [vmem:[%s613] sm:$0x7]
  %v615 = vstv %s612
  %vm616 = vcmp.ge.s32.totalorder %v615, %v94
  %vm617 = vcmp.lt.s32.totalorder %v615, %v95
  %vm618 = vmand %vm616, %vm617
  %v619 = vunpack.c.l.bf16 %v614
  %v620 = vpack.c.bf16 %v362, %v362
  %621 = vmatprep.subr.bf16.mxu0 %v207
  %622 = vmatpush1.bf16.msra.mxu0 %v206
  %623 = vmatprep.subr.bf16.mxu0 %v210
  %624 = vmatpush1.bf16.msra.mxu0 %v209
  %625 = vmatprep.subr.bf16.mxu0 %v213
  %626 = vmatpush1.bf16.msra.mxu0 %v212
  %627 = vmatprep.subr.bf16.mxu0 %v216
  %628 = vmatpush1.bf16.msra.mxu0 %v215
  %629 = vmatprep.subr.bf16.mxu0 %v219
  %630 = vmatpush1.bf16.msra.mxu0 %v218
  %631 = vmatprep.subr.bf16.mxu0 %v222
  %632 = vmatpush1.bf16.msra.mxu0 %v221
  %633 = vmatprep.subr.bf16.mxu0 %v225
  %634 = vmatpush1.bf16.msra.mxu0 %v224
  %635 = vmatprep.subr.bf16.mxu0 %v228
  %636 = vmatpush1.bf16.msra.mxu0 %v227
  %637 = vmatprep.subr.bf16.mxu0 0
  %638 = vmatpush1.bf16.msra.mxu0 0
  %639 = vmatprep.subr.bf16.mxu0 0
  %640 = vmatpush1.bf16.msra.mxu0 0
  %641 = vmatprep.subr.bf16.mxu0 0
  %642 = vmatpush1.bf16.msra.mxu0 0
  %643 = vmatprep.subr.bf16.mxu0 0
  %644 = vmatpush1.bf16.msra.mxu0 0
  %645 = vmatprep.subr.bf16.mxu0 0
  %646 = vmatpush1.bf16.msra.mxu0 0
  %647 = vmatprep.subr.bf16.mxu0 0
  %648 = vmatpush1.bf16.msra.mxu0 0
  %649 = vmatprep.subr.bf16.mxu0 0
  %650 = vmatpush1.bf16.msra.mxu0 0
  %651 = vmatprep.subr.bf16.mxu0 0
  %652 = vmatpush1.bf16.msra.mxu0 0
  %653 = vmatprep.mubr.bf16.mxu0 0
  %654 = vmatmul.mubr.bf16.gmra.mrb[0].mxu0 %v620
  %v655 = vpop.f32.mrb[0].mxu0
  %v656 = vadd.f32 0.0, %v655
  %v657 = vpop.f32.mrb[0].mxu0
  %v658 = vadd.f32 0.0, %v657
  %v659 = vpop.f32.mrb[0].mxu0
  %v660 = vpop.f32.mrb[0].mxu0
  %661 = vdwg.mxu0
  %662 = vmatprep.subr.bf16.mxu0 0
  %663 = vmatpush1.bf16.msra.mxu0 %v208
  %664 = vmatprep.subr.bf16.mxu0 0
  %665 = vmatpush1.bf16.msra.mxu0 %v211
  %666 = vmatprep.subr.bf16.mxu0 0
  %667 = vmatpush1.bf16.msra.mxu0 %v214
  %668 = vmatprep.subr.bf16.mxu0 0
  %669 = vmatpush1.bf16.msra.mxu0 %v217
  %670 = vmatprep.subr.bf16.mxu0 0
  %671 = vmatpush1.bf16.msra.mxu0 %v220
  %672 = vmatprep.subr.bf16.mxu0 0
  %673 = vmatpush1.bf16.msra.mxu0 %v223
  %674 = vmatprep.subr.bf16.mxu0 0
  %675 = vmatpush1.bf16.msra.mxu0 %v226
  %676 = vmatprep.subr.bf16.mxu0 0
  %677 = vmatpush1.bf16.msra.mxu0 %v229
  %678 = vmatprep.subr.bf16.mxu0 0
  %679 = vmatpush1.bf16.msra.mxu0 0
  %680 = vmatprep.subr.bf16.mxu0 0
  %681 = vmatpush1.bf16.msra.mxu0 0
  %682 = vmatprep.subr.bf16.mxu0 0
  %683 = vmatpush1.bf16.msra.mxu0 0
  %684 = vmatprep.subr.bf16.mxu0 0
  %685 = vmatpush1.bf16.msra.mxu0 0
  %686 = vmatprep.subr.bf16.mxu0 0
  %687 = vmatpush1.bf16.msra.mxu0 0
  %688 = vmatprep.subr.bf16.mxu0 0
  %689 = vmatpush1.bf16.msra.mxu0 0
  %690 = vmatprep.subr.bf16.mxu0 0
  %691 = vmatpush1.bf16.msra.mxu0 0
  %692 = vmatprep.subr.bf16.mxu0 0
  %693 = vmatpush1.bf16.msra.mxu0 0
  %694 = vmatprep.mubr.bf16.mxu0 0
  %695 = vmatmul.mubr.bf16.gmra.mrb[0].mxu0 %v620
  %v696 = vpop.f32.mrb[0].mxu0
  %v697 = vadd.f32 0.0, %v696
  %v698 = vpop.f32.mrb[0].mxu0
  %v699 = vpop.f32.mrb[0].mxu0
  %v700 = vpop.f32.mrb[0].mxu0
  %701 = vdwg.mxu0
  %v702 = vadd.f32 %v619, %v656
  %v703 = vxor.u32 %v702, 2147483648
  %v704 = vmul.f32 %v703, 1.442695
  %v705 = vpow.pop %v704
  %v706 = vadd.f32 %v705, 1.0
  %v707 = vrcp.pop %v706
  %v708 = vmul.f32 1.0, %v707
  %v710 = vrot.slane %v619, 2
  %v712 = vadd.f32 %v710, %v658
  %v713 = vxor.u32 %v712, 2147483648
  %v714 = vmul.f32 %v713, 1.442695
  %v715 = vpow.pop %v714
  %v716 = vadd.f32 %v715, 1.0
  %v717 = vrcp.pop %v716
  %v718 = vmul.f32 1.0, %v717
  %v719 = vadd.f32 %v697, %v105
  %v720 = vmul.f32 %v708, %v719
  %v721 = vrot.slane %v619, 4
  %v723 = vadd.f32 %v721, %v720
  %v724 = vtanh.pop %v723
  %v725 = vsub.f32 1.0, %v718
  %v726 = vmul.f32 %v725, %v724
  %v727 = vmul.f32 %v718, %v362
  %v728 = vadd.f32 %v726, %v727
  %v729 = vsel %vm618, %v728, %v362
  %v730 = vsel %vm618, %v728, 0.0
  %s731 = scalar_lea.vmem %s0, 27
  %v732 = vld [vmem:[%s731] sm:$0x7]
  %vm733 = vcmp.ge.s32.totalorder %v615, %v97
  %vm734 = vcmp.lt.s32.totalorder %v615, %v99
  %vm735 = vmand %vm733, %vm734
  %v736 = vunpack.c.l.bf16 %v732
  %v737 = vpack.c.bf16 %v607, %v607
  %738 = vmatprep.subr.bf16.mxu0 %v452
  %739 = vmatpush1.bf16.msra.mxu0 %v451
  %740 = vmatprep.subr.bf16.mxu0 %v455
  %741 = vmatpush1.bf16.msra.mxu0 %v454
  %742 = vmatprep.subr.bf16.mxu0 %v458
  %743 = vmatpush1.bf16.msra.mxu0 %v457
  %744 = vmatprep.subr.bf16.mxu0 %v461
  %745 = vmatpush1.bf16.msra.mxu0 %v460
  %746 = vmatprep.subr.bf16.mxu0 %v464
  %747 = vmatpush1.bf16.msra.mxu0 %v463
  %748 = vmatprep.subr.bf16.mxu0 %v467
  %749 = vmatpush1.bf16.msra.mxu0 %v466
  %750 = vmatprep.subr.bf16.mxu0 %v470
  %751 = vmatpush1.bf16.msra.mxu0 %v469
  %752 = vmatprep.subr.bf16.mxu0 %v473
  %753 = vmatpush1.bf16.msra.mxu0 %v472
  %754 = vmatprep.subr.bf16.mxu0 0
  %755 = vmatpush1.bf16.msra.mxu0 0
  %756 = vmatprep.subr.bf16.mxu0 0
  %757 = vmatpush1.bf16.msra.mxu0 0
  %758 = vmatprep.subr.bf16.mxu0 0
  %759 = vmatpush1.bf16.msra.mxu0 0
  %760 = vmatprep.subr.bf16.mxu0 0
  %761 = vmatpush1.bf16.msra.mxu0 0
  %762 = vmatprep.subr.bf16.mxu0 0
  %763 = vmatpush1.bf16.msra.mxu0 0
  %764 = vmatprep.subr.bf16.mxu0 0
  %765 = vmatpush1.bf16.msra.mxu0 0
  %766 = vmatprep.subr.bf16.mxu0 0
  %767 = vmatpush1.bf16.msra.mxu0 0
  %768 = vmatprep.subr.bf16.mxu0 0
  %769 = vmatpush1.bf16.msra.mxu0 0
  %770 = vmatprep.mubr.bf16.mxu0 0
  %771 = vmatmul.mubr.bf16.gmra.mrb[0].mxu0 %v737
  %v772 = vpop.f32.mrb[0].mxu0
  %v773 = vadd.f32 0.0, %v772
  %v774 = vpop.f32.mrb[0].mxu0
  %v775 = vadd.f32 0.0, %v774
  %v776 = vpop.f32.mrb[0].mxu0
  %v777 = vpop.f32.mrb[0].mxu0
  %778 = vdwg.mxu0
  %779 = vmatprep.subr.bf16.mxu0 0
  %780 = vmatpush1.bf16.msra.mxu0 %v453
  %781 = vmatprep.subr.bf16.mxu0 0
  %782 = vmatpush1.bf16.msra.mxu0 %v456
  %783 = vmatprep.subr.bf16.mxu0 0
  %784 = vmatpush1.bf16.msra.mxu0 %v459
  %785 = vmatprep.subr.bf16.mxu0 0
  %786 = vmatpush1.bf16.msra.mxu0 %v462
  %787 = vmatprep.subr.bf16.mxu0 0
  %788 = vmatpush1.bf16.msra.mxu0 %v465
  %789 = vmatprep.subr.bf16.mxu0 0
  %790 = vmatpush1.bf16.msra.mxu0 %v468
  %791 = vmatprep.subr.bf16.mxu0 0
  %792 = vmatpush1.bf16.msra.mxu0 %v471
  %793 = vmatprep.subr.bf16.mxu0 0
  %794 = vmatpush1.bf16.msra.mxu0 %v474
  %795 = vmatprep.subr.bf16.mxu0 0
  %796 = vmatpush1.bf16.msra.mxu0 0
  %797 = vmatprep.subr.bf16.mxu0 0
  %798 = vmatpush1.bf16.msra.mxu0 0
  %799 = vmatprep.subr.bf16.mxu0 0
  %800 = vmatpush1.bf16.msra.mxu0 0
  %801 = vmatprep.subr.bf16.mxu0 0
  %802 = vmatpush1.bf16.msra.mxu0 0
  %803 = vmatprep.subr.bf16.mxu0 0
  %804 = vmatpush1.bf16.msra.mxu0 0
  %805 = vmatprep.subr.bf16.mxu0 0
  %806 = vmatpush1.bf16.msra.mxu0 0
  %807 = vmatprep.subr.bf16.mxu0 0
  %808 = vmatpush1.bf16.msra.mxu0 0
  %809 = vmatprep.subr.bf16.mxu0 0
  %810 = vmatpush1.bf16.msra.mxu0 0
  %811 = vmatprep.mubr.bf16.mxu0 0
  %812 = vmatmul.mubr.bf16.gmra.mrb[0].mxu0 %v737
  %v813 = vpop.f32.mrb[0].mxu0
  %v814 = vadd.f32 0.0, %v813
  %v815 = vpop.f32.mrb[0].mxu0
  %v816 = vpop.f32.mrb[0].mxu0
  %v817 = vpop.f32.mrb[0].mxu0
  %818 = vdwg.mxu0
  %v819 = vadd.f32 %v736, %v773
  %v820 = vxor.u32 %v819, 2147483648
  %v821 = vmul.f32 %v820, 1.442695
  %v822 = vpow.pop %v821
  %v823 = vadd.f32 %v822, 1.0
  %v824 = vrcp.pop %v823
  %v825 = vmul.f32 1.0, %v824
  %v827 = vrot.slane %v736, 2
  %v829 = vadd.f32 %v827, %v775
  %v830 = vxor.u32 %v829, 2147483648
  %v831 = vmul.f32 %v830, 1.442695
  %v832 = vpow.pop %v831
  %v833 = vadd.f32 %v832, 1.0
  %v834 = vrcp.pop %v833
  %v835 = vmul.f32 1.0, %v834
  %v836 = vadd.f32 %v814, %v113
  %v837 = vmul.f32 %v825, %v836
  %v838 = vrot.slane %v736, 4
  %v840 = vadd.f32 %v838, %v837
  %v841 = vtanh.pop %v840
  %v842 = vsub.f32 1.0, %v835
  %v843 = vmul.f32 %v842, %v841
  %v844 = vmul.f32 %v835, %v607
  %v845 = vadd.f32 %v843, %v844
  %v846 = vsel %vm735, %v845, %v607
  %v847 = vsel %vm735, %v845, 0.0
  %s848 = scalar_lea.vmem %s5, 2
  %849 = vst [vmem:[%s848] sm:$0x3] %v730
  %s850 = scalar_lea.vmem %s5, 18
  %851 = vst [vmem:[%s850] sm:$0x3] %v847
  %s852 = sadd.s32 %s115, 2
  %s853 = scalar_lea.vmem %s0, 6
  %v854 = vld [vmem:[%s853] sm:$0x7]
  %v855 = vstv %s852
  %vm856 = vcmp.ge.s32.totalorder %v855, %v94
  %vm857 = vcmp.lt.s32.totalorder %v855, %v95
  %vm858 = vmand %vm856, %vm857
  %v859 = vunpack.c.l.bf16 %v854
  %v860 = vpack.c.bf16 %v729, %v729
  %861 = vmatprep.subr.bf16.mxu0 %v207
  %862 = vmatpush1.bf16.msra.mxu0 %v206
  %863 = vmatprep.subr.bf16.mxu0 %v210
  %864 = vmatpush1.bf16.msra.mxu0 %v209
  %865 = vmatprep.subr.bf16.mxu0 %v213
  %866 = vmatpush1.bf16.msra.mxu0 %v212
  %867 = vmatprep.subr.bf16.mxu0 %v216
  %868 = vmatpush1.bf16.msra.mxu0 %v215
  %869 = vmatprep.subr.bf16.mxu0 %v219
  %870 = vmatpush1.bf16.msra.mxu0 %v218
  %871 = vmatprep.subr.bf16.mxu0 %v222
  %872 = vmatpush1.bf16.msra.mxu0 %v221
  %873 = vmatprep.subr.bf16.mxu0 %v225
  %874 = vmatpush1.bf16.msra.mxu0 %v224
  %875 = vmatprep.subr.bf16.mxu0 %v228
  %876 = vmatpush1.bf16.msra.mxu0 %v227
  %877 = vmatprep.subr.bf16.mxu0 0
  %878 = vmatpush1.bf16.msra.mxu0 0
  %879 = vmatprep.subr.bf16.mxu0 0
  %880 = vmatpush1.bf16.msra.mxu0 0
  %881 = vmatprep.subr.bf16.mxu0 0
  %882 = vmatpush1.bf16.msra.mxu0 0
  %883 = vmatprep.subr.bf16.mxu0 0
  %884 = vmatpush1.bf16.msra.mxu0 0
  %885 = vmatprep.subr.bf16.mxu0 0
  %886 = vmatpush1.bf16.msra.mxu0 0
  %887 = vmatprep.subr.bf16.mxu0 0
  %888 = vmatpush1.bf16.msra.mxu0 0
  %889 = vmatprep.subr.bf16.mxu0 0
  %890 = vmatpush1.bf16.msra.mxu0 0
  %891 = vmatprep.subr.bf16.mxu0 0
  %892 = vmatpush1.bf16.msra.mxu0 0
  %893 = vmatprep.mubr.bf16.mxu0 0
  %894 = vmatmul.mubr.bf16.gmra.mrb[0].mxu0 %v860
  %v895 = vpop.f32.mrb[0].mxu0
  %v896 = vadd.f32 0.0, %v895
  %v897 = vpop.f32.mrb[0].mxu0
  %v898 = vadd.f32 0.0, %v897
  %v899 = vpop.f32.mrb[0].mxu0
  %v900 = vpop.f32.mrb[0].mxu0
  %901 = vdwg.mxu0
  %902 = vmatprep.subr.bf16.mxu0 0
  %903 = vmatpush1.bf16.msra.mxu0 %v208
  %904 = vmatprep.subr.bf16.mxu0 0
  %905 = vmatpush1.bf16.msra.mxu0 %v211
  %906 = vmatprep.subr.bf16.mxu0 0
  %907 = vmatpush1.bf16.msra.mxu0 %v214
  %908 = vmatprep.subr.bf16.mxu0 0
  %909 = vmatpush1.bf16.msra.mxu0 %v217
  %910 = vmatprep.subr.bf16.mxu0 0
  %911 = vmatpush1.bf16.msra.mxu0 %v220
  %912 = vmatprep.subr.bf16.mxu0 0
  %913 = vmatpush1.bf16.msra.mxu0 %v223
  %914 = vmatprep.subr.bf16.mxu0 0
  %915 = vmatpush1.bf16.msra.mxu0 %v226
  %916 = vmatprep.subr.bf16.mxu0 0
  %917 = vmatpush1.bf16.msra.mxu0 %v229
  %918 = vmatprep.subr.bf16.mxu0 0
  %919 = vmatpush1.bf16.msra.mxu0 0
  %920 = vmatprep.subr.bf16.mxu0 0
  %921 = vmatpush1.bf16.msra.mxu0 0
  %922 = vmatprep.subr.bf16.mxu0 0
  %923 = vmatpush1.bf16.msra.mxu0 0
  %924 = vmatprep.subr.bf16.mxu0 0
  %925 = vmatpush1.bf16.msra.mxu0 0
  %926 = vmatprep.subr.bf16.mxu0 0
  %927 = vmatpush1.bf16.msra.mxu0 0
  %928 = vmatprep.subr.bf16.mxu0 0
  %929 = vmatpush1.bf16.msra.mxu0 0
  %930 = vmatprep.subr.bf16.mxu0 0
  %931 = vmatpush1.bf16.msra.mxu0 0
  %932 = vmatprep.subr.bf16.mxu0 0
  %933 = vmatpush1.bf16.msra.mxu0 0
  %934 = vmatprep.mubr.bf16.mxu0 0
  %935 = vmatmul.mubr.bf16.gmra.mrb[0].mxu0 %v860
  %v936 = vpop.f32.mrb[0].mxu0
  %v937 = vadd.f32 0.0, %v936
  %v938 = vpop.f32.mrb[0].mxu0
  %v939 = vpop.f32.mrb[0].mxu0
  %v940 = vpop.f32.mrb[0].mxu0
  %941 = vdwg.mxu0
  %v942 = vadd.f32 %v859, %v896
  %v943 = vxor.u32 %v942, 2147483648
  %v944 = vmul.f32 %v943, 1.442695
  %v945 = vpow.pop %v944
  %v946 = vadd.f32 %v945, 1.0
  %v947 = vrcp.pop %v946
  %v948 = vmul.f32 1.0, %v947
  %v950 = vrot.slane %v859, 2
  %v952 = vadd.f32 %v950, %v898
  %v953 = vxor.u32 %v952, 2147483648
  %v954 = vmul.f32 %v953, 1.442695
  %v955 = vpow.pop %v954
  %v956 = vadd.f32 %v955, 1.0
  %v957 = vrcp.pop %v956
  %v958 = vmul.f32 1.0, %v957
  %v959 = vadd.f32 %v937, %v105
  %v960 = vmul.f32 %v948, %v959
  %v961 = vrot.slane %v859, 4
  %v963 = vadd.f32 %v961, %v960
  %v964 = vtanh.pop %v963
  %v965 = vsub.f32 1.0, %v958
  %v966 = vmul.f32 %v965, %v964
  %v967 = vmul.f32 %v958, %v729
  %v968 = vadd.f32 %v966, %v967
  %v969 = vsel %vm858, %v968, %v729
  %v970 = vsel %vm858, %v968, 0.0
  %s971 = scalar_lea.vmem %s0, 30
  %v972 = vld [vmem:[%s971] sm:$0x7]
  %vm973 = vcmp.ge.s32.totalorder %v855, %v97
  %vm974 = vcmp.lt.s32.totalorder %v855, %v99
  %vm975 = vmand %vm973, %vm974
  %v976 = vunpack.c.l.bf16 %v972
  %v977 = vpack.c.bf16 %v846, %v846
  %978 = vmatprep.subr.bf16.mxu0 %v452
  %979 = vmatpush1.bf16.msra.mxu0 %v451
  %980 = vmatprep.subr.bf16.mxu0 %v455
  %981 = vmatpush1.bf16.msra.mxu0 %v454
  %982 = vmatprep.subr.bf16.mxu0 %v458
  %983 = vmatpush1.bf16.msra.mxu0 %v457
  %984 = vmatprep.subr.bf16.mxu0 %v461
  %985 = vmatpush1.bf16.msra.mxu0 %v460
  %986 = vmatprep.subr.bf16.mxu0 %v464
  %987 = vmatpush1.bf16.msra.mxu0 %v463
  %988 = vmatprep.subr.bf16.mxu0 %v467
  %989 = vmatpush1.bf16.msra.mxu0 %v466
  %990 = vmatprep.subr.bf16.mxu0 %v470
  %991 = vmatpush1.bf16.msra.mxu0 %v469
  %992 = vmatprep.subr.bf16.mxu0 %v473
  %993 = vmatpush1.bf16.msra.mxu0 %v472
  %994 = vmatprep.subr.bf16.mxu0 0
  %995 = vmatpush1.bf16.msra.mxu0 0
  %996 = vmatprep.subr.bf16.mxu0 0
  %997 = vmatpush1.bf16.msra.mxu0 0
  %998 = vmatprep.subr.bf16.mxu0 0
  %999 = vmatpush1.bf16.msra.mxu0 0
  %1000 = vmatprep.subr.bf16.mxu0 0
  %1001 = vmatpush1.bf16.msra.mxu0 0
  %1002 = vmatprep.subr.bf16.mxu0 0
  %1003 = vmatpush1.bf16.msra.mxu0 0
  %1004 = vmatprep.subr.bf16.mxu0 0
  %1005 = vmatpush1.bf16.msra.mxu0 0
  %1006 = vmatprep.subr.bf16.mxu0 0
  %1007 = vmatpush1.bf16.msra.mxu0 0
  %1008 = vmatprep.subr.bf16.mxu0 0
  %1009 = vmatpush1.bf16.msra.mxu0 0
  %1010 = vmatprep.mubr.bf16.mxu0 0
  %1011 = vmatmul.mubr.bf16.gmra.mrb[0].mxu0 %v977
  %v1012 = vpop.f32.mrb[0].mxu0
  %v1013 = vadd.f32 0.0, %v1012
  %v1014 = vpop.f32.mrb[0].mxu0
  %v1015 = vadd.f32 0.0, %v1014
  %v1016 = vpop.f32.mrb[0].mxu0
  %v1017 = vpop.f32.mrb[0].mxu0
  %1018 = vdwg.mxu0
  %1019 = vmatprep.subr.bf16.mxu0 0
  %1020 = vmatpush1.bf16.msra.mxu0 %v453
  %1021 = vmatprep.subr.bf16.mxu0 0
  %1022 = vmatpush1.bf16.msra.mxu0 %v456
  %1023 = vmatprep.subr.bf16.mxu0 0
  %1024 = vmatpush1.bf16.msra.mxu0 %v459
  %1025 = vmatprep.subr.bf16.mxu0 0
  %1026 = vmatpush1.bf16.msra.mxu0 %v462
  %1027 = vmatprep.subr.bf16.mxu0 0
  %1028 = vmatpush1.bf16.msra.mxu0 %v465
  %1029 = vmatprep.subr.bf16.mxu0 0
  %1030 = vmatpush1.bf16.msra.mxu0 %v468
  %1031 = vmatprep.subr.bf16.mxu0 0
  %1032 = vmatpush1.bf16.msra.mxu0 %v471
  %1033 = vmatprep.subr.bf16.mxu0 0
  %1034 = vmatpush1.bf16.msra.mxu0 %v474
  %1035 = vmatprep.subr.bf16.mxu0 0
  %1036 = vmatpush1.bf16.msra.mxu0 0
  %1037 = vmatprep.subr.bf16.mxu0 0
  %1038 = vmatpush1.bf16.msra.mxu0 0
  %1039 = vmatprep.subr.bf16.mxu0 0
  %1040 = vmatpush1.bf16.msra.mxu0 0
  %1041 = vmatprep.subr.bf16.mxu0 0
  %1042 = vmatpush1.bf16.msra.mxu0 0
  %1043 = vmatprep.subr.bf16.mxu0 0
  %1044 = vmatpush1.bf16.msra.mxu0 0
  %1045 = vmatprep.subr.bf16.mxu0 0
  %1046 = vmatpush1.bf16.msra.mxu0 0
  %1047 = vmatprep.subr.bf16.mxu0 0
  %1048 = vmatpush1.bf16.msra.mxu0 0
  %1049 = vmatprep.subr.bf16.mxu0 0
  %1050 = vmatpush1.bf16.msra.mxu0 0
  %1051 = vmatprep.mubr.bf16.mxu0 0
  %1052 = vmatmul.mubr.bf16.gmra.mrb[0].mxu0 %v977
  %v1053 = vpop.f32.mrb[0].mxu0
  %v1054 = vadd.f32 0.0, %v1053
  %v1055 = vpop.f32.mrb[0].mxu0
  %v1056 = vpop.f32.mrb[0].mxu0
  %v1057 = vpop.f32.mrb[0].mxu0
  %1058 = vdwg.mxu0
  %v1059 = vadd.f32 %v976, %v1013
  %v1060 = vxor.u32 %v1059, 2147483648
  %v1061 = vmul.f32 %v1060, 1.442695
  %v1062 = vpow.pop %v1061
  %v1063 = vadd.f32 %v1062, 1.0
  %v1064 = vrcp.pop %v1063
  %v1065 = vmul.f32 1.0, %v1064
  %v1067 = vrot.slane %v976, 2
  %v1069 = vadd.f32 %v1067, %v1015
  %v1070 = vxor.u32 %v1069, 2147483648
  %v1071 = vmul.f32 %v1070, 1.442695
  %v1072 = vpow.pop %v1071
  %v1073 = vadd.f32 %v1072, 1.0
  %v1074 = vrcp.pop %v1073
  %v1075 = vmul.f32 1.0, %v1074
  %v1076 = vadd.f32 %v1054, %v113
  %v1077 = vmul.f32 %v1065, %v1076
  %v1078 = vrot.slane %v976, 4
  %v1080 = vadd.f32 %v1078, %v1077
  %v1081 = vtanh.pop %v1080
  %v1082 = vsub.f32 1.0, %v1075
  %v1083 = vmul.f32 %v1082, %v1081
  %v1084 = vmul.f32 %v1075, %v846
  %v1085 = vadd.f32 %v1083, %v1084
  %v1086 = vsel %vm975, %v1085, %v846
  %v1087 = vsel %vm975, %v1085, 0.0
  %s1088 = scalar_lea.vmem %s5, 4
  %1089 = vst [vmem:[%s1088] sm:$0x3] %v970
  %s1090 = scalar_lea.vmem %s5, 20
  %1091 = vst [vmem:[%s1090] sm:$0x3] %v1087
  %s1092 = sadd.s32 %s115, 3
  %s1093 = scalar_lea.vmem %s0, 9
  %v1094 = vld [vmem:[%s1093] sm:$0x7]
  %v1095 = vstv %s1092
  %vm1096 = vcmp.ge.s32.totalorder %v1095, %v94
  %vm1097 = vcmp.lt.s32.totalorder %v1095, %v95
  %vm1098 = vmand %vm1096, %vm1097
  %v1099 = vunpack.c.l.bf16 %v1094
  %v1100 = vpack.c.bf16 %v969, %v969
  %1101 = vmatprep.subr.bf16.mxu0 %v207
  %1102 = vmatpush1.bf16.msra.mxu0 %v206
  %1103 = vmatprep.subr.bf16.mxu0 %v210
  %1104 = vmatpush1.bf16.msra.mxu0 %v209
  %1105 = vmatprep.subr.bf16.mxu0 %v213
  %1106 = vmatpush1.bf16.msra.mxu0 %v212
  %1107 = vmatprep.subr.bf16.mxu0 %v216
  %1108 = vmatpush1.bf16.msra.mxu0 %v215
  %1109 = vmatprep.subr.bf16.mxu0 %v219
  %1110 = vmatpush1.bf16.msra.mxu0 %v218
  %1111 = vmatprep.subr.bf16.mxu0 %v222
  %1112 = vmatpush1.bf16.msra.mxu0 %v221
  %1113 = vmatprep.subr.bf16.mxu0 %v225
  %1114 = vmatpush1.bf16.msra.mxu0 %v224
  %1115 = vmatprep.subr.bf16.mxu0 %v228
  %1116 = vmatpush1.bf16.msra.mxu0 %v227
  %1117 = vmatprep.subr.bf16.mxu0 0
  %1118 = vmatpush1.bf16.msra.mxu0 0
  %1119 = vmatprep.subr.bf16.mxu0 0
  %1120 = vmatpush1.bf16.msra.mxu0 0
  %1121 = vmatprep.subr.bf16.mxu0 0
  %1122 = vmatpush1.bf16.msra.mxu0 0
  %1123 = vmatprep.subr.bf16.mxu0 0
  %1124 = vmatpush1.bf16.msra.mxu0 0
  %1125 = vmatprep.subr.bf16.mxu0 0
  %1126 = vmatpush1.bf16.msra.mxu0 0
  %1127 = vmatprep.subr.bf16.mxu0 0
  %1128 = vmatpush1.bf16.msra.mxu0 0
  %1129 = vmatprep.subr.bf16.mxu0 0
  %1130 = vmatpush1.bf16.msra.mxu0 0
  %1131 = vmatprep.subr.bf16.mxu0 0
  %1132 = vmatpush1.bf16.msra.mxu0 0
  %1133 = vmatprep.mubr.bf16.mxu0 0
  %1134 = vmatmul.mubr.bf16.gmra.mrb[0].mxu0 %v1100
  %v1135 = vpop.f32.mrb[0].mxu0
  %v1136 = vadd.f32 0.0, %v1135
  %v1137 = vpop.f32.mrb[0].mxu0
  %v1138 = vadd.f32 0.0, %v1137
  %v1139 = vpop.f32.mrb[0].mxu0
  %v1140 = vpop.f32.mrb[0].mxu0
  %1141 = vdwg.mxu0
  %1142 = vmatprep.subr.bf16.mxu0 0
  %1143 = vmatpush1.bf16.msra.mxu0 %v208
  %1144 = vmatprep.subr.bf16.mxu0 0
  %1145 = vmatpush1.bf16.msra.mxu0 %v211
  %1146 = vmatprep.subr.bf16.mxu0 0
  %1147 = vmatpush1.bf16.msra.mxu0 %v214
  %1148 = vmatprep.subr.bf16.mxu0 0
  %1149 = vmatpush1.bf16.msra.mxu0 %v217
  %1150 = vmatprep.subr.bf16.mxu0 0
  %1151 = vmatpush1.bf16.msra.mxu0 %v220
  %1152 = vmatprep.subr.bf16.mxu0 0
  %1153 = vmatpush1.bf16.msra.mxu0 %v223
  %1154 = vmatprep.subr.bf16.mxu0 0
  %1155 = vmatpush1.bf16.msra.mxu0 %v226
  %1156 = vmatprep.subr.bf16.mxu0 0
  %1157 = vmatpush1.bf16.msra.mxu0 %v229
  %1158 = vmatprep.subr.bf16.mxu0 0
  %1159 = vmatpush1.bf16.msra.mxu0 0
  %1160 = vmatprep.subr.bf16.mxu0 0
  %1161 = vmatpush1.bf16.msra.mxu0 0
  %1162 = vmatprep.subr.bf16.mxu0 0
  %1163 = vmatpush1.bf16.msra.mxu0 0
  %1164 = vmatprep.subr.bf16.mxu0 0
  %1165 = vmatpush1.bf16.msra.mxu0 0
  %1166 = vmatprep.subr.bf16.mxu0 0
  %1167 = vmatpush1.bf16.msra.mxu0 0
  %1168 = vmatprep.subr.bf16.mxu0 0
  %1169 = vmatpush1.bf16.msra.mxu0 0
  %1170 = vmatprep.subr.bf16.mxu0 0
  %1171 = vmatpush1.bf16.msra.mxu0 0
  %1172 = vmatprep.subr.bf16.mxu0 0
  %1173 = vmatpush1.bf16.msra.mxu0 0
  %1174 = vmatprep.mubr.bf16.mxu0 0
  %1175 = vmatmul.mubr.bf16.gmra.mrb[0].mxu0 %v1100
  %v1176 = vpop.f32.mrb[0].mxu0
  %v1177 = vadd.f32 0.0, %v1176
  %v1178 = vpop.f32.mrb[0].mxu0
  %v1179 = vpop.f32.mrb[0].mxu0
  %v1180 = vpop.f32.mrb[0].mxu0
  %1181 = vdwg.mxu0
  %v1182 = vadd.f32 %v1099, %v1136
  %v1183 = vxor.u32 %v1182, 2147483648
  %v1184 = vmul.f32 %v1183, 1.442695
  %v1185 = vpow.pop %v1184
  %v1186 = vadd.f32 %v1185, 1.0
  %v1187 = vrcp.pop %v1186
  %v1188 = vmul.f32 1.0, %v1187
  %v1190 = vrot.slane %v1099, 2
  %v1192 = vadd.f32 %v1190, %v1138
  %v1193 = vxor.u32 %v1192, 2147483648
  %v1194 = vmul.f32 %v1193, 1.442695
  %v1195 = vpow.pop %v1194
  %v1196 = vadd.f32 %v1195, 1.0
  %v1197 = vrcp.pop %v1196
  %v1198 = vmul.f32 1.0, %v1197
  %v1199 = vadd.f32 %v1177, %v105
  %v1200 = vmul.f32 %v1188, %v1199
  %v1201 = vrot.slane %v1099, 4
  %v1203 = vadd.f32 %v1201, %v1200
  %v1204 = vtanh.pop %v1203
  %v1205 = vsub.f32 1.0, %v1198
  %v1206 = vmul.f32 %v1205, %v1204
  %v1207 = vmul.f32 %v1198, %v969
  %v1208 = vadd.f32 %v1206, %v1207
  %v1209 = vsel %vm1098, %v1208, %v969
  %v1210 = vsel %vm1098, %v1208, 0.0
  %s1211 = scalar_lea.vmem %s0, 33
  %v1212 = vld [vmem:[%s1211] sm:$0x7]
  %vm1213 = vcmp.ge.s32.totalorder %v1095, %v97
  %vm1214 = vcmp.lt.s32.totalorder %v1095, %v99
  %vm1215 = vmand %vm1213, %vm1214
  %v1216 = vunpack.c.l.bf16 %v1212
  %v1217 = vpack.c.bf16 %v1086, %v1086
  %1218 = vmatprep.subr.bf16.mxu0 %v452
  %1219 = vmatpush1.bf16.msra.mxu0 %v451
  %1220 = vmatprep.subr.bf16.mxu0 %v455
  %1221 = vmatpush1.bf16.msra.mxu0 %v454
  %1222 = vmatprep.subr.bf16.mxu0 %v458
  %1223 = vmatpush1.bf16.msra.mxu0 %v457
  %1224 = vmatprep.subr.bf16.mxu0 %v461
  %1225 = vmatpush1.bf16.msra.mxu0 %v460
  %1226 = vmatprep.subr.bf16.mxu0 %v464
  %1227 = vmatpush1.bf16.msra.mxu0 %v463
  %1228 = vmatprep.subr.bf16.mxu0 %v467
  %1229 = vmatpush1.bf16.msra.mxu0 %v466
  %1230 = vmatprep.subr.bf16.mxu0 %v470
  %1231 = vmatpush1.bf16.msra.mxu0 %v469
  %1232 = vmatprep.subr.bf16.mxu0 %v473
  %1233 = vmatpush1.bf16.msra.mxu0 %v472
  %1234 = vmatprep.subr.bf16.mxu0 0
  %1235 = vmatpush1.bf16.msra.mxu0 0
  %1236 = vmatprep.subr.bf16.mxu0 0
  %1237 = vmatpush1.bf16.msra.mxu0 0
  %1238 = vmatprep.subr.bf16.mxu0 0
  %1239 = vmatpush1.bf16.msra.mxu0 0
  %1240 = vmatprep.subr.bf16.mxu0 0
  %1241 = vmatpush1.bf16.msra.mxu0 0
  %1242 = vmatprep.subr.bf16.mxu0 0
  %1243 = vmatpush1.bf16.msra.mxu0 0
  %1244 = vmatprep.subr.bf16.mxu0 0
  %1245 = vmatpush1.bf16.msra.mxu0 0
  %1246 = vmatprep.subr.bf16.mxu0 0
  %1247 = vmatpush1.bf16.msra.mxu0 0
  %1248 = vmatprep.subr.bf16.mxu0 0
  %1249 = vmatpush1.bf16.msra.mxu0 0
  %1250 = vmatprep.mubr.bf16.mxu0 0
  %1251 = vmatmul.mubr.bf16.gmra.mrb[0].mxu0 %v1217
  %v1252 = vpop.f32.mrb[0].mxu0
  %v1253 = vadd.f32 0.0, %v1252
  %v1254 = vpop.f32.mrb[0].mxu0
  %v1255 = vadd.f32 0.0, %v1254
  %v1256 = vpop.f32.mrb[0].mxu0
  %v1257 = vpop.f32.mrb[0].mxu0
  %1258 = vdwg.mxu0
  %1259 = vmatprep.subr.bf16.mxu0 0
  %1260 = vmatpush1.bf16.msra.mxu0 %v453
  %1261 = vmatprep.subr.bf16.mxu0 0
  %1262 = vmatpush1.bf16.msra.mxu0 %v456
  %1263 = vmatprep.subr.bf16.mxu0 0
  %1264 = vmatpush1.bf16.msra.mxu0 %v459
  %1265 = vmatprep.subr.bf16.mxu0 0
  %1266 = vmatpush1.bf16.msra.mxu0 %v462
  %1267 = vmatprep.subr.bf16.mxu0 0
  %1268 = vmatpush1.bf16.msra.mxu0 %v465
  %1269 = vmatprep.subr.bf16.mxu0 0
  %1270 = vmatpush1.bf16.msra.mxu0 %v468
  %1271 = vmatprep.subr.bf16.mxu0 0
  %1272 = vmatpush1.bf16.msra.mxu0 %v471
  %1273 = vmatprep.subr.bf16.mxu0 0
  %1274 = vmatpush1.bf16.msra.mxu0 %v474
  %1275 = vmatprep.subr.bf16.mxu0 0
  %1276 = vmatpush1.bf16.msra.mxu0 0
  %1277 = vmatprep.subr.bf16.mxu0 0
  %1278 = vmatpush1.bf16.msra.mxu0 0
  %1279 = vmatprep.subr.bf16.mxu0 0
  %1280 = vmatpush1.bf16.msra.mxu0 0
  %1281 = vmatprep.subr.bf16.mxu0 0
  %1282 = vmatpush1.bf16.msra.mxu0 0
  %1283 = vmatprep.subr.bf16.mxu0 0
  %1284 = vmatpush1.bf16.msra.mxu0 0
  %1285 = vmatprep.subr.bf16.mxu0 0
  %1286 = vmatpush1.bf16.msra.mxu0 0
  %1287 = vmatprep.subr.bf16.mxu0 0
  %1288 = vmatpush1.bf16.msra.mxu0 0
  %1289 = vmatprep.subr.bf16.mxu0 0
  %1290 = vmatpush1.bf16.msra.mxu0 0
  %1291 = vmatprep.mubr.bf16.mxu0 0
  %1292 = vmatmul.mubr.bf16.gmra.mrb[0].mxu0 %v1217
  %v1293 = vpop.f32.mrb[0].mxu0
  %v1294 = vadd.f32 0.0, %v1293
  %v1295 = vpop.f32.mrb[0].mxu0
  %v1296 = vpop.f32.mrb[0].mxu0
  %v1297 = vpop.f32.mrb[0].mxu0
  %1298 = vdwg.mxu0
  %v1299 = vadd.f32 %v1216, %v1253
  %v1300 = vxor.u32 %v1299, 2147483648
  %v1301 = vmul.f32 %v1300, 1.442695
  %v1302 = vpow.pop %v1301
  %v1303 = vadd.f32 %v1302, 1.0
  %v1304 = vrcp.pop %v1303
  %v1305 = vmul.f32 1.0, %v1304
  %v1307 = vrot.slane %v1216, 2
  %v1309 = vadd.f32 %v1307, %v1255
  %v1310 = vxor.u32 %v1309, 2147483648
  %v1311 = vmul.f32 %v1310, 1.442695
  %v1312 = vpow.pop %v1311
  %v1313 = vadd.f32 %v1312, 1.0
  %v1314 = vrcp.pop %v1313
  %v1315 = vmul.f32 1.0, %v1314
  %v1316 = vadd.f32 %v1294, %v113
  %v1317 = vmul.f32 %v1305, %v1316
  %v1318 = vrot.slane %v1216, 4
  %v1320 = vadd.f32 %v1318, %v1317
  %v1321 = vtanh.pop %v1320
  %v1322 = vsub.f32 1.0, %v1315
  %v1323 = vmul.f32 %v1322, %v1321
  %v1324 = vmul.f32 %v1315, %v1086
  %v1325 = vadd.f32 %v1323, %v1324
  %v1326 = vsel %vm1215, %v1325, %v1086
  %v1327 = vsel %vm1215, %v1325, 0.0
  %s1328 = scalar_lea.vmem %s5, 6
  %1329 = vst [vmem:[%s1328] sm:$0x3] %v1210
  %s1330 = scalar_lea.vmem %s5, 22
  %1331 = vst [vmem:[%s1330] sm:$0x3] %v1327
  %s1332 = sadd.s32 %s115, 4
  %s1333 = scalar_lea.vmem %s0, 12
  %v1334 = vld [vmem:[%s1333] sm:$0x7]
  %v1335 = vstv %s1332
  %vm1336 = vcmp.ge.s32.totalorder %v1335, %v94
  %vm1337 = vcmp.lt.s32.totalorder %v1335, %v95
  %vm1338 = vmand %vm1336, %vm1337
  %v1339 = vunpack.c.l.bf16 %v1334
  %v1340 = vpack.c.bf16 %v1209, %v1209
  %1341 = vmatprep.subr.bf16.mxu0 %v207
  %1342 = vmatpush1.bf16.msra.mxu0 %v206
  %1343 = vmatprep.subr.bf16.mxu0 %v210
  %1344 = vmatpush1.bf16.msra.mxu0 %v209
  %1345 = vmatprep.subr.bf16.mxu0 %v213
  %1346 = vmatpush1.bf16.msra.mxu0 %v212
  %1347 = vmatprep.subr.bf16.mxu0 %v216
  %1348 = vmatpush1.bf16.msra.mxu0 %v215
  %1349 = vmatprep.subr.bf16.mxu0 %v219
  %1350 = vmatpush1.bf16.msra.mxu0 %v218
  %1351 = vmatprep.subr.bf16.mxu0 %v222
  %1352 = vmatpush1.bf16.msra.mxu0 %v221
  %1353 = vmatprep.subr.bf16.mxu0 %v225
  %1354 = vmatpush1.bf16.msra.mxu0 %v224
  %1355 = vmatprep.subr.bf16.mxu0 %v228
  %1356 = vmatpush1.bf16.msra.mxu0 %v227
  %1357 = vmatprep.subr.bf16.mxu0 0
  %1358 = vmatpush1.bf16.msra.mxu0 0
  %1359 = vmatprep.subr.bf16.mxu0 0
  %1360 = vmatpush1.bf16.msra.mxu0 0
  %1361 = vmatprep.subr.bf16.mxu0 0
  %1362 = vmatpush1.bf16.msra.mxu0 0
  %1363 = vmatprep.subr.bf16.mxu0 0
  %1364 = vmatpush1.bf16.msra.mxu0 0
  %1365 = vmatprep.subr.bf16.mxu0 0
  %1366 = vmatpush1.bf16.msra.mxu0 0
  %1367 = vmatprep.subr.bf16.mxu0 0
  %1368 = vmatpush1.bf16.msra.mxu0 0
  %1369 = vmatprep.subr.bf16.mxu0 0
  %1370 = vmatpush1.bf16.msra.mxu0 0
  %1371 = vmatprep.subr.bf16.mxu0 0
  %1372 = vmatpush1.bf16.msra.mxu0 0
  %1373 = vmatprep.mubr.bf16.mxu0 0
  %1374 = vmatmul.mubr.bf16.gmra.mrb[0].mxu0 %v1340
  %v1375 = vpop.f32.mrb[0].mxu0
  %v1376 = vadd.f32 0.0, %v1375
  %v1377 = vpop.f32.mrb[0].mxu0
  %v1378 = vadd.f32 0.0, %v1377
  %v1379 = vpop.f32.mrb[0].mxu0
  %v1380 = vpop.f32.mrb[0].mxu0
  %1381 = vdwg.mxu0
  %1382 = vmatprep.subr.bf16.mxu0 0
  %1383 = vmatpush1.bf16.msra.mxu0 %v208
  %1384 = vmatprep.subr.bf16.mxu0 0
  %1385 = vmatpush1.bf16.msra.mxu0 %v211
  %1386 = vmatprep.subr.bf16.mxu0 0
  %1387 = vmatpush1.bf16.msra.mxu0 %v214
  %1388 = vmatprep.subr.bf16.mxu0 0
  %1389 = vmatpush1.bf16.msra.mxu0 %v217
  %1390 = vmatprep.subr.bf16.mxu0 0
  %1391 = vmatpush1.bf16.msra.mxu0 %v220
  %1392 = vmatprep.subr.bf16.mxu0 0
  %1393 = vmatpush1.bf16.msra.mxu0 %v223
  %1394 = vmatprep.subr.bf16.mxu0 0
  %1395 = vmatpush1.bf16.msra.mxu0 %v226
  %1396 = vmatprep.subr.bf16.mxu0 0
  %1397 = vmatpush1.bf16.msra.mxu0 %v229
  %1398 = vmatprep.subr.bf16.mxu0 0
  %1399 = vmatpush1.bf16.msra.mxu0 0
  %1400 = vmatprep.subr.bf16.mxu0 0
  %1401 = vmatpush1.bf16.msra.mxu0 0
  %1402 = vmatprep.subr.bf16.mxu0 0
  %1403 = vmatpush1.bf16.msra.mxu0 0
  %1404 = vmatprep.subr.bf16.mxu0 0
  %1405 = vmatpush1.bf16.msra.mxu0 0
  %1406 = vmatprep.subr.bf16.mxu0 0
  %1407 = vmatpush1.bf16.msra.mxu0 0
  %1408 = vmatprep.subr.bf16.mxu0 0
  %1409 = vmatpush1.bf16.msra.mxu0 0
  %1410 = vmatprep.subr.bf16.mxu0 0
  %1411 = vmatpush1.bf16.msra.mxu0 0
  %1412 = vmatprep.subr.bf16.mxu0 0
  %1413 = vmatpush1.bf16.msra.mxu0 0
  %1414 = vmatprep.mubr.bf16.mxu0 0
  %1415 = vmatmul.mubr.bf16.gmra.mrb[0].mxu0 %v1340
  %v1416 = vpop.f32.mrb[0].mxu0
  %v1417 = vadd.f32 0.0, %v1416
  %v1418 = vpop.f32.mrb[0].mxu0
  %v1419 = vpop.f32.mrb[0].mxu0
  %v1420 = vpop.f32.mrb[0].mxu0
  %1421 = vdwg.mxu0
  %v1422 = vadd.f32 %v1339, %v1376
  %v1423 = vxor.u32 %v1422, 2147483648
  %v1424 = vmul.f32 %v1423, 1.442695
  %v1425 = vpow.pop %v1424
  %v1426 = vadd.f32 %v1425, 1.0
  %v1427 = vrcp.pop %v1426
  %v1428 = vmul.f32 1.0, %v1427
  %v1430 = vrot.slane %v1339, 2
  %v1432 = vadd.f32 %v1430, %v1378
  %v1433 = vxor.u32 %v1432, 2147483648
  %v1434 = vmul.f32 %v1433, 1.442695
  %v1435 = vpow.pop %v1434
  %v1436 = vadd.f32 %v1435, 1.0
  %v1437 = vrcp.pop %v1436
  %v1438 = vmul.f32 1.0, %v1437
  %v1439 = vadd.f32 %v1417, %v105
  %v1440 = vmul.f32 %v1428, %v1439
  %v1441 = vrot.slane %v1339, 4
  %v1443 = vadd.f32 %v1441, %v1440
  %v1444 = vtanh.pop %v1443
  %v1445 = vsub.f32 1.0, %v1438
  %v1446 = vmul.f32 %v1445, %v1444
  %v1447 = vmul.f32 %v1438, %v1209
  %v1448 = vadd.f32 %v1446, %v1447
  %v1449 = vsel %vm1338, %v1448, %v1209
  %v1450 = vsel %vm1338, %v1448, 0.0
  %s1451 = scalar_lea.vmem %s0, 36
  %v1452 = vld [vmem:[%s1451] sm:$0x7]
  %vm1453 = vcmp.ge.s32.totalorder %v1335, %v97
  %vm1454 = vcmp.lt.s32.totalorder %v1335, %v99
  %vm1455 = vmand %vm1453, %vm1454
  %v1456 = vunpack.c.l.bf16 %v1452
  %v1457 = vpack.c.bf16 %v1326, %v1326
  %1458 = vmatprep.subr.bf16.mxu0 %v452
  %1459 = vmatpush1.bf16.msra.mxu0 %v451
  %1460 = vmatprep.subr.bf16.mxu0 %v455
  %1461 = vmatpush1.bf16.msra.mxu0 %v454
  %1462 = vmatprep.subr.bf16.mxu0 %v458
  %1463 = vmatpush1.bf16.msra.mxu0 %v457
  %1464 = vmatprep.subr.bf16.mxu0 %v461
  %1465 = vmatpush1.bf16.msra.mxu0 %v460
  %1466 = vmatprep.subr.bf16.mxu0 %v464
  %1467 = vmatpush1.bf16.msra.mxu0 %v463
  %1468 = vmatprep.subr.bf16.mxu0 %v467
  %1469 = vmatpush1.bf16.msra.mxu0 %v466
  %1470 = vmatprep.subr.bf16.mxu0 %v470
  %1471 = vmatpush1.bf16.msra.mxu0 %v469
  %1472 = vmatprep.subr.bf16.mxu0 %v473
  %1473 = vmatpush1.bf16.msra.mxu0 %v472
  %1474 = vmatprep.subr.bf16.mxu0 0
  %1475 = vmatpush1.bf16.msra.mxu0 0
  %1476 = vmatprep.subr.bf16.mxu0 0
  %1477 = vmatpush1.bf16.msra.mxu0 0
  %1478 = vmatprep.subr.bf16.mxu0 0
  %1479 = vmatpush1.bf16.msra.mxu0 0
  %1480 = vmatprep.subr.bf16.mxu0 0
  %1481 = vmatpush1.bf16.msra.mxu0 0
  %1482 = vmatprep.subr.bf16.mxu0 0
  %1483 = vmatpush1.bf16.msra.mxu0 0
  %1484 = vmatprep.subr.bf16.mxu0 0
  %1485 = vmatpush1.bf16.msra.mxu0 0
  %1486 = vmatprep.subr.bf16.mxu0 0
  %1487 = vmatpush1.bf16.msra.mxu0 0
  %1488 = vmatprep.subr.bf16.mxu0 0
  %1489 = vmatpush1.bf16.msra.mxu0 0
  %1490 = vmatprep.mubr.bf16.mxu0 0
  %1491 = vmatmul.mubr.bf16.gmra.mrb[0].mxu0 %v1457
  %v1492 = vpop.f32.mrb[0].mxu0
  %v1493 = vadd.f32 0.0, %v1492
  %v1494 = vpop.f32.mrb[0].mxu0
  %v1495 = vadd.f32 0.0, %v1494
  %v1496 = vpop.f32.mrb[0].mxu0
  %v1497 = vpop.f32.mrb[0].mxu0
  %1498 = vdwg.mxu0
  %1499 = vmatprep.subr.bf16.mxu0 0
  %1500 = vmatpush1.bf16.msra.mxu0 %v453
  %1501 = vmatprep.subr.bf16.mxu0 0
  %1502 = vmatpush1.bf16.msra.mxu0 %v456
  %1503 = vmatprep.subr.bf16.mxu0 0
  %1504 = vmatpush1.bf16.msra.mxu0 %v459
  %1505 = vmatprep.subr.bf16.mxu0 0
  %1506 = vmatpush1.bf16.msra.mxu0 %v462
  %1507 = vmatprep.subr.bf16.mxu0 0
  %1508 = vmatpush1.bf16.msra.mxu0 %v465
  %1509 = vmatprep.subr.bf16.mxu0 0
  %1510 = vmatpush1.bf16.msra.mxu0 %v468
  %1511 = vmatprep.subr.bf16.mxu0 0
  %1512 = vmatpush1.bf16.msra.mxu0 %v471
  %1513 = vmatprep.subr.bf16.mxu0 0
  %1514 = vmatpush1.bf16.msra.mxu0 %v474
  %1515 = vmatprep.subr.bf16.mxu0 0
  %1516 = vmatpush1.bf16.msra.mxu0 0
  %1517 = vmatprep.subr.bf16.mxu0 0
  %1518 = vmatpush1.bf16.msra.mxu0 0
  %1519 = vmatprep.subr.bf16.mxu0 0
  %1520 = vmatpush1.bf16.msra.mxu0 0
  %1521 = vmatprep.subr.bf16.mxu0 0
  %1522 = vmatpush1.bf16.msra.mxu0 0
  %1523 = vmatprep.subr.bf16.mxu0 0
  %1524 = vmatpush1.bf16.msra.mxu0 0
  %1525 = vmatprep.subr.bf16.mxu0 0
  %1526 = vmatpush1.bf16.msra.mxu0 0
  %1527 = vmatprep.subr.bf16.mxu0 0
  %1528 = vmatpush1.bf16.msra.mxu0 0
  %1529 = vmatprep.subr.bf16.mxu0 0
  %1530 = vmatpush1.bf16.msra.mxu0 0
  %1531 = vmatprep.mubr.bf16.mxu0 0
  %1532 = vmatmul.mubr.bf16.gmra.mrb[0].mxu0 %v1457
  %v1533 = vpop.f32.mrb[0].mxu0
  %v1534 = vadd.f32 0.0, %v1533
  %v1535 = vpop.f32.mrb[0].mxu0
  %v1536 = vpop.f32.mrb[0].mxu0
  %v1537 = vpop.f32.mrb[0].mxu0
  %1538 = vdwg.mxu0
  %v1539 = vadd.f32 %v1456, %v1493
  %v1540 = vxor.u32 %v1539, 2147483648
  %v1541 = vmul.f32 %v1540, 1.442695
  %v1542 = vpow.pop %v1541
  %v1543 = vadd.f32 %v1542, 1.0
  %v1544 = vrcp.pop %v1543
  %v1545 = vmul.f32 1.0, %v1544
  %v1547 = vrot.slane %v1456, 2
  %v1549 = vadd.f32 %v1547, %v1495
  %v1550 = vxor.u32 %v1549, 2147483648
  %v1551 = vmul.f32 %v1550, 1.442695
  %v1552 = vpow.pop %v1551
  %v1553 = vadd.f32 %v1552, 1.0
  %v1554 = vrcp.pop %v1553
  %v1555 = vmul.f32 1.0, %v1554
  %v1556 = vadd.f32 %v1534, %v113
  %v1557 = vmul.f32 %v1545, %v1556
  %v1558 = vrot.slane %v1456, 4
  %v1560 = vadd.f32 %v1558, %v1557
  %v1561 = vtanh.pop %v1560
  %v1562 = vsub.f32 1.0, %v1555
  %v1563 = vmul.f32 %v1562, %v1561
  %v1564 = vmul.f32 %v1555, %v1326
  %v1565 = vadd.f32 %v1563, %v1564
  %v1566 = vsel %vm1455, %v1565, %v1326
  %v1567 = vsel %vm1455, %v1565, 0.0
  %s1568 = scalar_lea.vmem %s5, 8
  %1569 = vst [vmem:[%s1568] sm:$0x3] %v1450
  %s1570 = scalar_lea.vmem %s5, 24
  %1571 = vst [vmem:[%s1570] sm:$0x3] %v1567
  %s1572 = sadd.s32 %s115, 5
  %s1573 = scalar_lea.vmem %s0, 15
  %v1574 = vld [vmem:[%s1573] sm:$0x7]
  %v1575 = vstv %s1572
  %vm1576 = vcmp.ge.s32.totalorder %v1575, %v94
  %vm1577 = vcmp.lt.s32.totalorder %v1575, %v95
  %vm1578 = vmand %vm1576, %vm1577
  %v1579 = vunpack.c.l.bf16 %v1574
  %v1580 = vpack.c.bf16 %v1449, %v1449
  %1581 = vmatprep.subr.bf16.mxu0 %v207
  %1582 = vmatpush1.bf16.msra.mxu0 %v206
  %1583 = vmatprep.subr.bf16.mxu0 %v210
  %1584 = vmatpush1.bf16.msra.mxu0 %v209
  %1585 = vmatprep.subr.bf16.mxu0 %v213
  %1586 = vmatpush1.bf16.msra.mxu0 %v212
  %1587 = vmatprep.subr.bf16.mxu0 %v216
  %1588 = vmatpush1.bf16.msra.mxu0 %v215
  %1589 = vmatprep.subr.bf16.mxu0 %v219
  %1590 = vmatpush1.bf16.msra.mxu0 %v218
  %1591 = vmatprep.subr.bf16.mxu0 %v222
  %1592 = vmatpush1.bf16.msra.mxu0 %v221
  %1593 = vmatprep.subr.bf16.mxu0 %v225
  %1594 = vmatpush1.bf16.msra.mxu0 %v224
  %1595 = vmatprep.subr.bf16.mxu0 %v228
  %1596 = vmatpush1.bf16.msra.mxu0 %v227
  %1597 = vmatprep.subr.bf16.mxu0 0
  %1598 = vmatpush1.bf16.msra.mxu0 0
  %1599 = vmatprep.subr.bf16.mxu0 0
  %1600 = vmatpush1.bf16.msra.mxu0 0
  %1601 = vmatprep.subr.bf16.mxu0 0
  %1602 = vmatpush1.bf16.msra.mxu0 0
  %1603 = vmatprep.subr.bf16.mxu0 0
  %1604 = vmatpush1.bf16.msra.mxu0 0
  %1605 = vmatprep.subr.bf16.mxu0 0
  %1606 = vmatpush1.bf16.msra.mxu0 0
  %1607 = vmatprep.subr.bf16.mxu0 0
  %1608 = vmatpush1.bf16.msra.mxu0 0
  %1609 = vmatprep.subr.bf16.mxu0 0
  %1610 = vmatpush1.bf16.msra.mxu0 0
  %1611 = vmatprep.subr.bf16.mxu0 0
  %1612 = vmatpush1.bf16.msra.mxu0 0
  %1613 = vmatprep.mubr.bf16.mxu0 0
  %1614 = vmatmul.mubr.bf16.gmra.mrb[0].mxu0 %v1580
  %v1615 = vpop.f32.mrb[0].mxu0
  %v1616 = vadd.f32 0.0, %v1615
  %v1617 = vpop.f32.mrb[0].mxu0
  %v1618 = vadd.f32 0.0, %v1617
  %v1619 = vpop.f32.mrb[0].mxu0
  %v1620 = vpop.f32.mrb[0].mxu0
  %1621 = vdwg.mxu0
  %1622 = vmatprep.subr.bf16.mxu0 0
  %1623 = vmatpush1.bf16.msra.mxu0 %v208
  %1624 = vmatprep.subr.bf16.mxu0 0
  %1625 = vmatpush1.bf16.msra.mxu0 %v211
  %1626 = vmatprep.subr.bf16.mxu0 0
  %1627 = vmatpush1.bf16.msra.mxu0 %v214
  %1628 = vmatprep.subr.bf16.mxu0 0
  %1629 = vmatpush1.bf16.msra.mxu0 %v217
  %1630 = vmatprep.subr.bf16.mxu0 0
  %1631 = vmatpush1.bf16.msra.mxu0 %v220
  %1632 = vmatprep.subr.bf16.mxu0 0
  %1633 = vmatpush1.bf16.msra.mxu0 %v223
  %1634 = vmatprep.subr.bf16.mxu0 0
  %1635 = vmatpush1.bf16.msra.mxu0 %v226
  %1636 = vmatprep.subr.bf16.mxu0 0
  %1637 = vmatpush1.bf16.msra.mxu0 %v229
  %1638 = vmatprep.subr.bf16.mxu0 0
  %1639 = vmatpush1.bf16.msra.mxu0 0
  %1640 = vmatprep.subr.bf16.mxu0 0
  %1641 = vmatpush1.bf16.msra.mxu0 0
  %1642 = vmatprep.subr.bf16.mxu0 0
  %1643 = vmatpush1.bf16.msra.mxu0 0
  %1644 = vmatprep.subr.bf16.mxu0 0
  %1645 = vmatpush1.bf16.msra.mxu0 0
  %1646 = vmatprep.subr.bf16.mxu0 0
  %1647 = vmatpush1.bf16.msra.mxu0 0
  %1648 = vmatprep.subr.bf16.mxu0 0
  %1649 = vmatpush1.bf16.msra.mxu0 0
  %1650 = vmatprep.subr.bf16.mxu0 0
  %1651 = vmatpush1.bf16.msra.mxu0 0
  %1652 = vmatprep.subr.bf16.mxu0 0
  %1653 = vmatpush1.bf16.msra.mxu0 0
  %1654 = vmatprep.mubr.bf16.mxu0 0
  %1655 = vmatmul.mubr.bf16.gmra.mrb[0].mxu0 %v1580
  %v1656 = vpop.f32.mrb[0].mxu0
  %v1657 = vadd.f32 0.0, %v1656
  %v1658 = vpop.f32.mrb[0].mxu0
  %v1659 = vpop.f32.mrb[0].mxu0
  %v1660 = vpop.f32.mrb[0].mxu0
  %1661 = vdwg.mxu0
  %v1662 = vadd.f32 %v1579, %v1616
  %v1663 = vxor.u32 %v1662, 2147483648
  %v1664 = vmul.f32 %v1663, 1.442695
  %v1665 = vpow.pop %v1664
  %v1666 = vadd.f32 %v1665, 1.0
  %v1667 = vrcp.pop %v1666
  %v1668 = vmul.f32 1.0, %v1667
  %v1670 = vrot.slane %v1579, 2
  %v1672 = vadd.f32 %v1670, %v1618
  %v1673 = vxor.u32 %v1672, 2147483648
  %v1674 = vmul.f32 %v1673, 1.442695
  %v1675 = vpow.pop %v1674
  %v1676 = vadd.f32 %v1675, 1.0
  %v1677 = vrcp.pop %v1676
  %v1678 = vmul.f32 1.0, %v1677
  %v1679 = vadd.f32 %v1657, %v105
  %v1680 = vmul.f32 %v1668, %v1679
  %v1681 = vrot.slane %v1579, 4
  %v1683 = vadd.f32 %v1681, %v1680
  %v1684 = vtanh.pop %v1683
  %v1685 = vsub.f32 1.0, %v1678
  %v1686 = vmul.f32 %v1685, %v1684
  %v1687 = vmul.f32 %v1678, %v1449
  %v1688 = vadd.f32 %v1686, %v1687
  %v1689 = vsel %vm1578, %v1688, %v1449
  %v1690 = vsel %vm1578, %v1688, 0.0
  %s1691 = scalar_lea.vmem %s0, 39
  %v1692 = vld [vmem:[%s1691] sm:$0x7]
  %vm1693 = vcmp.ge.s32.totalorder %v1575, %v97
  %vm1694 = vcmp.lt.s32.totalorder %v1575, %v99
  %vm1695 = vmand %vm1693, %vm1694
  %v1696 = vunpack.c.l.bf16 %v1692
  %v1697 = vpack.c.bf16 %v1566, %v1566
  %1698 = vmatprep.subr.bf16.mxu0 %v452
  %1699 = vmatpush1.bf16.msra.mxu0 %v451
  %1700 = vmatprep.subr.bf16.mxu0 %v455
  %1701 = vmatpush1.bf16.msra.mxu0 %v454
  %1702 = vmatprep.subr.bf16.mxu0 %v458
  %1703 = vmatpush1.bf16.msra.mxu0 %v457
  %1704 = vmatprep.subr.bf16.mxu0 %v461
  %1705 = vmatpush1.bf16.msra.mxu0 %v460
  %1706 = vmatprep.subr.bf16.mxu0 %v464
  %1707 = vmatpush1.bf16.msra.mxu0 %v463
  %1708 = vmatprep.subr.bf16.mxu0 %v467
  %1709 = vmatpush1.bf16.msra.mxu0 %v466
  %1710 = vmatprep.subr.bf16.mxu0 %v470
  %1711 = vmatpush1.bf16.msra.mxu0 %v469
  %1712 = vmatprep.subr.bf16.mxu0 %v473
  %1713 = vmatpush1.bf16.msra.mxu0 %v472
  %1714 = vmatprep.subr.bf16.mxu0 0
  %1715 = vmatpush1.bf16.msra.mxu0 0
  %1716 = vmatprep.subr.bf16.mxu0 0
  %1717 = vmatpush1.bf16.msra.mxu0 0
  %1718 = vmatprep.subr.bf16.mxu0 0
  %1719 = vmatpush1.bf16.msra.mxu0 0
  %1720 = vmatprep.subr.bf16.mxu0 0
  %1721 = vmatpush1.bf16.msra.mxu0 0
  %1722 = vmatprep.subr.bf16.mxu0 0
  %1723 = vmatpush1.bf16.msra.mxu0 0
  %1724 = vmatprep.subr.bf16.mxu0 0
  %1725 = vmatpush1.bf16.msra.mxu0 0
  %1726 = vmatprep.subr.bf16.mxu0 0
  %1727 = vmatpush1.bf16.msra.mxu0 0
  %1728 = vmatprep.subr.bf16.mxu0 0
  %1729 = vmatpush1.bf16.msra.mxu0 0
  %1730 = vmatprep.mubr.bf16.mxu0 0
  %1731 = vmatmul.mubr.bf16.gmra.mrb[0].mxu0 %v1697
  %v1732 = vpop.f32.mrb[0].mxu0
  %v1733 = vadd.f32 0.0, %v1732
  %v1734 = vpop.f32.mrb[0].mxu0
  %v1735 = vadd.f32 0.0, %v1734
  %v1736 = vpop.f32.mrb[0].mxu0
  %v1737 = vpop.f32.mrb[0].mxu0
  %1738 = vdwg.mxu0
  %1739 = vmatprep.subr.bf16.mxu0 0
  %1740 = vmatpush1.bf16.msra.mxu0 %v453
  %1741 = vmatprep.subr.bf16.mxu0 0
  %1742 = vmatpush1.bf16.msra.mxu0 %v456
  %1743 = vmatprep.subr.bf16.mxu0 0
  %1744 = vmatpush1.bf16.msra.mxu0 %v459
  %1745 = vmatprep.subr.bf16.mxu0 0
  %1746 = vmatpush1.bf16.msra.mxu0 %v462
  %1747 = vmatprep.subr.bf16.mxu0 0
  %1748 = vmatpush1.bf16.msra.mxu0 %v465
  %1749 = vmatprep.subr.bf16.mxu0 0
  %1750 = vmatpush1.bf16.msra.mxu0 %v468
  %1751 = vmatprep.subr.bf16.mxu0 0
  %1752 = vmatpush1.bf16.msra.mxu0 %v471
  %1753 = vmatprep.subr.bf16.mxu0 0
  %1754 = vmatpush1.bf16.msra.mxu0 %v474
  %1755 = vmatprep.subr.bf16.mxu0 0
  %1756 = vmatpush1.bf16.msra.mxu0 0
  %1757 = vmatprep.subr.bf16.mxu0 0
  %1758 = vmatpush1.bf16.msra.mxu0 0
  %1759 = vmatprep.subr.bf16.mxu0 0
  %1760 = vmatpush1.bf16.msra.mxu0 0
  %1761 = vmatprep.subr.bf16.mxu0 0
  %1762 = vmatpush1.bf16.msra.mxu0 0
  %1763 = vmatprep.subr.bf16.mxu0 0
  %1764 = vmatpush1.bf16.msra.mxu0 0
  %1765 = vmatprep.subr.bf16.mxu0 0
  %1766 = vmatpush1.bf16.msra.mxu0 0
  %1767 = vmatprep.subr.bf16.mxu0 0
  %1768 = vmatpush1.bf16.msra.mxu0 0
  %1769 = vmatprep.subr.bf16.mxu0 0
  %1770 = vmatpush1.bf16.msra.mxu0 0
  %1771 = vmatprep.mubr.bf16.mxu0 0
  %1772 = vmatmul.mubr.bf16.gmra.mrb[0].mxu0 %v1697
  %v1773 = vpop.f32.mrb[0].mxu0
  %v1774 = vadd.f32 0.0, %v1773
  %v1775 = vpop.f32.mrb[0].mxu0
  %v1776 = vpop.f32.mrb[0].mxu0
  %v1777 = vpop.f32.mrb[0].mxu0
  %1778 = vdwg.mxu0
  %v1779 = vadd.f32 %v1696, %v1733
  %v1780 = vxor.u32 %v1779, 2147483648
  %v1781 = vmul.f32 %v1780, 1.442695
  %v1782 = vpow.pop %v1781
  %v1783 = vadd.f32 %v1782, 1.0
  %v1784 = vrcp.pop %v1783
  %v1785 = vmul.f32 1.0, %v1784
  %v1787 = vrot.slane %v1696, 2
  %v1789 = vadd.f32 %v1787, %v1735
  %v1790 = vxor.u32 %v1789, 2147483648
  %v1791 = vmul.f32 %v1790, 1.442695
  %v1792 = vpow.pop %v1791
  %v1793 = vadd.f32 %v1792, 1.0
  %v1794 = vrcp.pop %v1793
  %v1795 = vmul.f32 1.0, %v1794
  %v1796 = vadd.f32 %v1774, %v113
  %v1797 = vmul.f32 %v1785, %v1796
  %v1798 = vrot.slane %v1696, 4
  %v1800 = vadd.f32 %v1798, %v1797
  %v1801 = vtanh.pop %v1800
  %v1802 = vsub.f32 1.0, %v1795
  %v1803 = vmul.f32 %v1802, %v1801
  %v1804 = vmul.f32 %v1795, %v1566
  %v1805 = vadd.f32 %v1803, %v1804
  %v1806 = vsel %vm1695, %v1805, %v1566
  %v1807 = vsel %vm1695, %v1805, 0.0
  %s1808 = scalar_lea.vmem %s5, 10
  %1809 = vst [vmem:[%s1808] sm:$0x3] %v1690
  %s1810 = scalar_lea.vmem %s5, 26
  %1811 = vst [vmem:[%s1810] sm:$0x3] %v1807
  %s1812 = sadd.s32 %s115, 6
  %s1813 = scalar_lea.vmem %s0, 18
  %v1814 = vld [vmem:[%s1813] sm:$0x7]
  %v1815 = vstv %s1812
  %vm1816 = vcmp.ge.s32.totalorder %v1815, %v94
  %vm1817 = vcmp.lt.s32.totalorder %v1815, %v95
  %vm1818 = vmand %vm1816, %vm1817
  %v1819 = vunpack.c.l.bf16 %v1814
  %v1820 = vpack.c.bf16 %v1689, %v1689
  %1821 = vmatprep.subr.bf16.mxu0 %v207
  %1822 = vmatpush1.bf16.msra.mxu0 %v206
  %1823 = vmatprep.subr.bf16.mxu0 %v210
  %1824 = vmatpush1.bf16.msra.mxu0 %v209
  %1825 = vmatprep.subr.bf16.mxu0 %v213
  %1826 = vmatpush1.bf16.msra.mxu0 %v212
  %1827 = vmatprep.subr.bf16.mxu0 %v216
  %1828 = vmatpush1.bf16.msra.mxu0 %v215
  %1829 = vmatprep.subr.bf16.mxu0 %v219
  %1830 = vmatpush1.bf16.msra.mxu0 %v218
  %1831 = vmatprep.subr.bf16.mxu0 %v222
  %1832 = vmatpush1.bf16.msra.mxu0 %v221
  %1833 = vmatprep.subr.bf16.mxu0 %v225
  %1834 = vmatpush1.bf16.msra.mxu0 %v224
  %1835 = vmatprep.subr.bf16.mxu0 %v228
  %1836 = vmatpush1.bf16.msra.mxu0 %v227
  %1837 = vmatprep.subr.bf16.mxu0 0
  %1838 = vmatpush1.bf16.msra.mxu0 0
  %1839 = vmatprep.subr.bf16.mxu0 0
  %1840 = vmatpush1.bf16.msra.mxu0 0
  %1841 = vmatprep.subr.bf16.mxu0 0
  %1842 = vmatpush1.bf16.msra.mxu0 0
  %1843 = vmatprep.subr.bf16.mxu0 0
  %1844 = vmatpush1.bf16.msra.mxu0 0
  %1845 = vmatprep.subr.bf16.mxu0 0
  %1846 = vmatpush1.bf16.msra.mxu0 0
  %1847 = vmatprep.subr.bf16.mxu0 0
  %1848 = vmatpush1.bf16.msra.mxu0 0
  %1849 = vmatprep.subr.bf16.mxu0 0
  %1850 = vmatpush1.bf16.msra.mxu0 0
  %1851 = vmatprep.subr.bf16.mxu0 0
  %1852 = vmatpush1.bf16.msra.mxu0 0
  %1853 = vmatprep.mubr.bf16.mxu0 0
  %1854 = vmatmul.mubr.bf16.gmra.mrb[0].mxu0 %v1820
  %v1855 = vpop.f32.mrb[0].mxu0
  %v1856 = vadd.f32 0.0, %v1855
  %v1857 = vpop.f32.mrb[0].mxu0
  %v1858 = vadd.f32 0.0, %v1857
  %v1859 = vpop.f32.mrb[0].mxu0
  %v1860 = vpop.f32.mrb[0].mxu0
  %1861 = vdwg.mxu0
  %1862 = vmatprep.subr.bf16.mxu0 0
  %1863 = vmatpush1.bf16.msra.mxu0 %v208
  %1864 = vmatprep.subr.bf16.mxu0 0
  %1865 = vmatpush1.bf16.msra.mxu0 %v211
  %1866 = vmatprep.subr.bf16.mxu0 0
  %1867 = vmatpush1.bf16.msra.mxu0 %v214
  %1868 = vmatprep.subr.bf16.mxu0 0
  %1869 = vmatpush1.bf16.msra.mxu0 %v217
  %1870 = vmatprep.subr.bf16.mxu0 0
  %1871 = vmatpush1.bf16.msra.mxu0 %v220
  %1872 = vmatprep.subr.bf16.mxu0 0
  %1873 = vmatpush1.bf16.msra.mxu0 %v223
  %1874 = vmatprep.subr.bf16.mxu0 0
  %1875 = vmatpush1.bf16.msra.mxu0 %v226
  %1876 = vmatprep.subr.bf16.mxu0 0
  %1877 = vmatpush1.bf16.msra.mxu0 %v229
  %1878 = vmatprep.subr.bf16.mxu0 0
  %1879 = vmatpush1.bf16.msra.mxu0 0
  %1880 = vmatprep.subr.bf16.mxu0 0
  %1881 = vmatpush1.bf16.msra.mxu0 0
  %1882 = vmatprep.subr.bf16.mxu0 0
  %1883 = vmatpush1.bf16.msra.mxu0 0
  %1884 = vmatprep.subr.bf16.mxu0 0
  %1885 = vmatpush1.bf16.msra.mxu0 0
  %1886 = vmatprep.subr.bf16.mxu0 0
  %1887 = vmatpush1.bf16.msra.mxu0 0
  %1888 = vmatprep.subr.bf16.mxu0 0
  %1889 = vmatpush1.bf16.msra.mxu0 0
  %1890 = vmatprep.subr.bf16.mxu0 0
  %1891 = vmatpush1.bf16.msra.mxu0 0
  %1892 = vmatprep.subr.bf16.mxu0 0
  %1893 = vmatpush1.bf16.msra.mxu0 0
  %1894 = vmatprep.mubr.bf16.mxu0 0
  %1895 = vmatmul.mubr.bf16.gmra.mrb[0].mxu0 %v1820
  %v1896 = vpop.f32.mrb[0].mxu0
  %v1897 = vadd.f32 0.0, %v1896
  %v1898 = vpop.f32.mrb[0].mxu0
  %v1899 = vpop.f32.mrb[0].mxu0
  %v1900 = vpop.f32.mrb[0].mxu0
  %1901 = vdwg.mxu0
  %v1902 = vadd.f32 %v1819, %v1856
  %v1903 = vxor.u32 %v1902, 2147483648
  %v1904 = vmul.f32 %v1903, 1.442695
  %v1905 = vpow.pop %v1904
  %v1906 = vadd.f32 %v1905, 1.0
  %v1907 = vrcp.pop %v1906
  %v1908 = vmul.f32 1.0, %v1907
  %v1910 = vrot.slane %v1819, 2
  %v1912 = vadd.f32 %v1910, %v1858
  %v1913 = vxor.u32 %v1912, 2147483648
  %v1914 = vmul.f32 %v1913, 1.442695
  %v1915 = vpow.pop %v1914
  %v1916 = vadd.f32 %v1915, 1.0
  %v1917 = vrcp.pop %v1916
  %v1918 = vmul.f32 1.0, %v1917
  %v1919 = vadd.f32 %v1897, %v105
  %v1920 = vmul.f32 %v1908, %v1919
  %v1921 = vrot.slane %v1819, 4
  %v1923 = vadd.f32 %v1921, %v1920
  %v1924 = vtanh.pop %v1923
  %v1925 = vsub.f32 1.0, %v1918
  %v1926 = vmul.f32 %v1925, %v1924
  %v1927 = vmul.f32 %v1918, %v1689
  %v1928 = vadd.f32 %v1926, %v1927
  %v1929 = vsel %vm1818, %v1928, %v1689
  %v1930 = vsel %vm1818, %v1928, 0.0
  %s1931 = scalar_lea.vmem %s0, 42
  %v1932 = vld [vmem:[%s1931] sm:$0x7]
  %vm1933 = vcmp.ge.s32.totalorder %v1815, %v97
  %vm1934 = vcmp.lt.s32.totalorder %v1815, %v99
  %vm1935 = vmand %vm1933, %vm1934
  %v1936 = vunpack.c.l.bf16 %v1932
  %v1937 = vpack.c.bf16 %v1806, %v1806
  %1938 = vmatprep.subr.bf16.mxu0 %v452
  %1939 = vmatpush1.bf16.msra.mxu0 %v451
  %1940 = vmatprep.subr.bf16.mxu0 %v455
  %1941 = vmatpush1.bf16.msra.mxu0 %v454
  %1942 = vmatprep.subr.bf16.mxu0 %v458
  %1943 = vmatpush1.bf16.msra.mxu0 %v457
  %1944 = vmatprep.subr.bf16.mxu0 %v461
  %1945 = vmatpush1.bf16.msra.mxu0 %v460
  %1946 = vmatprep.subr.bf16.mxu0 %v464
  %1947 = vmatpush1.bf16.msra.mxu0 %v463
  %1948 = vmatprep.subr.bf16.mxu0 %v467
  %1949 = vmatpush1.bf16.msra.mxu0 %v466
  %1950 = vmatprep.subr.bf16.mxu0 %v470
  %1951 = vmatpush1.bf16.msra.mxu0 %v469
  %1952 = vmatprep.subr.bf16.mxu0 %v473
  %1953 = vmatpush1.bf16.msra.mxu0 %v472
  %1954 = vmatprep.subr.bf16.mxu0 0
  %1955 = vmatpush1.bf16.msra.mxu0 0
  %1956 = vmatprep.subr.bf16.mxu0 0
  %1957 = vmatpush1.bf16.msra.mxu0 0
  %1958 = vmatprep.subr.bf16.mxu0 0
  %1959 = vmatpush1.bf16.msra.mxu0 0
  %1960 = vmatprep.subr.bf16.mxu0 0
  %1961 = vmatpush1.bf16.msra.mxu0 0
  %1962 = vmatprep.subr.bf16.mxu0 0
  %1963 = vmatpush1.bf16.msra.mxu0 0
  %1964 = vmatprep.subr.bf16.mxu0 0
  %1965 = vmatpush1.bf16.msra.mxu0 0
  %1966 = vmatprep.subr.bf16.mxu0 0
  %1967 = vmatpush1.bf16.msra.mxu0 0
  %1968 = vmatprep.subr.bf16.mxu0 0
  %1969 = vmatpush1.bf16.msra.mxu0 0
  %1970 = vmatprep.mubr.bf16.mxu0 0
  %1971 = vmatmul.mubr.bf16.gmra.mrb[0].mxu0 %v1937
  %v1972 = vpop.f32.mrb[0].mxu0
  %v1973 = vadd.f32 0.0, %v1972
  %v1974 = vpop.f32.mrb[0].mxu0
  %v1975 = vadd.f32 0.0, %v1974
  %v1976 = vpop.f32.mrb[0].mxu0
  %v1977 = vpop.f32.mrb[0].mxu0
  %1978 = vdwg.mxu0
  %1979 = vmatprep.subr.bf16.mxu0 0
  %1980 = vmatpush1.bf16.msra.mxu0 %v453
  %1981 = vmatprep.subr.bf16.mxu0 0
  %1982 = vmatpush1.bf16.msra.mxu0 %v456
  %1983 = vmatprep.subr.bf16.mxu0 0
  %1984 = vmatpush1.bf16.msra.mxu0 %v459
  %1985 = vmatprep.subr.bf16.mxu0 0
  %1986 = vmatpush1.bf16.msra.mxu0 %v462
  %1987 = vmatprep.subr.bf16.mxu0 0
  %1988 = vmatpush1.bf16.msra.mxu0 %v465
  %1989 = vmatprep.subr.bf16.mxu0 0
  %1990 = vmatpush1.bf16.msra.mxu0 %v468
  %1991 = vmatprep.subr.bf16.mxu0 0
  %1992 = vmatpush1.bf16.msra.mxu0 %v471
  %1993 = vmatprep.subr.bf16.mxu0 0
  %1994 = vmatpush1.bf16.msra.mxu0 %v474
  %1995 = vmatprep.subr.bf16.mxu0 0
  %1996 = vmatpush1.bf16.msra.mxu0 0
  %1997 = vmatprep.subr.bf16.mxu0 0
  %1998 = vmatpush1.bf16.msra.mxu0 0
  %1999 = vmatprep.subr.bf16.mxu0 0
  %2000 = vmatpush1.bf16.msra.mxu0 0
  %2001 = vmatprep.subr.bf16.mxu0 0
  %2002 = vmatpush1.bf16.msra.mxu0 0
  %2003 = vmatprep.subr.bf16.mxu0 0
  %2004 = vmatpush1.bf16.msra.mxu0 0
  %2005 = vmatprep.subr.bf16.mxu0 0
  %2006 = vmatpush1.bf16.msra.mxu0 0
  %2007 = vmatprep.subr.bf16.mxu0 0
  %2008 = vmatpush1.bf16.msra.mxu0 0
  %2009 = vmatprep.subr.bf16.mxu0 0
  %2010 = vmatpush1.bf16.msra.mxu0 0
  %2011 = vmatprep.mubr.bf16.mxu0 0
  %2012 = vmatmul.mubr.bf16.gmra.mrb[0].mxu0 %v1937
  %v2013 = vpop.f32.mrb[0].mxu0
  %v2014 = vadd.f32 0.0, %v2013
  %v2015 = vpop.f32.mrb[0].mxu0
  %v2016 = vpop.f32.mrb[0].mxu0
  %v2017 = vpop.f32.mrb[0].mxu0
  %2018 = vdwg.mxu0
  %v2019 = vadd.f32 %v1936, %v1973
  %v2020 = vxor.u32 %v2019, 2147483648
  %v2021 = vmul.f32 %v2020, 1.442695
  %v2022 = vpow.pop %v2021
  %v2023 = vadd.f32 %v2022, 1.0
  %v2024 = vrcp.pop %v2023
  %v2025 = vmul.f32 1.0, %v2024
  %v2027 = vrot.slane %v1936, 2
  %v2029 = vadd.f32 %v2027, %v1975
  %v2030 = vxor.u32 %v2029, 2147483648
  %v2031 = vmul.f32 %v2030, 1.442695
  %v2032 = vpow.pop %v2031
  %v2033 = vadd.f32 %v2032, 1.0
  %v2034 = vrcp.pop %v2033
  %v2035 = vmul.f32 1.0, %v2034
  %v2036 = vadd.f32 %v2014, %v113
  %v2037 = vmul.f32 %v2025, %v2036
  %v2038 = vrot.slane %v1936, 4
  %v2040 = vadd.f32 %v2038, %v2037
  %v2041 = vtanh.pop %v2040
  %v2042 = vsub.f32 1.0, %v2035
  %v2043 = vmul.f32 %v2042, %v2041
  %v2044 = vmul.f32 %v2035, %v1806
  %v2045 = vadd.f32 %v2043, %v2044
  %v2046 = vsel %vm1935, %v2045, %v1806
  %v2047 = vsel %vm1935, %v2045, 0.0
  %s2048 = scalar_lea.vmem %s5, 12
  %2049 = vst [vmem:[%s2048] sm:$0x3] %v1930
  %s2050 = scalar_lea.vmem %s5, 28
  %2051 = vst [vmem:[%s2050] sm:$0x3] %v2047
  %s2052 = sadd.s32 %s115, 7
  %s2053 = scalar_lea.vmem %s0, 21
  %v2054 = vld [vmem:[%s2053] sm:$0x7]
  %v2055 = vstv %s2052
  %vm2056 = vcmp.ge.s32.totalorder %v2055, %v94
  %vm2057 = vcmp.lt.s32.totalorder %v2055, %v95
  %vm2058 = vmand %vm2056, %vm2057
  %v2059 = vunpack.c.l.bf16 %v2054
  %v2060 = vpack.c.bf16 %v1929, %v1929
  %2061 = vmatprep.subr.bf16.mxu0 %v207
  %2062 = vmatpush1.bf16.msra.mxu0 %v206
  %2063 = vmatprep.subr.bf16.mxu0 %v210
  %2064 = vmatpush1.bf16.msra.mxu0 %v209
  %2065 = vmatprep.subr.bf16.mxu0 %v213
  %2066 = vmatpush1.bf16.msra.mxu0 %v212
  %2067 = vmatprep.subr.bf16.mxu0 %v216
  %2068 = vmatpush1.bf16.msra.mxu0 %v215
  %2069 = vmatprep.subr.bf16.mxu0 %v219
  %2070 = vmatpush1.bf16.msra.mxu0 %v218
  %2071 = vmatprep.subr.bf16.mxu0 %v222
  %2072 = vmatpush1.bf16.msra.mxu0 %v221
  %2073 = vmatprep.subr.bf16.mxu0 %v225
  %2074 = vmatpush1.bf16.msra.mxu0 %v224
  %2075 = vmatprep.subr.bf16.mxu0 %v228
  %2076 = vmatpush1.bf16.msra.mxu0 %v227
  %2077 = vmatprep.subr.bf16.mxu0 0
  %2078 = vmatpush1.bf16.msra.mxu0 0
  %2079 = vmatprep.subr.bf16.mxu0 0
  %2080 = vmatpush1.bf16.msra.mxu0 0
  %2081 = vmatprep.subr.bf16.mxu0 0
  %2082 = vmatpush1.bf16.msra.mxu0 0
  %2083 = vmatprep.subr.bf16.mxu0 0
  %2084 = vmatpush1.bf16.msra.mxu0 0
  %2085 = vmatprep.subr.bf16.mxu0 0
  %2086 = vmatpush1.bf16.msra.mxu0 0
  %2087 = vmatprep.subr.bf16.mxu0 0
  %2088 = vmatpush1.bf16.msra.mxu0 0
  %2089 = vmatprep.subr.bf16.mxu0 0
  %2090 = vmatpush1.bf16.msra.mxu0 0
  %2091 = vmatprep.subr.bf16.mxu0 0
  %2092 = vmatpush1.bf16.msra.mxu0 0
  %2093 = vmatprep.mubr.bf16.mxu0 0
  %2094 = vmatmul.mubr.bf16.gmra.mrb[0].mxu0 %v2060
  %v2095 = vpop.f32.mrb[0].mxu0
  %v2096 = vadd.f32 0.0, %v2095
  %v2097 = vpop.f32.mrb[0].mxu0
  %v2098 = vadd.f32 0.0, %v2097
  %v2099 = vpop.f32.mrb[0].mxu0
  %v2100 = vpop.f32.mrb[0].mxu0
  %2101 = vdwg.mxu0
  %2102 = vmatprep.subr.bf16.mxu0 0
  %2103 = vmatpush1.bf16.msra.mxu0 %v208
  %2104 = vmatprep.subr.bf16.mxu0 0
  %2105 = vmatpush1.bf16.msra.mxu0 %v211
  %2106 = vmatprep.subr.bf16.mxu0 0
  %2107 = vmatpush1.bf16.msra.mxu0 %v214
  %2108 = vmatprep.subr.bf16.mxu0 0
  %2109 = vmatpush1.bf16.msra.mxu0 %v217
  %2110 = vmatprep.subr.bf16.mxu0 0
  %2111 = vmatpush1.bf16.msra.mxu0 %v220
  %2112 = vmatprep.subr.bf16.mxu0 0
  %2113 = vmatpush1.bf16.msra.mxu0 %v223
  %2114 = vmatprep.subr.bf16.mxu0 0
  %2115 = vmatpush1.bf16.msra.mxu0 %v226
  %2116 = vmatprep.subr.bf16.mxu0 0
  %2117 = vmatpush1.bf16.msra.mxu0 %v229
  %2118 = vmatprep.subr.bf16.mxu0 0
  %2119 = vmatpush1.bf16.msra.mxu0 0
  %2120 = vmatprep.subr.bf16.mxu0 0
  %2121 = vmatpush1.bf16.msra.mxu0 0
  %2122 = vmatprep.subr.bf16.mxu0 0
  %2123 = vmatpush1.bf16.msra.mxu0 0
  %2124 = vmatprep.subr.bf16.mxu0 0
  %2125 = vmatpush1.bf16.msra.mxu0 0
  %2126 = vmatprep.subr.bf16.mxu0 0
  %2127 = vmatpush1.bf16.msra.mxu0 0
  %2128 = vmatprep.subr.bf16.mxu0 0
  %2129 = vmatpush1.bf16.msra.mxu0 0
  %2130 = vmatprep.subr.bf16.mxu0 0
  %2131 = vmatpush1.bf16.msra.mxu0 0
  %2132 = vmatprep.subr.bf16.mxu0 0
  %2133 = vmatpush1.bf16.msra.mxu0 0
  %2134 = vmatprep.mubr.bf16.mxu0 0
  %2135 = vmatmul.mubr.bf16.gmra.mrb[0].mxu0 %v2060
  %v2136 = vpop.f32.mrb[0].mxu0
  %v2137 = vadd.f32 0.0, %v2136
  %v2138 = vpop.f32.mrb[0].mxu0
  %v2139 = vpop.f32.mrb[0].mxu0
  %v2140 = vpop.f32.mrb[0].mxu0
  %2141 = vdwg.mxu0
  %v2142 = vadd.f32 %v2059, %v2096
  %v2143 = vxor.u32 %v2142, 2147483648
  %v2144 = vmul.f32 %v2143, 1.442695
  %v2145 = vpow.pop %v2144
  %v2146 = vadd.f32 %v2145, 1.0
  %v2147 = vrcp.pop %v2146
  %v2148 = vmul.f32 1.0, %v2147
  %v2150 = vrot.slane %v2059, 2
  %v2152 = vadd.f32 %v2150, %v2098
  %v2153 = vxor.u32 %v2152, 2147483648
  %v2154 = vmul.f32 %v2153, 1.442695
  %v2155 = vpow.pop %v2154
  %v2156 = vadd.f32 %v2155, 1.0
  %v2157 = vrcp.pop %v2156
  %v2158 = vmul.f32 1.0, %v2157
  %v2159 = vadd.f32 %v2137, %v105
  %v2160 = vmul.f32 %v2148, %v2159
  %v2161 = vrot.slane %v2059, 4
  %v2163 = vadd.f32 %v2161, %v2160
  %v2164 = vtanh.pop %v2163
  %v2165 = vsub.f32 1.0, %v2158
  %v2166 = vmul.f32 %v2165, %v2164
  %v2167 = vmul.f32 %v2158, %v1929
  %v2168 = vadd.f32 %v2166, %v2167
  %v2169 = vsel %vm2058, %v2168, %v1929
  %v2170 = vsel %vm2058, %v2168, 0.0
  %s2171 = scalar_lea.vmem %s0, 45
  %v2172 = vld [vmem:[%s2171] sm:$0x7]
  %vm2173 = vcmp.ge.s32.totalorder %v2055, %v97
  %vm2174 = vcmp.lt.s32.totalorder %v2055, %v99
  %vm2175 = vmand %vm2173, %vm2174
  %v2176 = vunpack.c.l.bf16 %v2172
  %v2177 = vpack.c.bf16 %v2046, %v2046
  %2178 = vmatprep.subr.bf16.mxu0 %v452
  %2179 = vmatpush1.bf16.msra.mxu0 %v451
  %2180 = vmatprep.subr.bf16.mxu0 %v455
  %2181 = vmatpush1.bf16.msra.mxu0 %v454
  %2182 = vmatprep.subr.bf16.mxu0 %v458
  %2183 = vmatpush1.bf16.msra.mxu0 %v457
  %2184 = vmatprep.subr.bf16.mxu0 %v461
  %2185 = vmatpush1.bf16.msra.mxu0 %v460
  %2186 = vmatprep.subr.bf16.mxu0 %v464
  %2187 = vmatpush1.bf16.msra.mxu0 %v463
  %2188 = vmatprep.subr.bf16.mxu0 %v467
  %2189 = vmatpush1.bf16.msra.mxu0 %v466
  %2190 = vmatprep.subr.bf16.mxu0 %v470
  %2191 = vmatpush1.bf16.msra.mxu0 %v469
  %2192 = vmatprep.subr.bf16.mxu0 %v473
  %2193 = vmatpush1.bf16.msra.mxu0 %v472
  %2194 = vmatprep.subr.bf16.mxu0 0
  %2195 = vmatpush1.bf16.msra.mxu0 0
  %2196 = vmatprep.subr.bf16.mxu0 0
  %2197 = vmatpush1.bf16.msra.mxu0 0
  %2198 = vmatprep.subr.bf16.mxu0 0
  %2199 = vmatpush1.bf16.msra.mxu0 0
  %2200 = vmatprep.subr.bf16.mxu0 0
  %2201 = vmatpush1.bf16.msra.mxu0 0
  %2202 = vmatprep.subr.bf16.mxu0 0
  %2203 = vmatpush1.bf16.msra.mxu0 0
  %2204 = vmatprep.subr.bf16.mxu0 0
  %2205 = vmatpush1.bf16.msra.mxu0 0
  %2206 = vmatprep.subr.bf16.mxu0 0
  %2207 = vmatpush1.bf16.msra.mxu0 0
  %2208 = vmatprep.subr.bf16.mxu0 0
  %2209 = vmatpush1.bf16.msra.mxu0 0
  %2210 = vmatprep.mubr.bf16.mxu0 0
  %2211 = vmatmul.mubr.bf16.gmra.mrb[0].mxu0 %v2177
  %v2212 = vpop.f32.mrb[0].mxu0
  %v2213 = vadd.f32 0.0, %v2212
  %v2214 = vpop.f32.mrb[0].mxu0
  %v2215 = vadd.f32 0.0, %v2214
  %v2216 = vpop.f32.mrb[0].mxu0
  %v2217 = vpop.f32.mrb[0].mxu0
  %2218 = vdwg.mxu0
  %2219 = vmatprep.subr.bf16.mxu0 0
  %2220 = vmatpush1.bf16.msra.mxu0 %v453
  %2221 = vmatprep.subr.bf16.mxu0 0
  %2222 = vmatpush1.bf16.msra.mxu0 %v456
  %2223 = vmatprep.subr.bf16.mxu0 0
  %2224 = vmatpush1.bf16.msra.mxu0 %v459
  %2225 = vmatprep.subr.bf16.mxu0 0
  %2226 = vmatpush1.bf16.msra.mxu0 %v462
  %2227 = vmatprep.subr.bf16.mxu0 0
  %2228 = vmatpush1.bf16.msra.mxu0 %v465
  %2229 = vmatprep.subr.bf16.mxu0 0
  %2230 = vmatpush1.bf16.msra.mxu0 %v468
  %2231 = vmatprep.subr.bf16.mxu0 0
  %2232 = vmatpush1.bf16.msra.mxu0 %v471
  %2233 = vmatprep.subr.bf16.mxu0 0
  %2234 = vmatpush1.bf16.msra.mxu0 %v474
  %2235 = vmatprep.subr.bf16.mxu0 0
  %2236 = vmatpush1.bf16.msra.mxu0 0
  %2237 = vmatprep.subr.bf16.mxu0 0
  %2238 = vmatpush1.bf16.msra.mxu0 0
  %2239 = vmatprep.subr.bf16.mxu0 0
  %2240 = vmatpush1.bf16.msra.mxu0 0
  %2241 = vmatprep.subr.bf16.mxu0 0
  %2242 = vmatpush1.bf16.msra.mxu0 0
  %2243 = vmatprep.subr.bf16.mxu0 0
  %2244 = vmatpush1.bf16.msra.mxu0 0
  %2245 = vmatprep.subr.bf16.mxu0 0
  %2246 = vmatpush1.bf16.msra.mxu0 0
  %2247 = vmatprep.subr.bf16.mxu0 0
  %2248 = vmatpush1.bf16.msra.mxu0 0
  %2249 = vmatprep.subr.bf16.mxu0 0
  %2250 = vmatpush1.bf16.msra.mxu0 0
  %2251 = vmatprep.mubr.bf16.mxu0 0
  %2252 = vmatmul.mubr.bf16.gmra.mrb[0].mxu0 %v2177
  %v2253 = vpop.f32.mrb[0].mxu0
  %v2254 = vadd.f32 0.0, %v2253
  %v2255 = vpop.f32.mrb[0].mxu0
  %v2256 = vpop.f32.mrb[0].mxu0
  %v2257 = vpop.f32.mrb[0].mxu0
  %2258 = vdwg.mxu0
  %v2259 = vadd.f32 %v2176, %v2213
  %v2260 = vxor.u32 %v2259, 2147483648
  %v2261 = vmul.f32 %v2260, 1.442695
  %v2262 = vpow.pop %v2261
  %v2263 = vadd.f32 %v2262, 1.0
  %v2264 = vrcp.pop %v2263
  %v2265 = vmul.f32 1.0, %v2264
  %v2267 = vrot.slane %v2176, 2
  %v2269 = vadd.f32 %v2267, %v2215
  %v2270 = vxor.u32 %v2269, 2147483648
  %v2271 = vmul.f32 %v2270, 1.442695
  %v2272 = vpow.pop %v2271
  %v2273 = vadd.f32 %v2272, 1.0
  %v2274 = vrcp.pop %v2273
  %v2275 = vmul.f32 1.0, %v2274
  %v2276 = vadd.f32 %v2254, %v113
  %v2277 = vmul.f32 %v2265, %v2276
  %v2278 = vrot.slane %v2176, 4
  %v2280 = vadd.f32 %v2278, %v2277
  %v2281 = vtanh.pop %v2280
  %v2282 = vsub.f32 1.0, %v2275
  %v2283 = vmul.f32 %v2282, %v2281
  %v2284 = vmul.f32 %v2275, %v2046
  %v2285 = vadd.f32 %v2283, %v2284
  %v2286 = vsel %vm2175, %v2285, %v2046
  %v2287 = vsel %vm2175, %v2285, 0.0
  %s2288 = scalar_lea.vmem %s5, 14
  %2289 = vst [vmem:[%s2288] sm:$0x3] %v2170
  %s2290 = scalar_lea.vmem %s5, 30
  %2291 = vst [vmem:[%s2290] sm:$0x3] %v2287
  %2292 = vst [vmem:[#allocation2] sm:$0x3] %v2169
  %2293 = vst [vmem:[%s117] sm:$0x3] %v2286
  %v2294 = vld [vmem:[#allocation2] sm:$0x3]
  %v2295 = vld [vmem:[#allocation2 + $0x2] sm:$0x3]
  %2296 = vst [vmem:[%s6] sm:$0x3] %v2294
  %2297 = vst [vmem:[%s6 + $0x2] sm:$0x3] %v2295
  // Predicated region
  $region26: #{_forward_impl.1} parent=0 // pred_check
    _
  $region27: #{_forward_impl.1} parent=0 // pred_check_branch
    %2299 = sbr.rel (0) target = $region29
  $region28: #{_forward_impl.1} parent=0 // pred_region
    _
  $region29: #{_forward_impl.1} parent=0 // pred_fallthru
    _
  // Predicated region
  $region30: #{_forward_impl.1} parent=0 // pred_check
    _
  $region31: #{_forward_impl.1} parent=0 // pred_check_branch
    %2301 = sbr.rel (0) target = $region33
  $region32: #{_forward_impl.1} parent=0 // pred_region
    _
  $region33: #{_forward_impl.1} parent=0 // pred_fallthru
    _
  // Predicated region
  $region34: #{_forward_impl.1} parent=0 // pred_check
    _
  $region35: #{_forward_impl.1} parent=0 // pred_check_branch
    %2303 = sbr.rel (0) target = $region37
  $region36: #{_forward_impl.1} parent=0 // pred_region
    _
  $region37: #{_forward_impl.1} parent=0 // pred_fallthru
    _
  // Predicated region
  $region38: #{_forward_impl.1} parent=0 // pred_check
    _
  $region39: #{_forward_impl.1} parent=0 // pred_check_branch
    %2305 = sbr.rel (0) target = $region41
  $region40: #{_forward_impl.1} parent=0 // pred_region
    _
  $region41: #{_forward_impl.1} parent=0 // pred_fallthru
    _

</llo_original>
